<compile_context>
chip_gen: v7x
topology: tpu7x:2x2x1
jax: 0.10.0
libtpu: 0.0.40
codegen_flags: <defaults>
</compile_context>

<pallas_src>
import jax
import jax.numpy as jnp
from jax.experimental import pallas as pl
from jax.experimental.pallas import tpu as pltpu

# ------------------------- small model configuration -------------------------
B       = 2          # batch                     (orig: batch_size)
NCAM    = 2          # cameras                   (orig: 6)
CIN     = 3          # raw image channels
H, W    = 8, 16      # per-camera feature map    (orig: 32 x 88)
C_IMG   = 32         # image feature channels    (orig: 256)
C_BEV   = 32         # bev channels after vtransform (orig: 80)
BEV_H, BEV_W = H, W  # BEV grid                  (orig: 180 x 180)
C_PTS   = 32         # lidar BEV channels
C_FUSED = 64         # fused BEV channels        (orig: 512)
NQ      = 32         # queries                   (orig: 200)
NPTS    = 64         # points per sample
PTS_F   = 4          # lidar voxel feature width (x, y, z, intensity sums)
HEAD_CH = 2 + 1 + 3 + 2 + 2 + 10 + 10   # reg,height,dim,rot,vel,heatmap,score = 30
HEAD_PAD  = 64                           # head weights zero-padded to 64 cols
OUT_LANES = C_FUSED + HEAD_PAD           # 128 -> lane-dense output slab
HW = H * W

PTS_OFF    = NCAM * CIN                  # lane offset of lidar feats in the slab
SLAB_LANES = 16                          # [cam pix (6) | pts (4) | pad (6)]


def _pick_tm() -> int:
    """Generation-aware row tile.

    v7x exposes 2 TensorCores per chip -> keep 2 grid steps (TM=128) so the
    "parallel" dimension shards across both cores.  v5e/v6e are single-TC, so
    one bigger step (TM=256) removes one ~0.35us per-step pipeline overhead on
    a kernel whose total work is only a few MFLOP.
    """
    try:
        kind = jax.devices()[0].device_kind.lower()
    except Exception:  # pragma: no cover - backend not initialised
        return 128
    return 128 if "7" in kind else 256


TM = _pick_tm()


# =============================== Pallas kernel ================================

def _fused_bev_kernel(slab_ref,
                      wimg_ref, bimg_ref,
                      wdown_ref, bdown_ref,
                      wpts_ref, bpts_ref,
                      wfuse_ref, bfuse_ref,
                      wcomb_ref, bcomb_ref,
                      out_ref):
    """Fused BEVFusion row-tile kernel.

    slab_ref : (tm, 16) bf16   packed rows: [cam0 pix(3) | cam1 pix(3) | pts(4) | pad(6)]
    w*_ref   : weights (f32 for the tiny VPU convs, bf16 for the MXU matmuls)
    b*_ref   : (1, N) f32 biases — all weights/biases resident in VMEM
    out_ref  : (tm, 128) bf16  [fused(64) | head(64, zero-padded)]
    """
    tm = out_ref.shape[0]

    # Hoisted weight / bias loads (JAX does not CSE broadcast_in_dim; keep them
    # out of the unrolled per-camera loop).
    w_img = wimg_ref[...]            # (CIN, C_IMG) f32
    b_img = bimg_ref[...]            # (1, C_IMG)   f32
    w_pts = wpts_ref[...]            # (PTS_F, C_PTS) f32
    b_pts = bpts_ref[...]            # (1, C_PTS)   f32

    # ---- img backbone (1x1 conv) + LSS lift + bev_pool, per camera ----------
    # TODO(synk): the real LSS lift weights features by a per-bin depth softmax
    # and bev_pool scatters by camera geometry; with the synthetic single-cell
    # pooling used here the depth weighting cancels (softmax sums to 1), so the
    # depth branch is omitted entirely.
    # K=CIN(3) stays off the MXU: 3 VPU broadcast-FMAs per camera.
    pooled = jnp.zeros((tm, C_IMG), jnp.float32)
    for cam in range(NCAM):                                   # unrolled, NCAM small
        feat = None
        for j in range(CIN):
            col = slab_ref[:, cam * CIN + j:cam * CIN + j + 1].astype(jnp.float32)
            term = col * w_img[j:j + 1, :]
            feat = term if feat is None else feat + term
        feat = jnp.maximum(feat + b_img, 0.0)                 # (tm, C_IMG) f32
        pooled = pooled + feat

    # ---- vtransform downsample (1x1 conv, MXU) -------------------------------
    down = jnp.dot(pooled.astype(jnp.bfloat16), wdown_ref[...],
                   preferred_element_type=jnp.float32)
    down = jnp.maximum(down + bdown_ref[...], 0.0)            # (tm, C_BEV) f32

    # ---- lidar "backbone" (1x1 conv on voxel-pooled feats; K=4 on the VPU) ---
    pfeat = None
    for j in range(PTS_F):
        col = slab_ref[:, PTS_OFF + j:PTS_OFF + j + 1].astype(jnp.float32)
        term = col * w_pts[j:j + 1, :]
        pfeat = term if pfeat is None else pfeat + term
    pfeat = jnp.maximum(pfeat + b_pts, 0.0)                   # (tm, C_PTS) f32

    # ---- fusion: concat folded into split weight (two K=32 MXU matmuls) ------
    fused = jnp.dot(down.astype(jnp.bfloat16), wfuse_ref[:C_BEV, :],
                    preferred_element_type=jnp.float32)
    fused = fused + jnp.dot(pfeat.astype(jnp.bfloat16), wfuse_ref[C_BEV:, :],
                            preferred_element_type=jnp.float32)
    fused = jnp.maximum(fused + bfuse_ref[...], 0.0)          # (tm, C_FUSED) f32

    # ---- head with concat folded into the weight: W_comb = [I_64 | W_head] ---
    # One K=64 / N=128 MXU matmul -> lane-dense unmasked 128-lane store.
    out = jnp.dot(fused.astype(jnp.bfloat16), wcomb_ref[...],
                  preferred_element_type=jnp.float32) + bcomb_ref[...]
    out_ref[...] = out.astype(out_ref.dtype)


def fused_bev_pipeline(slab, params):
    """slab: [rows, 16] bf16 packed rows -> [rows, 128] bf16 (fused BEV | padded head)."""
    rows = slab.shape[0]
    assert rows % TM == 0, rows
    n_tiles = rows // TM

    weights = (params["w_img"], params["b_img"],
               params["w_down"], params["b_down"],
               params["w_pts"], params["b_pts"],
               params["w_fuse"], params["b_fuse"],
               params["w_comb"], params["b_comb"])

    grid_spec = pltpu.PrefetchScalarGridSpec(
        num_scalar_prefetch=0,
        grid=(n_tiles,),
        in_specs=[
            pl.BlockSpec((TM, SLAB_LANES), lambda i: (i, 0)),
            # weights / biases: full blocks, same index every step -> VMEM resident
            pl.BlockSpec((CIN, C_IMG),             lambda i: (0, 0)),
            pl.BlockSpec((1, C_IMG),               lambda i: (0, 0)),
            pl.BlockSpec((C_IMG, C_BEV),           lambda i: (0, 0)),
            pl.BlockSpec((1, C_BEV),               lambda i: (0, 0)),
            pl.BlockSpec((PTS_F, C_PTS),           lambda i: (0, 0)),
            pl.BlockSpec((1, C_PTS),               lambda i: (0, 0)),
            pl.BlockSpec((C_BEV + C_PTS, C_FUSED), lambda i: (0, 0)),
            pl.BlockSpec((1, C_FUSED),             lambda i: (0, 0)),
            pl.BlockSpec((C_FUSED, OUT_LANES),     lambda i: (0, 0)),
            pl.BlockSpec((1, OUT_LANES),           lambda i: (0, 0)),
        ],
        out_specs=pl.BlockSpec((TM, OUT_LANES), lambda i: (i, 0)),
    )

    # Advisory cost so XLA overlaps the tiny custom call with surrounding glue.
    flops = 2 * rows * (NCAM * CIN * C_IMG + C_IMG * C_BEV + PTS_F * C_PTS
                        + (C_BEV + C_PTS) * C_FUSED + C_FUSED * OUT_LANES)
    weight_bytes = sum(int(w.size) * w.dtype.itemsize for w in weights)
    bytes_accessed = (int(slab.size) * slab.dtype.itemsize
                      + weight_bytes
                      + rows * OUT_LANES * 2)
    cost = pl.CostEstimate(flops=int(flops), transcendentals=0,
                           bytes_accessed=int(bytes_accessed))

    return pl.pallas_call(
        _fused_bev_kernel,
        out_shape=jax.ShapeDtypeStruct((rows, OUT_LANES), jnp.bfloat16),
        grid_spec=grid_spec,
        cost_estimate=cost,
        compiler_params=pltpu.CompilerParams(
            dimension_semantics=("parallel",)),
    )(slab, *weights)


# ================================ parameters =================================

def init_params():
    key = jax.random.PRNGKey(42)
    ks = jax.random.split(key, 10)

    def w(k, shape, scale=0.05):
        return jax.random.normal(k, shape, jnp.float32) * scale

    w_img  = w(ks[0], (CIN, C_IMG));             b_img  = w(ks[1], (C_IMG,))
    w_down = w(ks[2], (C_IMG, C_BEV));           b_down = w(ks[3], (C_BEV,))
    w_pts  = w(ks[4], (PTS_F, C_PTS));           b_pts  = w(ks[5], (C_PTS,))
    w_fuse = w(ks[6], (C_BEV + C_PTS, C_FUSED)); b_fuse = w(ks[7], (C_FUSED,))
    w_head = w(ks[8], (C_FUSED, HEAD_CH));       b_head = w(ks[9], (HEAD_CH,))

    # Head weights zero-padded to HEAD_PAD columns, then prepended with an
    # identity so one (64,128) MXU matmul produces the packed [fused | head] slab.
    w_head_p = jnp.zeros((C_FUSED, HEAD_PAD), jnp.float32).at[:, :HEAD_CH].set(w_head)
    b_head_p = jnp.zeros((HEAD_PAD,), jnp.float32).at[:HEAD_CH].set(b_head)
    w_comb = jnp.concatenate([jnp.eye(C_FUSED, dtype=jnp.float32), w_head_p], axis=-1)
    b_comb = jnp.concatenate([jnp.zeros((C_FUSED,), jnp.float32), b_head_p], axis=-1)

    return {
        # tiny K (3 / 4) convs run on the VPU -> keep their weights in f32
        "w_img":  w_img,                        "b_img":  b_img.reshape(1, -1),
        "w_pts":  w_pts,                        "b_pts":  b_pts.reshape(1, -1),
        # MXU matmuls take bf16 operands with f32 accumulation
        "w_down": w_down.astype(jnp.bfloat16),  "b_down": b_down.reshape(1, -1),
        "w_fuse": w_fuse.astype(jnp.bfloat16),  "b_fuse": b_fuse.reshape(1, -1),
        "w_comb": w_comb.astype(jnp.bfloat16),  "b_comb": b_comb.reshape(1, -1),
    }


# ================================ forward pass ===============================

def bevfusion_forward(params, imgs, points, metas):
    """imgs: [B, NCAM, CIN, H, W] f32; points: [B, NPTS, 4] f32."""
    del metas
    # TODO(synk): real pipeline projects lidar points via metas (utils.calculate_depth)
    # and depth-weights the LSS lift; with the synthetic single-cell bev_pool used
    # here that weighting cancels exactly, so depth is not computed at all.
    B_, NCAM_, CIN_, H_, W_ = imgs.shape
    hw = H_ * W_
    rows = B_ * hw

    # ---- half-precision stage boundary: bf16 (TPU-native) instead of fp16 ----
    imgs_half = imgs.astype(jnp.bfloat16)                      # imgs.to(float16)
    # camera pixels, row-major over (b, h, w), lanes = cam*CIN + c : [rows, NCAM*CIN]
    cam_slab = jnp.transpose(imgs_half, (0, 3, 4, 1, 2)).reshape(rows, NCAM_ * CIN_)

    # ---- voxelization (glue scatter) ----
    # TODO(synk): spconv sparse 3D lidar backbone replaced by BEV scatter + 1x1 conv.
    ix = jnp.clip(((points[..., 0] + 54.0) / 108.0 * BEV_W).astype(jnp.int32), 0, BEV_W - 1)
    iy = jnp.clip(((points[..., 1] + 54.0) / 108.0 * BEV_H).astype(jnp.int32), 0, BEV_H - 1)
    cell = iy * BEV_W + ix                                     # [B, NPTS]
    pts_raw = jax.vmap(lambda c, p: jax.ops.segment_sum(p, c, num_segments=hw)
                       )(cell, points)                         # [B, HW, 4]
    pts_raw = pts_raw.reshape(rows, PTS_F)

    # ---- pack all row-indexed inputs into one lane-aligned bf16 slab ----
    pad_lanes = SLAB_LANES - (NCAM_ * CIN_ + PTS_F)
    slab = jnp.concatenate(
        [cam_slab,
         pts_raw.astype(jnp.bfloat16),
         jnp.zeros((rows, pad_lanes), jnp.bfloat16)], axis=-1)  # [rows, 16]

    # pad rows to a multiple of TM (robustness for shapes where rows % TM != 0)
    rows_pad = pl.cdiv(rows, TM) * TM
    if rows_pad != rows:
        slab = jnp.pad(slab, ((0, rows_pad - rows), (0, 0)))

    # ---- fused Pallas kernel: backbone+lift+pool+down+lidar+fusion+head ----
    out = fused_bev_pipeline(slab, params)[:rows]               # [rows, 128] bf16
    out = out.reshape(B_, hw, OUT_LANES)

    fused_bev = out[..., :C_FUSED]                 # [B, HW, C_FUSED] (mirrors fused buffer)
    del fused_bev                                  # only the head is consumed downstream

    # ---- head outputs: first NQ BEV cells per batch (proposal stand-in) ----
    # TODO(synk): real head selects top-k heatmap proposals; uses first NQ cells.
    head = out[:, :NQ, C_FUSED:C_FUSED + HEAD_CH].astype(jnp.float32)   # [B, NQ, 30]

    splits = [2, 3, 6, 8, 10, 20]                               # 2,1,3,2,2,10,10
    reg, height, dim, rot, vel, heatmap, score = jnp.split(head, splits, axis=-1)
    # match PyTorch buffer layouts [B, ch, NQ] (bf16 mirrors the fp16 buffers)
    to_chw = lambda t: jnp.transpose(t, (0, 2, 1)).astype(jnp.bfloat16)
    reg, height, dim, rot, vel, heatmap, score = map(
        to_chw, (reg, height, dim, rot, vel, heatmap, score))
    query_label = jnp.argmax(heatmap.astype(jnp.float32), axis=1).astype(jnp.int32)

    # ---- decode (vectorized over batch, mirrors utils.decode loop) ----
    hm = jax.nn.sigmoid(heatmap.astype(jnp.float32))            # [B, 10, NQ]
    sc = jax.nn.sigmoid(jnp.max(score.astype(jnp.float32), axis=1))   # [B, NQ]
    scores_3d = jnp.max(hm, axis=1) * sc                        # [B, NQ]
    yaw = jnp.arctan2(rot[:, 0].astype(jnp.float32),
                      rot[:, 1].astype(jnp.float32))            # [B, NQ]
    bboxes_3d = jnp.stack([reg[:, 0].astype(jnp.float32),
                           reg[:, 1].astype(jnp.float32),
                           height[:, 0].astype(jnp.float32),
                           dim[:, 0].astype(jnp.float32),
                           dim[:, 1].astype(jnp.float32),
                           dim[:, 2].astype(jnp.float32),
                           yaw,
                           vel[:, 0].astype(jnp.float32),
                           vel[:, 1].astype(jnp.float32)], axis=-1)   # [B, NQ, 9]

    bboxes_3ds = [bboxes_3d[b] for b in range(B_)]
    scores_3ds = [scores_3d[b] for b in range(B_)]
    labels_3ds = [query_label[b] for b in range(B_)]
    return bboxes_3ds, scores_3ds, labels_3ds


# =================================== main ====================================

if __name__ == "__main__":
    key = jax.random.PRNGKey(0)
    k_img, k_pts = jax.random.split(key)

    imgs = jax.random.normal(k_img, (B, NCAM, CIN, H, W), jnp.float32)
    points = jax.random.uniform(k_pts, (B, NPTS, 4), jnp.float32,
                                minval=-50.0, maxval=50.0)
    eye4 = jnp.broadcast_to(jnp.eye(4, dtype=jnp.float32), (B, NCAM, 4, 4))
    metas = {"lidar2img": eye4, "img_aug_matrix": eye4,
             "lidar_aug_matrix": eye4, "cam2img": eye4, "cam2lidar": eye4}

    params = init_params()
    forward = jax.jit(bevfusion_forward)
    bboxes, scores, labels = forward(params, imgs, points, metas)

    for t in bboxes + scores + labels:
        jax.block_until_ready(t)

    assert bboxes[0].shape == (NQ, 9)
    assert scores[0].shape == (NQ,)
    assert labels[0].shape == (NQ,)
    assert all(jnp.all(jnp.isfinite(b)) for b in bboxes)
    print("KERNEL_OK")
</pallas_src>

<mosaic_0001>
module attributes {stable_mosaic.version = 11 : i64} {
  func.func @_fused_bev_kernel(%arg0: i32, %arg1: memref<256x16xbf16, #tpu.memory_space<vmem>>, %arg2: memref<3x32xf32, #tpu.memory_space<vmem>>, %arg3: memref<1x32xf32, #tpu.memory_space<vmem>>, %arg4: memref<32x32xbf16, #tpu.memory_space<vmem>>, %arg5: memref<1x32xf32, #tpu.memory_space<vmem>>, %arg6: memref<4x32xf32, #tpu.memory_space<vmem>>, %arg7: memref<1x32xf32, #tpu.memory_space<vmem>>, %arg8: memref<64x64xbf16, #tpu.memory_space<vmem>>, %arg9: memref<1x64xf32, #tpu.memory_space<vmem>>, %arg10: memref<64x128xbf16, #tpu.memory_space<vmem>>, %arg11: memref<1x128xf32, #tpu.memory_space<vmem>>, %arg12: memref<256x128xbf16, #tpu.memory_space<vmem>>) attributes {dimension_semantics = [#tpu.dimension_semantics<parallel>], iteration_bounds = array<i64: 1>, scalar_prefetch = 0 : i64, scratch_operands = 0 : i64, tpu.core_type = #tpu.core_type<tc>, window_params = [{transform_indices = @transform_0, window_bounds = array<i64: 256, 16>}, {pipeline_mode = #tpu.pipeline_mode<synchronous>, transform_indices = @transform_1, window_bounds = array<i64: 3, 32>}, {pipeline_mode = #tpu.pipeline_mode<synchronous>, transform_indices = @transform_2, window_bounds = array<i64: 1, 32>}, {pipeline_mode = #tpu.pipeline_mode<synchronous>, transform_indices = @transform_3, window_bounds = array<i64: 32, 32>}, {pipeline_mode = #tpu.pipeline_mode<synchronous>, transform_indices = @transform_4, window_bounds = array<i64: 1, 32>}, {pipeline_mode = #tpu.pipeline_mode<synchronous>, transform_indices = @transform_5, window_bounds = array<i64: 4, 32>}, {pipeline_mode = #tpu.pipeline_mode<synchronous>, transform_indices = @transform_6, window_bounds = array<i64: 1, 32>}, {pipeline_mode = #tpu.pipeline_mode<synchronous>, transform_indices = @transform_7, window_bounds = array<i64: 64, 64>}, {pipeline_mode = #tpu.pipeline_mode<synchronous>, transform_indices = @transform_8, window_bounds = array<i64: 1, 64>}, {pipeline_mode = #tpu.pipeline_mode<synchronous>, transform_indices = @transform_9, window_bounds = array<i64: 64, 128>}, {pipeline_mode = #tpu.pipeline_mode<synchronous>, transform_indices = @transform_10, window_bounds = array<i64: 1, 128>}, {transform_indices = @transform_11, window_bounds = array<i64: 256, 128>}]} {
    %c0 = arith.constant 0 : index
    %c0_0 = arith.constant 0 : index
    %0 = vector.load %arg2[%c0, %c0_0] : memref<3x32xf32, #tpu.memory_space<vmem>>, vector<3x32xf32>
    %c0_1 = arith.constant 0 : index
    %c0_2 = arith.constant 0 : index
    %1 = vector.load %arg3[%c0_1, %c0_2] : memref<1x32xf32, #tpu.memory_space<vmem>>, vector<1x32xf32>
    %c0_3 = arith.constant 0 : index
    %c0_4 = arith.constant 0 : index
    %2 = vector.load %arg6[%c0_3, %c0_4] : memref<4x32xf32, #tpu.memory_space<vmem>>, vector<4x32xf32>
    %c0_5 = arith.constant 0 : index
    %c0_6 = arith.constant 0 : index
    %3 = vector.load %arg7[%c0_5, %c0_6] : memref<1x32xf32, #tpu.memory_space<vmem>>, vector<1x32xf32>
    %cst = arith.constant 0.000000e+00 : f32
    %4 = vector.broadcast %cst : f32 to vector<256x32xf32>
    %c0_7 = arith.constant 0 : index
    %c0_8 = arith.constant 0 : index
    %5 = vector.load %arg1[%c0_7, %c0_8] : memref<256x16xbf16, #tpu.memory_space<vmem>>, vector<256x1xbf16>
    %6 = arith.extf %5 : vector<256x1xbf16> to vector<256x1xf32>
    %7 = vector.extract_strided_slice %0 {offsets = [0, 0], sizes = [1, 32], strides = [1, 1]} : vector<3x32xf32> to vector<1x32xf32>
    %8 = vector.broadcast %6 : vector<256x1xf32> to vector<256x32xf32>
    %9 = vector.broadcast %7 : vector<1x32xf32> to vector<256x32xf32>
    %10 = arith.mulf %8, %9 : vector<256x32xf32>
    %c0_9 = arith.constant 0 : index
    %c1 = arith.constant 1 : index
    %11 = vector.load %arg1[%c0_9, %c1] : memref<256x16xbf16, #tpu.memory_space<vmem>>, vector<256x1xbf16>
    %12 = arith.extf %11 : vector<256x1xbf16> to vector<256x1xf32>
    %13 = vector.extract_strided_slice %0 {offsets = [1, 0], sizes = [1, 32], strides = [1, 1]} : vector<3x32xf32> to vector<1x32xf32>
    %14 = vector.broadcast %12 : vector<256x1xf32> to vector<256x32xf32>
    %15 = vector.broadcast %13 : vector<1x32xf32> to vector<256x32xf32>
    %16 = arith.mulf %14, %15 : vector<256x32xf32>
    %17 = arith.addf %10, %16 : vector<256x32xf32>
    %c0_10 = arith.constant 0 : index
    %c2 = arith.constant 2 : index
    %18 = vector.load %arg1[%c0_10, %c2] : memref<256x16xbf16, #tpu.memory_space<vmem>>, vector<256x1xbf16>
    %19 = arith.extf %18 : vector<256x1xbf16> to vector<256x1xf32>
    %20 = vector.extract_strided_slice %0 {offsets = [2, 0], sizes = [1, 32], strides = [1, 1]} : vector<3x32xf32> to vector<1x32xf32>
    %21 = vector.broadcast %19 : vector<256x1xf32> to vector<256x32xf32>
    %22 = vector.broadcast %20 : vector<1x32xf32> to vector<256x32xf32>
    %23 = arith.mulf %21, %22 : vector<256x32xf32>
    %24 = arith.addf %17, %23 : vector<256x32xf32>
    %25 = vector.broadcast %1 : vector<1x32xf32> to vector<256x32xf32>
    %26 = arith.addf %24, %25 : vector<256x32xf32>
    %cst_11 = arith.constant 0.000000e+00 : f32
    %27 = vector.broadcast %cst_11 : f32 to vector<256x32xf32>
    %28 = arith.maximumf %26, %27 : vector<256x32xf32>
    %29 = arith.addf %4, %28 : vector<256x32xf32>
    %c0_12 = arith.constant 0 : index
    %c3 = arith.constant 3 : index
    %30 = vector.load %arg1[%c0_12, %c3] : memref<256x16xbf16, #tpu.memory_space<vmem>>, vector<256x1xbf16>
    %31 = arith.extf %30 : vector<256x1xbf16> to vector<256x1xf32>
    %32 = vector.extract_strided_slice %0 {offsets = [0, 0], sizes = [1, 32], strides = [1, 1]} : vector<3x32xf32> to vector<1x32xf32>
    %33 = vector.broadcast %31 : vector<256x1xf32> to vector<256x32xf32>
    %34 = vector.broadcast %32 : vector<1x32xf32> to vector<256x32xf32>
    %35 = arith.mulf %33, %34 : vector<256x32xf32>
    %c0_13 = arith.constant 0 : index
    %c4 = arith.constant 4 : index
    %36 = vector.load %arg1[%c0_13, %c4] : memref<256x16xbf16, #tpu.memory_space<vmem>>, vector<256x1xbf16>
    %37 = arith.extf %36 : vector<256x1xbf16> to vector<256x1xf32>
    %38 = vector.extract_strided_slice %0 {offsets = [1, 0], sizes = [1, 32], strides = [1, 1]} : vector<3x32xf32> to vector<1x32xf32>
    %39 = vector.broadcast %37 : vector<256x1xf32> to vector<256x32xf32>
    %40 = vector.broadcast %38 : vector<1x32xf32> to vector<256x32xf32>
    %41 = arith.mulf %39, %40 : vector<256x32xf32>
    %42 = arith.addf %35, %41 : vector<256x32xf32>
    %c0_14 = arith.constant 0 : index
    %c5 = arith.constant 5 : index
    %43 = vector.load %arg1[%c0_14, %c5] : memref<256x16xbf16, #tpu.memory_space<vmem>>, vector<256x1xbf16>
    %44 = arith.extf %43 : vector<256x1xbf16> to vector<256x1xf32>
    %45 = vector.extract_strided_slice %0 {offsets = [2, 0], sizes = [1, 32], strides = [1, 1]} : vector<3x32xf32> to vector<1x32xf32>
    %46 = vector.broadcast %44 : vector<256x1xf32> to vector<256x32xf32>
    %47 = vector.broadcast %45 : vector<1x32xf32> to vector<256x32xf32>
    %48 = arith.mulf %46, %47 : vector<256x32xf32>
    %49 = arith.addf %42, %48 : vector<256x32xf32>
    %50 = vector.broadcast %1 : vector<1x32xf32> to vector<256x32xf32>
    %51 = arith.addf %49, %50 : vector<256x32xf32>
    %cst_15 = arith.constant 0.000000e+00 : f32
    %52 = vector.broadcast %cst_15 : f32 to vector<256x32xf32>
    %53 = arith.maximumf %51, %52 : vector<256x32xf32>
    %54 = arith.addf %29, %53 : vector<256x32xf32>
    %55 = arith.truncf %54 : vector<256x32xf32> to vector<256x32xbf16>
    %c0_16 = arith.constant 0 : index
    %c0_17 = arith.constant 0 : index
    %56 = vector.load %arg4[%c0_16, %c0_17] : memref<32x32xbf16, #tpu.memory_space<vmem>>, vector<32x32xbf16>
    %cst_18 = arith.constant dense<0.000000e+00> : vector<256x32xf32>
    %57 = tpu.matmul %55, %56, %cst_18 {dimension_numbers = #tpu.dot_dimension_numbers<[1], [0], [0], [1], [0, 0, 1, 1], [], []>} : vector<256x32xbf16>, vector<32x32xbf16>, vector<256x32xf32> -> vector<256x32xf32>
    %c0_19 = arith.constant 0 : index
    %c0_20 = arith.constant 0 : index
    %58 = vector.load %arg5[%c0_19, %c0_20] : memref<1x32xf32, #tpu.memory_space<vmem>>, vector<1x32xf32>
    %59 = vector.broadcast %58 : vector<1x32xf32> to vector<256x32xf32>
    %60 = arith.addf %57, %59 : vector<256x32xf32>
    %cst_21 = arith.constant 0.000000e+00 : f32
    %61 = vector.broadcast %cst_21 : f32 to vector<256x32xf32>
    %62 = arith.maximumf %60, %61 : vector<256x32xf32>
    %c0_22 = arith.constant 0 : index
    %c6 = arith.constant 6 : index
    %63 = vector.load %arg1[%c0_22, %c6] : memref<256x16xbf16, #tpu.memory_space<vmem>>, vector<256x1xbf16>
    %64 = arith.extf %63 : vector<256x1xbf16> to vector<256x1xf32>
    %65 = vector.extract_strided_slice %2 {offsets = [0, 0], sizes = [1, 32], strides = [1, 1]} : vector<4x32xf32> to vector<1x32xf32>
    %66 = vector.broadcast %64 : vector<256x1xf32> to vector<256x32xf32>
    %67 = vector.broadcast %65 : vector<1x32xf32> to vector<256x32xf32>
    %68 = arith.mulf %66, %67 : vector<256x32xf32>
    %c0_23 = arith.constant 0 : index
    %c7 = arith.constant 7 : index
    %69 = vector.load %arg1[%c0_23, %c7] : memref<256x16xbf16, #tpu.memory_space<vmem>>, vector<256x1xbf16>
    %70 = arith.extf %69 : vector<256x1xbf16> to vector<256x1xf32>
    %71 = vector.extract_strided_slice %2 {offsets = [1, 0], sizes = [1, 32], strides = [1, 1]} : vector<4x32xf32> to vector<1x32xf32>
    %72 = vector.broadcast %70 : vector<256x1xf32> to vector<256x32xf32>
    %73 = vector.broadcast %71 : vector<1x32xf32> to vector<256x32xf32>
    %74 = arith.mulf %72, %73 : vector<256x32xf32>
    %75 = arith.addf %68, %74 : vector<256x32xf32>
    %c0_24 = arith.constant 0 : index
    %c8 = arith.constant 8 : index
    %76 = vector.load %arg1[%c0_24, %c8] : memref<256x16xbf16, #tpu.memory_space<vmem>>, vector<256x1xbf16>
    %77 = arith.extf %76 : vector<256x1xbf16> to vector<256x1xf32>
    %78 = vector.extract_strided_slice %2 {offsets = [2, 0], sizes = [1, 32], strides = [1, 1]} : vector<4x32xf32> to vector<1x32xf32>
    %79 = vector.broadcast %77 : vector<256x1xf32> to vector<256x32xf32>
    %80 = vector.broadcast %78 : vector<1x32xf32> to vector<256x32xf32>
    %81 = arith.mulf %79, %80 : vector<256x32xf32>
    %82 = arith.addf %75, %81 : vector<256x32xf32>
    %c0_25 = arith.constant 0 : index
    %c9 = arith.constant 9 : index
    %83 = vector.load %arg1[%c0_25, %c9] : memref<256x16xbf16, #tpu.memory_space<vmem>>, vector<256x1xbf16>
    %84 = arith.extf %83 : vector<256x1xbf16> to vector<256x1xf32>
    %85 = vector.extract_strided_slice %2 {offsets = [3, 0], sizes = [1, 32], strides = [1, 1]} : vector<4x32xf32> to vector<1x32xf32>
    %86 = vector.broadcast %84 : vector<256x1xf32> to vector<256x32xf32>
    %87 = vector.broadcast %85 : vector<1x32xf32> to vector<256x32xf32>
    %88 = arith.mulf %86, %87 : vector<256x32xf32>
    %89 = arith.addf %82, %88 : vector<256x32xf32>
    %90 = vector.broadcast %3 : vector<1x32xf32> to vector<256x32xf32>
    %91 = arith.addf %89, %90 : vector<256x32xf32>
    %cst_26 = arith.constant 0.000000e+00 : f32
    %92 = vector.broadcast %cst_26 : f32 to vector<256x32xf32>
    %93 = arith.maximumf %91, %92 : vector<256x32xf32>
    %94 = arith.truncf %62 : vector<256x32xf32> to vector<256x32xbf16>
    %c0_27 = arith.constant 0 : index
    %c0_28 = arith.constant 0 : index
    %95 = vector.load %arg8[%c0_27, %c0_28] : memref<64x64xbf16, #tpu.memory_space<vmem>>, vector<32x64xbf16>
    %cst_29 = arith.constant dense<0.000000e+00> : vector<256x64xf32>
    %96 = tpu.matmul %94, %95, %cst_29 {dimension_numbers = #tpu.dot_dimension_numbers<[1], [0], [0], [1], [0, 0, 1, 1], [], []>} : vector<256x32xbf16>, vector<32x64xbf16>, vector<256x64xf32> -> vector<256x64xf32>
    %97 = arith.truncf %93 : vector<256x32xf32> to vector<256x32xbf16>
    %c32 = arith.constant 32 : index
    %c0_30 = arith.constant 0 : index
    %98 = vector.load %arg8[%c32, %c0_30] : memref<64x64xbf16, #tpu.memory_space<vmem>>, vector<32x64xbf16>
    %cst_31 = arith.constant dense<0.000000e+00> : vector<256x64xf32>
    %99 = tpu.matmul %97, %98, %cst_31 {dimension_numbers = #tpu.dot_dimension_numbers<[1], [0], [0], [1], [0, 0, 1, 1], [], []>} : vector<256x32xbf16>, vector<32x64xbf16>, vector<256x64xf32> -> vector<256x64xf32>
    %100 = arith.addf %96, %99 : vector<256x64xf32>
    %c0_32 = arith.constant 0 : index
    %c0_33 = arith.constant 0 : index
    %101 = vector.load %arg9[%c0_32, %c0_33] : memref<1x64xf32, #tpu.memory_space<vmem>>, vector<1x64xf32>
    %102 = vector.broadcast %101 : vector<1x64xf32> to vector<256x64xf32>
    %103 = arith.addf %100, %102 : vector<256x64xf32>
    %cst_34 = arith.constant 0.000000e+00 : f32
    %104 = vector.broadcast %cst_34 : f32 to vector<256x64xf32>
    %105 = arith.maximumf %103, %104 : vector<256x64xf32>
    %106 = arith.truncf %105 : vector<256x64xf32> to vector<256x64xbf16>
    %c0_35 = arith.constant 0 : index
    %c0_36 = arith.constant 0 : index
    %107 = vector.load %arg10[%c0_35, %c0_36] : memref<64x128xbf16, #tpu.memory_space<vmem>>, vector<64x128xbf16>
    %cst_37 = arith.constant dense<0.000000e+00> : vector<256x128xf32>
    %108 = tpu.matmul %106, %107, %cst_37 {dimension_numbers = #tpu.dot_dimension_numbers<[1], [0], [0], [1], [0, 0, 1, 1], [], []>} : vector<256x64xbf16>, vector<64x128xbf16>, vector<256x128xf32> -> vector<256x128xf32>
    %c0_38 = arith.constant 0 : index
    %c0_39 = arith.constant 0 : index
    %109 = vector.load %arg11[%c0_38, %c0_39] : memref<1x128xf32, #tpu.memory_space<vmem>>, vector<1x128xf32>
    %110 = vector.broadcast %109 : vector<1x128xf32> to vector<256x128xf32>
    %111 = arith.addf %108, %110 : vector<256x128xf32>
    %112 = arith.truncf %111 : vector<256x128xf32> to vector<256x128xbf16>
    %c0_40 = arith.constant 0 : index
    %c0_41 = arith.constant 0 : index
    %113 = vector.load %arg12[%c0_40, %c0_41] : memref<256x128xbf16, #tpu.memory_space<vmem>>, vector<256x128xbf16>
    tpu.vector_store %arg12[%c0_40, %c0_41], %112 {strides = array<i32>} : memref<256x128xbf16, #tpu.memory_space<vmem>>, vector<256x128xbf16>,
    return
  }
  func.func @transform_0(%arg0: i32) -> (i32, i32) {
    %c0_i32 = arith.constant 0 : i32
    %c0_i32_0 = arith.constant 0 : i32
    return %arg0, %c0_i32 : i32, i32
  }
  func.func @transform_1(%arg0: i32) -> (i32, i32) {
    %c0_i32 = arith.constant 0 : i32
    %c0_i32_0 = arith.constant 0 : i32
    %c0_i32_1 = arith.constant 0 : i32
    return %c0_i32, %c0_i32_0 : i32, i32
  }
  func.func @transform_2(%arg0: i32) -> (i32, i32) {
    %c0_i32 = arith.constant 0 : i32
    %c0_i32_0 = arith.constant 0 : i32
    %c0_i32_1 = arith.constant 0 : i32
    return %c0_i32, %c0_i32_0 : i32, i32
  }
  func.func @transform_3(%arg0: i32) -> (i32, i32) {
    %c0_i32 = arith.constant 0 : i32
    %c0_i32_0 = arith.constant 0 : i32
    %c0_i32_1 = arith.constant 0 : i32
    return %c0_i32, %c0_i32_0 : i32, i32
  }
  func.func @transform_4(%arg0: i32) -> (i32, i32) {
    %c0_i32 = arith.constant 0 : i32
    %c0_i32_0 = arith.constant 0 : i32
    %c0_i32_1 = arith.constant 0 : i32
    return %c0_i32, %c0_i32_0 : i32, i32
  }
  func.func @transform_5(%arg0: i32) -> (i32, i32) {
    %c0_i32 = arith.constant 0 : i32
    %c0_i32_0 = arith.constant 0 : i32
    %c0_i32_1 = arith.constant 0 : i32
    return %c0_i32, %c0_i32_0 : i32, i32
  }
  func.func @transform_6(%arg0: i32) -> (i32, i32) {
    %c0_i32 = arith.constant 0 : i32
    %c0_i32_0 = arith.constant 0 : i32
    %c0_i32_1 = arith.constant 0 : i32
    return %c0_i32, %c0_i32_0 : i32, i32
  }
  func.func @transform_7(%arg0: i32) -> (i32, i32) {
    %c0_i32 = arith.constant 0 : i32
    %c0_i32_0 = arith.constant 0 : i32
    %c0_i32_1 = arith.constant 0 : i32
    return %c0_i32, %c0_i32_0 : i32, i32
  }
  func.func @transform_8(%arg0: i32) -> (i32, i32) {
    %c0_i32 = arith.constant 0 : i32
    %c0_i32_0 = arith.constant 0 : i32
    %c0_i32_1 = arith.constant 0 : i32
    return %c0_i32, %c0_i32_0 : i32, i32
  }
  func.func @transform_9(%arg0: i32) -> (i32, i32) {
    %c0_i32 = arith.constant 0 : i32
    %c0_i32_0 = arith.constant 0 : i32
    %c0_i32_1 = arith.constant 0 : i32
    return %c0_i32, %c0_i32_0 : i32, i32
  }
  func.func @transform_10(%arg0: i32) -> (i32, i32) {
    %c0_i32 = arith.constant 0 : i32
    %c0_i32_0 = arith.constant 0 : i32
    %c0_i32_1 = arith.constant 0 : i32
    return %c0_i32, %c0_i32_0 : i32, i32
  }
  func.func @transform_11(%arg0: i32) -> (i32, i32) {
    %c0_i32 = arith.constant 0 : i32
    %c0_i32_0 = arith.constant 0 : i32
    return %arg0, %c0_i32 : i32, i32
  }
}

</mosaic_0001>

<llo_original>
// kernel: split.15
$region0: #{split.15}
  #allocation0 [shape = 'u32[2048]{0}', space=vmem, size = 0x2000, scoped, tag = 'scoped memory for split.15']
  #allocation1 [shape = 'u32[2048]{0}', space=vmem, size = 0x2000, scoped, tag = 'scoped memory for split.15']
  #allocation2 [shape = 'u32[2048]{0}', space=vmem, size = 0x2000, scoped, tag = 'scoped memory for split.15']
  #allocation3 [shape = 'u32[2048]{0}', space=vmem, size = 0x2000, scoped, tag = 'scoped memory for split.15']
  #allocation4 [shape = 'u32[2048]{0}', space=vmem, size = 0x2000, scoped, tag = 'scoped memory for split.15']
  #allocation5 [shape = 's32[1]{0}', space=sflag, size = 0x4, scoped, tag = 'scoped memory for split.15']
  %s0 = inlined_call_operand.vmem [shape: bf16[2,128,128], index: 0, kind: input, shape index: {}]
  %s1 = inlined_call_operand.vmem [shape: bf16[2,32,1], index: 1, kind: output, shape index: {}]
  %v2 = vld [vmem:[%s0] sm:$0xf]
  %v3 = vunpack.c.l.bf16 %v2
  %v4 = vunpack.c.h.bf16 %v2
  %v5 = vlaneseq
  %v6 = vand.u32 %v5, 127
  %vm7 = vcmp.lt.s32.totalorder %v6, 66
  %v8 = vsel %vm7, 0, %v3
  %9 = vrot.lane.b32.xlu0 %v8, 62
  %v10 = vpop.permute.xlu0 %9
  %v11 = vpack.c.bf16 0.0, %v10
  %12 = vst [vmem:[%s1] sm:$0xf] %v11
  %s13 = scalar_lea.vmem %s0, 64
  %v14 = vld [vmem:[%s13] sm:$0xf]
  %v15 = vunpack.c.l.bf16 %v14
  %v16 = vunpack.c.h.bf16 %v14
  %v17 = vlaneseq
  %v18 = vand.u32 %v17, 127
  %vm19 = vcmp.lt.s32.totalorder %v18, 66
  %v20 = vsel %vm19, 0, %v15
  %21 = vrot.lane.b32.xlu0 %v20, 62
  %v22 = vpop.permute.xlu0 %21
  %s23 = scalar_lea.vmem %s1, 16
  %v24 = vpack.c.bf16 0.0, %v22
  %25 = vst [vmem:[%s23] sm:$0xf] %v24
  %s26 = scalar_lea.vmem %s0, 4
  %v27 = vld [vmem:[%s26] sm:$0xf]
  %v28 = vunpack.c.l.bf16 %v27
  %v29 = vunpack.c.h.bf16 %v27
  %v30 = vlaneseq
  %v31 = vand.u32 %v30, 127
  %vm32 = vcmp.lt.s32.totalorder %v31, 66
  %v33 = vsel %vm32, 0, %v28
  %34 = vrot.lane.b32.xlu0 %v33, 62
  %v35 = vpop.permute.xlu0 %34
  %s36 = scalar_lea.vmem %s1, 4
  %v37 = vpack.c.bf16 0.0, %v35
  %38 = vst [vmem:[%s36] sm:$0xf] %v37
  %s39 = scalar_lea.vmem %s0, 68
  %v40 = vld [vmem:[%s39] sm:$0xf]
  %v41 = vunpack.c.l.bf16 %v40
  %v42 = vunpack.c.h.bf16 %v40
  %v43 = vlaneseq
  %v44 = vand.u32 %v43, 127
  %vm45 = vcmp.lt.s32.totalorder %v44, 66
  %v46 = vsel %vm45, 0, %v41
  %47 = vrot.lane.b32.xlu0 %v46, 62
  %v48 = vpop.permute.xlu0 %47
  %s49 = scalar_lea.vmem %s1, 20
  %v50 = vpack.c.bf16 0.0, %v48
  %51 = vst [vmem:[%s49] sm:$0xf] %v50
  %s52 = scalar_lea.vmem %s0, 8
  %v53 = vld [vmem:[%s52] sm:$0xf]
  %v54 = vunpack.c.l.bf16 %v53
  %v55 = vunpack.c.h.bf16 %v53
  %v56 = vlaneseq
  %v57 = vand.u32 %v56, 127
  %vm58 = vcmp.lt.s32.totalorder %v57, 66
  %v59 = vsel %vm58, 0, %v54
  %60 = vrot.lane.b32.xlu0 %v59, 62
  %v61 = vpop.permute.xlu0 %60
  %s62 = scalar_lea.vmem %s1, 8
  %v63 = vpack.c.bf16 0.0, %v61
  %64 = vst [vmem:[%s62] sm:$0xf] %v63
  %s65 = scalar_lea.vmem %s0, 72
  %v66 = vld [vmem:[%s65] sm:$0xf]
  %v67 = vunpack.c.l.bf16 %v66
  %v68 = vunpack.c.h.bf16 %v66
  %v69 = vlaneseq
  %v70 = vand.u32 %v69, 127
  %vm71 = vcmp.lt.s32.totalorder %v70, 66
  %v72 = vsel %vm71, 0, %v67
  %73 = vrot.lane.b32.xlu0 %v72, 62
  %v74 = vpop.permute.xlu0 %73
  %s75 = scalar_lea.vmem %s1, 24
  %v76 = vpack.c.bf16 0.0, %v74
  %77 = vst [vmem:[%s75] sm:$0xf] %v76
  %s78 = scalar_lea.vmem %s0, 12
  %v79 = vld [vmem:[%s78] sm:$0xf]
  %v80 = vunpack.c.l.bf16 %v79
  %v81 = vunpack.c.h.bf16 %v79
  %v82 = vlaneseq
  %v83 = vand.u32 %v82, 127
  %vm84 = vcmp.lt.s32.totalorder %v83, 66
  %v85 = vsel %vm84, 0, %v80
  %86 = vrot.lane.b32.xlu0 %v85, 62
  %v87 = vpop.permute.xlu0 %86
  %s88 = scalar_lea.vmem %s1, 12
  %v89 = vpack.c.bf16 0.0, %v87
  %90 = vst [vmem:[%s88] sm:$0xf] %v89
  %s91 = scalar_lea.vmem %s0, 76
  %v92 = vld [vmem:[%s91] sm:$0xf]
  %v93 = vunpack.c.l.bf16 %v92
  %v94 = vunpack.c.h.bf16 %v92
  %v95 = vlaneseq
  %v96 = vand.u32 %v95, 127
  %vm97 = vcmp.lt.s32.totalorder %v96, 66
  %v98 = vsel %vm97, 0, %v93
  %99 = vrot.lane.b32.xlu0 %v98, 62
  %v100 = vpop.permute.xlu0 %99
  %s101 = scalar_lea.vmem %s1, 28
  %v102 = vpack.c.bf16 0.0, %v100
  %103 = vst [vmem:[%s101] sm:$0xf] %v102

// kernel: split.16
$region0: #{split.16}
  #allocation0 [shape = 'u32[2048]{0}', space=vmem, size = 0x2000, scoped, tag = 'scoped memory for split.16']
  #allocation1 [shape = 'u32[2048]{0}', space=vmem, size = 0x2000, scoped, tag = 'scoped memory for split.16']
  #allocation2 [shape = 'u32[2048]{0}', space=vmem, size = 0x2000, scoped, tag = 'scoped memory for split.16']
  #allocation3 [shape = 'u32[2048]{0}', space=vmem, size = 0x2000, scoped, tag = 'scoped memory for split.16']
  #allocation4 [shape = 'u32[2048]{0}', space=vmem, size = 0x2000, scoped, tag = 'scoped memory for split.16']
  #allocation5 [shape = 's32[1]{0}', space=sflag, size = 0x4, scoped, tag = 'scoped memory for split.16']
  %s0 = inlined_call_operand.vmem [shape: bf16[2,128,128], index: 0, kind: input, shape index: {}]
  %s1 = inlined_call_operand.vmem [shape: bf16[2,32,3], index: 1, kind: output, shape index: {}]
  %v2 = vld [vmem:[%s0] sm:$0xf]
  %v3 = vunpack.c.l.bf16 %v2
  %v4 = vunpack.c.h.bf16 %v2
  %v5 = vlaneseq
  %v6 = vand.u32 %v5, 127
  %vm7 = vcmp.lt.s32.totalorder %v6, 67
  %v8 = vsel %vm7, 0, %v3
  %9 = vrot.lane.b32.xlu0 %v8, 61
  %v10 = vpop.permute.xlu0 %9
  %v11 = vpack.c.bf16 0.0, %v10
  %12 = vst [vmem:[%s1] sm:$0xf] %v11
  %s13 = scalar_lea.vmem %s0, 64
  %v14 = vld [vmem:[%s13] sm:$0xf]
  %v15 = vunpack.c.l.bf16 %v14
  %v16 = vunpack.c.h.bf16 %v14
  %v17 = vlaneseq
  %v18 = vand.u32 %v17, 127
  %vm19 = vcmp.lt.s32.totalorder %v18, 67
  %v20 = vsel %vm19, 0, %v15
  %21 = vrot.lane.b32.xlu0 %v20, 61
  %v22 = vpop.permute.xlu0 %21
  %s23 = scalar_lea.vmem %s1, 16
  %v24 = vpack.c.bf16 0.0, %v22
  %25 = vst [vmem:[%s23] sm:$0xf] %v24
  %s26 = scalar_lea.vmem %s0, 4
  %v27 = vld [vmem:[%s26] sm:$0xf]
  %v28 = vunpack.c.l.bf16 %v27
  %v29 = vunpack.c.h.bf16 %v27
  %v30 = vlaneseq
  %v31 = vand.u32 %v30, 127
  %vm32 = vcmp.lt.s32.totalorder %v31, 67
  %v33 = vsel %vm32, 0, %v28
  %34 = vrot.lane.b32.xlu0 %v33, 61
  %v35 = vpop.permute.xlu0 %34
  %s36 = scalar_lea.vmem %s1, 4
  %v37 = vpack.c.bf16 0.0, %v35
  %38 = vst [vmem:[%s36] sm:$0xf] %v37
  %s39 = scalar_lea.vmem %s0, 68
  %v40 = vld [vmem:[%s39] sm:$0xf]
  %v41 = vunpack.c.l.bf16 %v40
  %v42 = vunpack.c.h.bf16 %v40
  %v43 = vlaneseq
  %v44 = vand.u32 %v43, 127
  %vm45 = vcmp.lt.s32.totalorder %v44, 67
  %v46 = vsel %vm45, 0, %v41
  %47 = vrot.lane.b32.xlu0 %v46, 61
  %v48 = vpop.permute.xlu0 %47
  %s49 = scalar_lea.vmem %s1, 20
  %v50 = vpack.c.bf16 0.0, %v48
  %51 = vst [vmem:[%s49] sm:$0xf] %v50
  %s52 = scalar_lea.vmem %s0, 8
  %v53 = vld [vmem:[%s52] sm:$0xf]
  %v54 = vunpack.c.l.bf16 %v53
  %v55 = vunpack.c.h.bf16 %v53
  %v56 = vlaneseq
  %v57 = vand.u32 %v56, 127
  %vm58 = vcmp.lt.s32.totalorder %v57, 67
  %v59 = vsel %vm58, 0, %v54
  %60 = vrot.lane.b32.xlu0 %v59, 61
  %v61 = vpop.permute.xlu0 %60
  %s62 = scalar_lea.vmem %s1, 8
  %v63 = vpack.c.bf16 0.0, %v61
  %64 = vst [vmem:[%s62] sm:$0xf] %v63
  %s65 = scalar_lea.vmem %s0, 72
  %v66 = vld [vmem:[%s65] sm:$0xf]
  %v67 = vunpack.c.l.bf16 %v66
  %v68 = vunpack.c.h.bf16 %v66
  %v69 = vlaneseq
  %v70 = vand.u32 %v69, 127
  %vm71 = vcmp.lt.s32.totalorder %v70, 67
  %v72 = vsel %vm71, 0, %v67
  %73 = vrot.lane.b32.xlu0 %v72, 61
  %v74 = vpop.permute.xlu0 %73
  %s75 = scalar_lea.vmem %s1, 24
  %v76 = vpack.c.bf16 0.0, %v74
  %77 = vst [vmem:[%s75] sm:$0xf] %v76
  %s78 = scalar_lea.vmem %s0, 12
  %v79 = vld [vmem:[%s78] sm:$0xf]
  %v80 = vunpack.c.l.bf16 %v79
  %v81 = vunpack.c.h.bf16 %v79
  %v82 = vlaneseq
  %v83 = vand.u32 %v82, 127
  %vm84 = vcmp.lt.s32.totalorder %v83, 67
  %v85 = vsel %vm84, 0, %v80
  %86 = vrot.lane.b32.xlu0 %v85, 61
  %v87 = vpop.permute.xlu0 %86
  %s88 = scalar_lea.vmem %s1, 12
  %v89 = vpack.c.bf16 0.0, %v87
  %90 = vst [vmem:[%s88] sm:$0xf] %v89
  %s91 = scalar_lea.vmem %s0, 76
  %v92 = vld [vmem:[%s91] sm:$0xf]
  %v93 = vunpack.c.l.bf16 %v92
  %v94 = vunpack.c.h.bf16 %v92
  %v95 = vlaneseq
  %v96 = vand.u32 %v95, 127
  %vm97 = vcmp.lt.s32.totalorder %v96, 67
  %v98 = vsel %vm97, 0, %v93
  %99 = vrot.lane.b32.xlu0 %v98, 61
  %v100 = vpop.permute.xlu0 %99
  %s101 = scalar_lea.vmem %s1, 28
  %v102 = vpack.c.bf16 0.0, %v100
  %103 = vst [vmem:[%s101] sm:$0xf] %v102

// kernel: bevfusion_forward.1
$region0: #{bevfusion_forward.1}
  #allocation0 [shape = 'u32[]', space=smem, size = 0x4, offset = 0x4, fixed_abs, tag = 'smem constant byte address 0x4 - core index']
  #allocation1 [shape = 'u32[144,128]{1,0:T(1,128)}', space=vmem, size = 0x12000, scoped, tag = 'internal scratch']
  %s0 = inlined_call_operand.vmem [shape: bf16[256,16], index: 0, kind: input, shape index: {}]
  %s1 = inlined_call_operand.vmem [shape: f32[3,32], index: 1, kind: input, shape index: {}]
  %s2 = inlined_call_operand.vmem [shape: f32[1,32], index: 2, kind: input, shape index: {}]
  %s3 = inlined_call_operand.vmem [shape: bf16[32,32], index: 3, kind: input, shape index: {}]
  %s4 = inlined_call_operand.vmem [shape: f32[1,32], index: 4, kind: input, shape index: {}]
  %s5 = inlined_call_operand.vmem [shape: f32[4,32], index: 5, kind: input, shape index: {}]
  %s6 = inlined_call_operand.vmem [shape: f32[1,32], index: 6, kind: input, shape index: {}]
  %s7 = inlined_call_operand.vmem [shape: bf16[64,64], index: 7, kind: input, shape index: {}]
  %s8 = inlined_call_operand.vmem [shape: f32[1,64], index: 8, kind: input, shape index: {}]
  %s9 = inlined_call_operand.vmem [shape: bf16[64,128], index: 9, kind: input, shape index: {}]
  %s10 = inlined_call_operand.vmem [shape: f32[1,128], index: 10, kind: input, shape index: {}]
  %s11 = inlined_call_operand.vmem [shape: bf16[256,128], index: 11, kind: output, shape index: {}]
  %s12 = sld [smem:[#allocation0]]
  $region54: #{bevfusion_forward.1} parent=0
    _
  %s14 = ssub.s32 1, %s12
  %s15 = scalar_select 0, %s14, %s12
  // Predicated region
  $region2: #{bevfusion_forward.1} parent=0 // pred_check
    _
  $region3: #{bevfusion_forward.1} parent=0 // pred_check_branch
    %17 = sbr.rel (0) target = $region5
  $region4: #{bevfusion_forward.1} parent=0 // pred_region
    _
  $region5: #{bevfusion_forward.1} parent=0 // pred_fallthru
    _
  // Predicated region
  $region6: #{bevfusion_forward.1} parent=0 // pred_check
    _
  $region7: #{bevfusion_forward.1} parent=0 // pred_check_branch
    %19 = sbr.rel (0) target = $region9
  $region8: #{bevfusion_forward.1} parent=0 // pred_region
    _
  $region9: #{bevfusion_forward.1} parent=0 // pred_fallthru
    _
  // Predicated region
  $region10: #{bevfusion_forward.1} parent=0 // pred_check
    _
  $region11: #{bevfusion_forward.1} parent=0 // pred_check_branch
    %21 = sbr.rel (0) target = $region13
  $region12: #{bevfusion_forward.1} parent=0 // pred_region
    _
  $region13: #{bevfusion_forward.1} parent=0 // pred_fallthru
    _
  // Predicated region
  $region14: #{bevfusion_forward.1} parent=0 // pred_check
    _
  $region15: #{bevfusion_forward.1} parent=0 // pred_check_branch
    %23 = sbr.rel (0) target = $region17
  $region16: #{bevfusion_forward.1} parent=0 // pred_region
    _
  $region17: #{bevfusion_forward.1} parent=0 // pred_fallthru
    _
  // Predicated region
  $region18: #{bevfusion_forward.1} parent=0 // pred_check
    _
  $region19: #{bevfusion_forward.1} parent=0 // pred_check_branch
    %25 = sbr.rel (0) target = $region21
  $region20: #{bevfusion_forward.1} parent=0 // pred_region
    _
  $region21: #{bevfusion_forward.1} parent=0 // pred_fallthru
    _
  // Predicated region
  $region22: #{bevfusion_forward.1} parent=0 // pred_check
    _
  $region23: #{bevfusion_forward.1} parent=0 // pred_check_branch
    %27 = sbr.rel (0) target = $region25
  $region24: #{bevfusion_forward.1} parent=0 // pred_region
    _
  $region25: #{bevfusion_forward.1} parent=0 // pred_fallthru
    _
  // Predicated region
  $region26: #{bevfusion_forward.1} parent=0 // pred_check
    _
  $region27: #{bevfusion_forward.1} parent=0 // pred_check_branch
    %29 = sbr.rel (0) target = $region29
  $region28: #{bevfusion_forward.1} parent=0 // pred_region
    _
  $region29: #{bevfusion_forward.1} parent=0 // pred_fallthru
    _
  // Predicated region
  $region30: #{bevfusion_forward.1} parent=0 // pred_check
    _
  $region31: #{bevfusion_forward.1} parent=0 // pred_check_branch
    %31 = sbr.rel (0) target = $region33
  $region32: #{bevfusion_forward.1} parent=0 // pred_region
    _
  $region33: #{bevfusion_forward.1} parent=0 // pred_fallthru
    _
  // Predicated region
  $region34: #{bevfusion_forward.1} parent=0 // pred_check
    _
  $region35: #{bevfusion_forward.1} parent=0 // pred_check_branch
    %33 = sbr.rel (0) target = $region37
  $region36: #{bevfusion_forward.1} parent=0 // pred_region
    _
  $region37: #{bevfusion_forward.1} parent=0 // pred_fallthru
    _
  // Predicated region
  $region38: #{bevfusion_forward.1} parent=0 // pred_check
    _
  $region39: #{bevfusion_forward.1} parent=0 // pred_check_branch
    %35 = sbr.rel (0) target = $region41
  $region40: #{bevfusion_forward.1} parent=0 // pred_region
    _
  $region41: #{bevfusion_forward.1} parent=0 // pred_fallthru
    _
  // Predicated region
  $region42: #{bevfusion_forward.1} parent=0 // pred_check
    _
  $region43: #{bevfusion_forward.1} parent=0 // pred_check_branch
    %37 = sbr.rel (0) target = $region45
  $region44: #{bevfusion_forward.1} parent=0 // pred_region
    _
  $region45: #{bevfusion_forward.1} parent=0 // pred_fallthru
    _
  %v39 = vld [vmem:[%s1] sm:$0x7]
  %v40 = vld [vmem:[%s2] sm:$0x1]
  %v41 = vld [vmem:[%s5] sm:$0xf]
  %v42 = vld [vmem:[%s6] sm:$0x1]
  %v43 = vld [vmem:[%s0] sm:$0xf]
  %v44 = vld [vmem:[%s0 + $0x4] sm:$0xf]
  %v45 = vld [vmem:[%s0 + $0x8] sm:$0xf]
  %v46 = vld [vmem:[%s0 + $0xc] sm:$0xf]
  %v47 = vld [vmem:[%s0 + $0x10] sm:$0xf]
  %v48 = vld [vmem:[%s0 + $0x14] sm:$0xf]
  %v49 = vld [vmem:[%s0 + $0x18] sm:$0xf]
  %v50 = vld [vmem:[%s0 + $0x1c] sm:$0xf]
  %v51 = vld [vmem:[%s0 + $0x20] sm:$0xf]
  %v52 = vld [vmem:[%s0 + $0x24] sm:$0xf]
  %v53 = vld [vmem:[%s0 + $0x28] sm:$0xf]
  %v54 = vld [vmem:[%s0 + $0x2c] sm:$0xf]
  %v55 = vld [vmem:[%s0 + $0x30] sm:$0xf]
  %v56 = vld [vmem:[%s0 + $0x34] sm:$0xf]
  %v57 = vld [vmem:[%s0 + $0x38] sm:$0xf]
  %v58 = vld [vmem:[%s0 + $0x3c] sm:$0xf]
  %v59 = vld [vmem:[%s0 + $0x40] sm:$0xf]
  %v60 = vld [vmem:[%s0 + $0x44] sm:$0xf]
  %v61 = vld [vmem:[%s0 + $0x48] sm:$0xf]
  %v62 = vld [vmem:[%s0 + $0x4c] sm:$0xf]
  %v63 = vld [vmem:[%s0 + $0x50] sm:$0xf]
  %v64 = vld [vmem:[%s0 + $0x54] sm:$0xf]
  %v65 = vld [vmem:[%s0 + $0x58] sm:$0xf]
  %v66 = vld [vmem:[%s0 + $0x5c] sm:$0xf]
  %v67 = vld [vmem:[%s0 + $0x60] sm:$0xf]
  %v68 = vld [vmem:[%s0 + $0x64] sm:$0xf]
  %v69 = vld [vmem:[%s0 + $0x68] sm:$0xf]
  %v70 = vld [vmem:[%s0 + $0x6c] sm:$0xf]
  %v71 = vld [vmem:[%s0 + $0x70] sm:$0xf]
  %v72 = vld [vmem:[%s0 + $0x74] sm:$0xf]
  %v73 = vld [vmem:[%s0 + $0x78] sm:$0xf]
  %v74 = vld [vmem:[%s0 + $0x7c] sm:$0xf]
  %v75 = vunpack.c.l.bf16 %v43
  %v76 = vunpack.c.l.bf16 %v44
  %v77 = vunpack.c.l.bf16 %v45
  %v78 = vunpack.c.l.bf16 %v46
  %v79 = vunpack.c.l.bf16 %v47
  %v80 = vunpack.c.l.bf16 %v48
  %v81 = vunpack.c.l.bf16 %v49
  %v82 = vunpack.c.l.bf16 %v50
  %v83 = vunpack.c.l.bf16 %v51
  %v84 = vunpack.c.l.bf16 %v52
  %v85 = vunpack.c.l.bf16 %v53
  %v86 = vunpack.c.l.bf16 %v54
  %v87 = vunpack.c.l.bf16 %v55
  %v88 = vunpack.c.l.bf16 %v56
  %v89 = vunpack.c.l.bf16 %v57
  %v90 = vunpack.c.l.bf16 %v58
  %v91 = vunpack.c.l.bf16 %v59
  %v92 = vunpack.c.l.bf16 %v60
  %v93 = vunpack.c.l.bf16 %v61
  %v94 = vunpack.c.l.bf16 %v62
  %v95 = vunpack.c.l.bf16 %v63
  %v96 = vunpack.c.l.bf16 %v64
  %v97 = vunpack.c.l.bf16 %v65
  %v98 = vunpack.c.l.bf16 %v66
  %v99 = vunpack.c.l.bf16 %v67
  %v100 = vunpack.c.l.bf16 %v68
  %v101 = vunpack.c.l.bf16 %v69
  %v102 = vunpack.c.l.bf16 %v70
  %v103 = vunpack.c.l.bf16 %v71
  %v104 = vunpack.c.l.bf16 %v72
  %v105 = vunpack.c.l.bf16 %v73
  %v106 = vunpack.c.l.bf16 %v74
  %108 = vset.pattern.permute.xlu0 0
  %109 = vperm.xlu0 %108, %v75
  %v110 = vpop.permute.xlu0 %109
  %113 = vset.pattern.permute.xlu0 0
  %114 = vperm.xlu0 %113, %v76
  %v115 = vpop.permute.xlu0 %114
  %118 = vset.pattern.permute.xlu0 0
  %119 = vperm.xlu0 %118, %v77
  %v120 = vpop.permute.xlu0 %119
  %123 = vset.pattern.permute.xlu0 0
  %124 = vperm.xlu0 %123, %v78
  %v125 = vpop.permute.xlu0 %124
  %128 = vset.pattern.permute.xlu0 0
  %129 = vperm.xlu0 %128, %v79
  %v130 = vpop.permute.xlu0 %129
  %133 = vset.pattern.permute.xlu0 0
  %134 = vperm.xlu0 %133, %v80
  %v135 = vpop.permute.xlu0 %134
  %138 = vset.pattern.permute.xlu0 0
  %139 = vperm.xlu0 %138, %v81
  %v140 = vpop.permute.xlu0 %139
  %143 = vset.pattern.permute.xlu0 0
  %144 = vperm.xlu0 %143, %v82
  %v145 = vpop.permute.xlu0 %144
  %148 = vset.pattern.permute.xlu0 0
  %149 = vperm.xlu0 %148, %v83
  %v150 = vpop.permute.xlu0 %149
  %153 = vset.pattern.permute.xlu0 0
  %154 = vperm.xlu0 %153, %v84
  %v155 = vpop.permute.xlu0 %154
  %158 = vset.pattern.permute.xlu0 0
  %159 = vperm.xlu0 %158, %v85
  %v160 = vpop.permute.xlu0 %159
  %163 = vset.pattern.permute.xlu0 0
  %164 = vperm.xlu0 %163, %v86
  %v165 = vpop.permute.xlu0 %164
  %168 = vset.pattern.permute.xlu0 0
  %169 = vperm.xlu0 %168, %v87
  %v170 = vpop.permute.xlu0 %169
  %173 = vset.pattern.permute.xlu0 0
  %174 = vperm.xlu0 %173, %v88
  %v175 = vpop.permute.xlu0 %174
  %178 = vset.pattern.permute.xlu0 0
  %179 = vperm.xlu0 %178, %v89
  %v180 = vpop.permute.xlu0 %179
  %183 = vset.pattern.permute.xlu0 0
  %184 = vperm.xlu0 %183, %v90
  %v185 = vpop.permute.xlu0 %184
  %188 = vset.pattern.permute.xlu0 0
  %189 = vperm.xlu0 %188, %v91
  %v190 = vpop.permute.xlu0 %189
  %193 = vset.pattern.permute.xlu0 0
  %194 = vperm.xlu0 %193, %v92
  %v195 = vpop.permute.xlu0 %194
  %198 = vset.pattern.permute.xlu0 0
  %199 = vperm.xlu0 %198, %v93
  %v200 = vpop.permute.xlu0 %199
  %203 = vset.pattern.permute.xlu0 0
  %204 = vperm.xlu0 %203, %v94
  %v205 = vpop.permute.xlu0 %204
  %208 = vset.pattern.permute.xlu0 0
  %209 = vperm.xlu0 %208, %v95
  %v210 = vpop.permute.xlu0 %209
  %213 = vset.pattern.permute.xlu0 0
  %214 = vperm.xlu0 %213, %v96
  %v215 = vpop.permute.xlu0 %214
  %218 = vset.pattern.permute.xlu0 0
  %219 = vperm.xlu0 %218, %v97
  %v220 = vpop.permute.xlu0 %219
  %223 = vset.pattern.permute.xlu0 0
  %224 = vperm.xlu0 %223, %v98
  %v225 = vpop.permute.xlu0 %224
  %228 = vset.pattern.permute.xlu0 0
  %229 = vperm.xlu0 %228, %v99
  %v230 = vpop.permute.xlu0 %229
  %233 = vset.pattern.permute.xlu0 0
  %234 = vperm.xlu0 %233, %v100
  %v235 = vpop.permute.xlu0 %234
  %238 = vset.pattern.permute.xlu0 0
  %239 = vperm.xlu0 %238, %v101
  %v240 = vpop.permute.xlu0 %239
  %243 = vset.pattern.permute.xlu0 0
  %244 = vperm.xlu0 %243, %v102
  %v245 = vpop.permute.xlu0 %244
  %248 = vset.pattern.permute.xlu0 0
  %249 = vperm.xlu0 %248, %v103
  %v250 = vpop.permute.xlu0 %249
  %253 = vset.pattern.permute.xlu0 0
  %254 = vperm.xlu0 %253, %v104
  %v255 = vpop.permute.xlu0 %254
  %258 = vset.pattern.permute.xlu0 0
  %259 = vperm.xlu0 %258, %v105
  %v260 = vpop.permute.xlu0 %259
  %263 = vset.pattern.permute.xlu0 0
  %264 = vperm.xlu0 %263, %v106
  %v265 = vpop.permute.xlu0 %264
  %v267 = vlaneseq
  %v268 = vshrl.u32 %v267, 7
  %v269 = vsub.s32 0, %v268
  %v270 = vrot.slane %v39, %v269
  %v271 = vmul.f32 %v110, %v270
  %v272 = vmul.f32 %v115, %v270
  %v273 = vmul.f32 %v120, %v270
  %v274 = vmul.f32 %v125, %v270
  %v275 = vmul.f32 %v130, %v270
  %v276 = vmul.f32 %v135, %v270
  %v277 = vmul.f32 %v140, %v270
  %v278 = vmul.f32 %v145, %v270
  %v279 = vmul.f32 %v150, %v270
  %v280 = vmul.f32 %v155, %v270
  %v281 = vmul.f32 %v160, %v270
  %v282 = vmul.f32 %v165, %v270
  %v283 = vmul.f32 %v170, %v270
  %v284 = vmul.f32 %v175, %v270
  %v285 = vmul.f32 %v180, %v270
  %v286 = vmul.f32 %v185, %v270
  %v287 = vmul.f32 %v190, %v270
  %v288 = vmul.f32 %v195, %v270
  %v289 = vmul.f32 %v200, %v270
  %v290 = vmul.f32 %v205, %v270
  %v291 = vmul.f32 %v210, %v270
  %v292 = vmul.f32 %v215, %v270
  %v293 = vmul.f32 %v220, %v270
  %v294 = vmul.f32 %v225, %v270
  %v295 = vmul.f32 %v230, %v270
  %v296 = vmul.f32 %v235, %v270
  %v297 = vmul.f32 %v240, %v270
  %v298 = vmul.f32 %v245, %v270
  %v299 = vmul.f32 %v250, %v270
  %v300 = vmul.f32 %v255, %v270
  %v301 = vmul.f32 %v260, %v270
  %v302 = vmul.f32 %v265, %v270
  %303 = vset.pattern.permute.xlu0 1
  %304 = vperm.xlu0 %303, %v75
  %v305 = vpop.permute.xlu0 %304
  %307 = vset.pattern.permute.xlu0 1
  %308 = vperm.xlu0 %307, %v76
  %v309 = vpop.permute.xlu0 %308
  %311 = vset.pattern.permute.xlu0 1
  %312 = vperm.xlu0 %311, %v77
  %v313 = vpop.permute.xlu0 %312
  %315 = vset.pattern.permute.xlu0 1
  %316 = vperm.xlu0 %315, %v78
  %v317 = vpop.permute.xlu0 %316
  %319 = vset.pattern.permute.xlu0 1
  %320 = vperm.xlu0 %319, %v79
  %v321 = vpop.permute.xlu0 %320
  %323 = vset.pattern.permute.xlu0 1
  %324 = vperm.xlu0 %323, %v80
  %v325 = vpop.permute.xlu0 %324
  %327 = vset.pattern.permute.xlu0 1
  %328 = vperm.xlu0 %327, %v81
  %v329 = vpop.permute.xlu0 %328
  %331 = vset.pattern.permute.xlu0 1
  %332 = vperm.xlu0 %331, %v82
  %v333 = vpop.permute.xlu0 %332
  %335 = vset.pattern.permute.xlu0 1
  %336 = vperm.xlu0 %335, %v83
  %v337 = vpop.permute.xlu0 %336
  %339 = vset.pattern.permute.xlu0 1
  %340 = vperm.xlu0 %339, %v84
  %v341 = vpop.permute.xlu0 %340
  %343 = vset.pattern.permute.xlu0 1
  %344 = vperm.xlu0 %343, %v85
  %v345 = vpop.permute.xlu0 %344
  %347 = vset.pattern.permute.xlu0 1
  %348 = vperm.xlu0 %347, %v86
  %v349 = vpop.permute.xlu0 %348
  %351 = vset.pattern.permute.xlu0 1
  %352 = vperm.xlu0 %351, %v87
  %v353 = vpop.permute.xlu0 %352
  %355 = vset.pattern.permute.xlu0 1
  %356 = vperm.xlu0 %355, %v88
  %v357 = vpop.permute.xlu0 %356
  %359 = vset.pattern.permute.xlu0 1
  %360 = vperm.xlu0 %359, %v89
  %v361 = vpop.permute.xlu0 %360
  %363 = vset.pattern.permute.xlu0 1
  %364 = vperm.xlu0 %363, %v90
  %v365 = vpop.permute.xlu0 %364
  %367 = vset.pattern.permute.xlu0 1
  %368 = vperm.xlu0 %367, %v91
  %v369 = vpop.permute.xlu0 %368
  %371 = vset.pattern.permute.xlu0 1
  %372 = vperm.xlu0 %371, %v92
  %v373 = vpop.permute.xlu0 %372
  %375 = vset.pattern.permute.xlu0 1
  %376 = vperm.xlu0 %375, %v93
  %v377 = vpop.permute.xlu0 %376
  %379 = vset.pattern.permute.xlu0 1
  %380 = vperm.xlu0 %379, %v94
  %v381 = vpop.permute.xlu0 %380
  %383 = vset.pattern.permute.xlu0 1
  %384 = vperm.xlu0 %383, %v95
  %v385 = vpop.permute.xlu0 %384
  %387 = vset.pattern.permute.xlu0 1
  %388 = vperm.xlu0 %387, %v96
  %v389 = vpop.permute.xlu0 %388
  %391 = vset.pattern.permute.xlu0 1
  %392 = vperm.xlu0 %391, %v97
  %v393 = vpop.permute.xlu0 %392
  %395 = vset.pattern.permute.xlu0 1
  %396 = vperm.xlu0 %395, %v98
  %v397 = vpop.permute.xlu0 %396
  %399 = vset.pattern.permute.xlu0 1
  %400 = vperm.xlu0 %399, %v99
  %v401 = vpop.permute.xlu0 %400
  %403 = vset.pattern.permute.xlu0 1
  %404 = vperm.xlu0 %403, %v100
  %v405 = vpop.permute.xlu0 %404
  %407 = vset.pattern.permute.xlu0 1
  %408 = vperm.xlu0 %407, %v101
  %v409 = vpop.permute.xlu0 %408
  %411 = vset.pattern.permute.xlu0 1
  %412 = vperm.xlu0 %411, %v102
  %v413 = vpop.permute.xlu0 %412
  %415 = vset.pattern.permute.xlu0 1
  %416 = vperm.xlu0 %415, %v103
  %v417 = vpop.permute.xlu0 %416
  %419 = vset.pattern.permute.xlu0 1
  %420 = vperm.xlu0 %419, %v104
  %v421 = vpop.permute.xlu0 %420
  %423 = vset.pattern.permute.xlu0 1
  %424 = vperm.xlu0 %423, %v105
  %v425 = vpop.permute.xlu0 %424
  %427 = vset.pattern.permute.xlu0 1
  %428 = vperm.xlu0 %427, %v106
  %v429 = vpop.permute.xlu0 %428
  %v431 = vlaneseq
  %v432 = vshrl.u32 %v431, 7
  %v433 = vsub.s32 1, %v432
  %v434 = vrot.slane %v39, %v433
  %v435 = vmul.f32 %v305, %v434
  %v436 = vmul.f32 %v309, %v434
  %v437 = vmul.f32 %v313, %v434
  %v438 = vmul.f32 %v317, %v434
  %v439 = vmul.f32 %v321, %v434
  %v440 = vmul.f32 %v325, %v434
  %v441 = vmul.f32 %v329, %v434
  %v442 = vmul.f32 %v333, %v434
  %v443 = vmul.f32 %v337, %v434
  %v444 = vmul.f32 %v341, %v434
  %v445 = vmul.f32 %v345, %v434
  %v446 = vmul.f32 %v349, %v434
  %v447 = vmul.f32 %v353, %v434
  %v448 = vmul.f32 %v357, %v434
  %v449 = vmul.f32 %v361, %v434
  %v450 = vmul.f32 %v365, %v434
  %v451 = vmul.f32 %v369, %v434
  %v452 = vmul.f32 %v373, %v434
  %v453 = vmul.f32 %v377, %v434
  %v454 = vmul.f32 %v381, %v434
  %v455 = vmul.f32 %v385, %v434
  %v456 = vmul.f32 %v389, %v434
  %v457 = vmul.f32 %v393, %v434
  %v458 = vmul.f32 %v397, %v434
  %v459 = vmul.f32 %v401, %v434
  %v460 = vmul.f32 %v405, %v434
  %v461 = vmul.f32 %v409, %v434
  %v462 = vmul.f32 %v413, %v434
  %v463 = vmul.f32 %v417, %v434
  %v464 = vmul.f32 %v421, %v434
  %v465 = vmul.f32 %v425, %v434
  %v466 = vmul.f32 %v429, %v434
  %v467 = vadd.f32 %v271, %v435
  %v468 = vadd.f32 %v272, %v436
  %v469 = vadd.f32 %v273, %v437
  %v470 = vadd.f32 %v274, %v438
  %v471 = vadd.f32 %v275, %v439
  %v472 = vadd.f32 %v276, %v440
  %v473 = vadd.f32 %v277, %v441
  %v474 = vadd.f32 %v278, %v442
  %v475 = vadd.f32 %v279, %v443
  %v476 = vadd.f32 %v280, %v444
  %v477 = vadd.f32 %v281, %v445
  %v478 = vadd.f32 %v282, %v446
  %v479 = vadd.f32 %v283, %v447
  %v480 = vadd.f32 %v284, %v448
  %v481 = vadd.f32 %v285, %v449
  %v482 = vadd.f32 %v286, %v450
  %v483 = vadd.f32 %v287, %v451
  %v484 = vadd.f32 %v288, %v452
  %v485 = vadd.f32 %v289, %v453
  %v486 = vadd.f32 %v290, %v454
  %v487 = vadd.f32 %v291, %v455
  %v488 = vadd.f32 %v292, %v456
  %v489 = vadd.f32 %v293, %v457
  %v490 = vadd.f32 %v294, %v458
  %v491 = vadd.f32 %v295, %v459
  %v492 = vadd.f32 %v296, %v460
  %v493 = vadd.f32 %v297, %v461
  %v494 = vadd.f32 %v298, %v462
  %v495 = vadd.f32 %v299, %v463
  %v496 = vadd.f32 %v300, %v464
  %v497 = vadd.f32 %v301, %v465
  %v498 = vadd.f32 %v302, %v466
  %499 = vset.pattern.permute.xlu0 2
  %500 = vperm.xlu0 %499, %v75
  %v501 = vpop.permute.xlu0 %500
  %503 = vset.pattern.permute.xlu0 2
  %504 = vperm.xlu0 %503, %v76
  %v505 = vpop.permute.xlu0 %504
  %507 = vset.pattern.permute.xlu0 2
  %508 = vperm.xlu0 %507, %v77
  %v509 = vpop.permute.xlu0 %508
  %511 = vset.pattern.permute.xlu0 2
  %512 = vperm.xlu0 %511, %v78
  %v513 = vpop.permute.xlu0 %512
  %515 = vset.pattern.permute.xlu0 2
  %516 = vperm.xlu0 %515, %v79
  %v517 = vpop.permute.xlu0 %516
  %519 = vset.pattern.permute.xlu0 2
  %520 = vperm.xlu0 %519, %v80
  %v521 = vpop.permute.xlu0 %520
  %523 = vset.pattern.permute.xlu0 2
  %524 = vperm.xlu0 %523, %v81
  %v525 = vpop.permute.xlu0 %524
  %527 = vset.pattern.permute.xlu0 2
  %528 = vperm.xlu0 %527, %v82
  %v529 = vpop.permute.xlu0 %528
  %531 = vset.pattern.permute.xlu0 2
  %532 = vperm.xlu0 %531, %v83
  %v533 = vpop.permute.xlu0 %532
  %535 = vset.pattern.permute.xlu0 2
  %536 = vperm.xlu0 %535, %v84
  %v537 = vpop.permute.xlu0 %536
  %539 = vset.pattern.permute.xlu0 2
  %540 = vperm.xlu0 %539, %v85
  %v541 = vpop.permute.xlu0 %540
  %543 = vset.pattern.permute.xlu0 2
  %544 = vperm.xlu0 %543, %v86
  %v545 = vpop.permute.xlu0 %544
  %547 = vset.pattern.permute.xlu0 2
  %548 = vperm.xlu0 %547, %v87
  %v549 = vpop.permute.xlu0 %548
  %551 = vset.pattern.permute.xlu0 2
  %552 = vperm.xlu0 %551, %v88
  %v553 = vpop.permute.xlu0 %552
  %555 = vset.pattern.permute.xlu0 2
  %556 = vperm.xlu0 %555, %v89
  %v557 = vpop.permute.xlu0 %556
  %559 = vset.pattern.permute.xlu0 2
  %560 = vperm.xlu0 %559, %v90
  %v561 = vpop.permute.xlu0 %560
  %563 = vset.pattern.permute.xlu0 2
  %564 = vperm.xlu0 %563, %v91
  %v565 = vpop.permute.xlu0 %564
  %567 = vset.pattern.permute.xlu0 2
  %568 = vperm.xlu0 %567, %v92
  %v569 = vpop.permute.xlu0 %568
  %571 = vset.pattern.permute.xlu0 2
  %572 = vperm.xlu0 %571, %v93
  %v573 = vpop.permute.xlu0 %572
  %575 = vset.pattern.permute.xlu0 2
  %576 = vperm.xlu0 %575, %v94
  %v577 = vpop.permute.xlu0 %576
  %579 = vset.pattern.permute.xlu0 2
  %580 = vperm.xlu0 %579, %v95
  %v581 = vpop.permute.xlu0 %580
  %583 = vset.pattern.permute.xlu0 2
  %584 = vperm.xlu0 %583, %v96
  %v585 = vpop.permute.xlu0 %584
  %587 = vset.pattern.permute.xlu0 2
  %588 = vperm.xlu0 %587, %v97
  %v589 = vpop.permute.xlu0 %588
  %591 = vset.pattern.permute.xlu0 2
  %592 = vperm.xlu0 %591, %v98
  %v593 = vpop.permute.xlu0 %592
  %595 = vset.pattern.permute.xlu0 2
  %596 = vperm.xlu0 %595, %v99
  %v597 = vpop.permute.xlu0 %596
  %599 = vset.pattern.permute.xlu0 2
  %600 = vperm.xlu0 %599, %v100
  %v601 = vpop.permute.xlu0 %600
  %603 = vset.pattern.permute.xlu0 2
  %604 = vperm.xlu0 %603, %v101
  %v605 = vpop.permute.xlu0 %604
  %607 = vset.pattern.permute.xlu0 2
  %608 = vperm.xlu0 %607, %v102
  %v609 = vpop.permute.xlu0 %608
  %611 = vset.pattern.permute.xlu0 2
  %612 = vperm.xlu0 %611, %v103
  %v613 = vpop.permute.xlu0 %612
  %615 = vset.pattern.permute.xlu0 2
  %616 = vperm.xlu0 %615, %v104
  %v617 = vpop.permute.xlu0 %616
  %619 = vset.pattern.permute.xlu0 2
  %620 = vperm.xlu0 %619, %v105
  %v621 = vpop.permute.xlu0 %620
  %623 = vset.pattern.permute.xlu0 2
  %624 = vperm.xlu0 %623, %v106
  %v625 = vpop.permute.xlu0 %624
  %v627 = vlaneseq
  %v628 = vshrl.u32 %v627, 7
  %v629 = vsub.s32 2, %v628
  %v630 = vrot.slane %v39, %v629
  %v631 = vmul.f32 %v501, %v630
  %v632 = vmul.f32 %v505, %v630
  %v633 = vmul.f32 %v509, %v630
  %v634 = vmul.f32 %v513, %v630
  %v635 = vmul.f32 %v517, %v630
  %v636 = vmul.f32 %v521, %v630
  %v637 = vmul.f32 %v525, %v630
  %v638 = vmul.f32 %v529, %v630
  %v639 = vmul.f32 %v533, %v630
  %v640 = vmul.f32 %v537, %v630
  %v641 = vmul.f32 %v541, %v630
  %v642 = vmul.f32 %v545, %v630
  %v643 = vmul.f32 %v549, %v630
  %v644 = vmul.f32 %v553, %v630
  %v645 = vmul.f32 %v557, %v630
  %v646 = vmul.f32 %v561, %v630
  %v647 = vmul.f32 %v565, %v630
  %v648 = vmul.f32 %v569, %v630
  %v649 = vmul.f32 %v573, %v630
  %v650 = vmul.f32 %v577, %v630
  %v651 = vmul.f32 %v581, %v630
  %v652 = vmul.f32 %v585, %v630
  %v653 = vmul.f32 %v589, %v630
  %v654 = vmul.f32 %v593, %v630
  %v655 = vmul.f32 %v597, %v630
  %v656 = vmul.f32 %v601, %v630
  %v657 = vmul.f32 %v605, %v630
  %v658 = vmul.f32 %v609, %v630
  %v659 = vmul.f32 %v613, %v630
  %v660 = vmul.f32 %v617, %v630
  %v661 = vmul.f32 %v621, %v630
  %v662 = vmul.f32 %v625, %v630
  %v663 = vadd.f32 %v467, %v631
  %v664 = vadd.f32 %v468, %v632
  %v665 = vadd.f32 %v469, %v633
  %v666 = vadd.f32 %v470, %v634
  %v667 = vadd.f32 %v471, %v635
  %v668 = vadd.f32 %v472, %v636
  %v669 = vadd.f32 %v473, %v637
  %v670 = vadd.f32 %v474, %v638
  %v671 = vadd.f32 %v475, %v639
  %v672 = vadd.f32 %v476, %v640
  %v673 = vadd.f32 %v477, %v641
  %v674 = vadd.f32 %v478, %v642
  %v675 = vadd.f32 %v479, %v643
  %v676 = vadd.f32 %v480, %v644
  %v677 = vadd.f32 %v481, %v645
  %v678 = vadd.f32 %v482, %v646
  %v679 = vadd.f32 %v483, %v647
  %v680 = vadd.f32 %v484, %v648
  %v681 = vadd.f32 %v485, %v649
  %v682 = vadd.f32 %v486, %v650
  %v683 = vadd.f32 %v487, %v651
  %v684 = vadd.f32 %v488, %v652
  %v685 = vadd.f32 %v489, %v653
  %v686 = vadd.f32 %v490, %v654
  %v687 = vadd.f32 %v491, %v655
  %v688 = vadd.f32 %v492, %v656
  %v689 = vadd.f32 %v493, %v657
  %v690 = vadd.f32 %v494, %v658
  %v691 = vadd.f32 %v495, %v659
  %v692 = vadd.f32 %v496, %v660
  %v693 = vadd.f32 %v497, %v661
  %v694 = vadd.f32 %v498, %v662
  %v696 = vlaneseq
  %v697 = vshrl.u32 %v696, 7
  %v698 = vsub.s32 0, %v697
  %v699 = vrot.slane %v40, %v698
  %v701 = vadd.f32 %v663, %v699
  %v702 = vadd.f32 %v664, %v699
  %v703 = vadd.f32 %v665, %v699
  %v704 = vadd.f32 %v666, %v699
  %v705 = vadd.f32 %v667, %v699
  %v706 = vadd.f32 %v668, %v699
  %v707 = vadd.f32 %v669, %v699
  %v708 = vadd.f32 %v670, %v699
  %v709 = vadd.f32 %v671, %v699
  %v710 = vadd.f32 %v672, %v699
  %v711 = vadd.f32 %v673, %v699
  %v712 = vadd.f32 %v674, %v699
  %v713 = vadd.f32 %v675, %v699
  %v714 = vadd.f32 %v676, %v699
  %v715 = vadd.f32 %v677, %v699
  %v716 = vadd.f32 %v678, %v699
  %v717 = vadd.f32 %v679, %v699
  %v718 = vadd.f32 %v680, %v699
  %v719 = vadd.f32 %v681, %v699
  %v720 = vadd.f32 %v682, %v699
  %v721 = vadd.f32 %v683, %v699
  %v722 = vadd.f32 %v684, %v699
  %v723 = vadd.f32 %v685, %v699
  %v724 = vadd.f32 %v686, %v699
  %v725 = vadd.f32 %v687, %v699
  %v726 = vadd.f32 %v688, %v699
  %v727 = vadd.f32 %v689, %v699
  %v728 = vadd.f32 %v690, %v699
  %v729 = vadd.f32 %v691, %v699
  %v730 = vadd.f32 %v692, %v699
  %v731 = vadd.f32 %v693, %v699
  %v732 = vadd.f32 %v694, %v699
  %v733 = vmax.f32 %v701, 0.0
  %v734 = vmax.f32 %v702, 0.0
  %v735 = vmax.f32 %v703, 0.0
  %v736 = vmax.f32 %v704, 0.0
  %v737 = vmax.f32 %v705, 0.0
  %v738 = vmax.f32 %v706, 0.0
  %v739 = vmax.f32 %v707, 0.0
  %v740 = vmax.f32 %v708, 0.0
  %v741 = vmax.f32 %v709, 0.0
  %v742 = vmax.f32 %v710, 0.0
  %v743 = vmax.f32 %v711, 0.0
  %v744 = vmax.f32 %v712, 0.0
  %v745 = vmax.f32 %v713, 0.0
  %v746 = vmax.f32 %v714, 0.0
  %v747 = vmax.f32 %v715, 0.0
  %v748 = vmax.f32 %v716, 0.0
  %v749 = vmax.f32 %v717, 0.0
  %v750 = vmax.f32 %v718, 0.0
  %v751 = vmax.f32 %v719, 0.0
  %v752 = vmax.f32 %v720, 0.0
  %v753 = vmax.f32 %v721, 0.0
  %v754 = vmax.f32 %v722, 0.0
  %v755 = vmax.f32 %v723, 0.0
  %v756 = vmax.f32 %v724, 0.0
  %v757 = vmax.f32 %v725, 0.0
  %v758 = vmax.f32 %v726, 0.0
  %v759 = vmax.f32 %v727, 0.0
  %v760 = vmax.f32 %v728, 0.0
  %v761 = vmax.f32 %v729, 0.0
  %v762 = vmax.f32 %v730, 0.0
  %v763 = vmax.f32 %v731, 0.0
  %v764 = vmax.f32 %v732, 0.0
  %v765 = vadd.f32 %v733, 0.0
  %v766 = vadd.f32 %v734, 0.0
  %v767 = vadd.f32 %v735, 0.0
  %v768 = vadd.f32 %v736, 0.0
  %v769 = vadd.f32 %v737, 0.0
  %v770 = vadd.f32 %v738, 0.0
  %v771 = vadd.f32 %v739, 0.0
  %v772 = vadd.f32 %v740, 0.0
  %v773 = vadd.f32 %v741, 0.0
  %v774 = vadd.f32 %v742, 0.0
  %v775 = vadd.f32 %v743, 0.0
  %v776 = vadd.f32 %v744, 0.0
  %v777 = vadd.f32 %v745, 0.0
  %v778 = vadd.f32 %v746, 0.0
  %v779 = vadd.f32 %v747, 0.0
  %v780 = vadd.f32 %v748, 0.0
  %v781 = vadd.f32 %v749, 0.0
  %v782 = vadd.f32 %v750, 0.0
  %v783 = vadd.f32 %v751, 0.0
  %v784 = vadd.f32 %v752, 0.0
  %v785 = vadd.f32 %v753, 0.0
  %v786 = vadd.f32 %v754, 0.0
  %v787 = vadd.f32 %v755, 0.0
  %v788 = vadd.f32 %v756, 0.0
  %v789 = vadd.f32 %v757, 0.0
  %v790 = vadd.f32 %v758, 0.0
  %v791 = vadd.f32 %v759, 0.0
  %v792 = vadd.f32 %v760, 0.0
  %v793 = vadd.f32 %v761, 0.0
  %v794 = vadd.f32 %v762, 0.0
  %v795 = vadd.f32 %v763, 0.0
  %v796 = vadd.f32 %v764, 0.0
  %797 = vset.pattern.permute.xlu0 3
  %798 = vperm.xlu0 %797, %v75
  %v799 = vpop.permute.xlu0 %798
  %801 = vset.pattern.permute.xlu0 3
  %802 = vperm.xlu0 %801, %v76
  %v803 = vpop.permute.xlu0 %802
  %805 = vset.pattern.permute.xlu0 3
  %806 = vperm.xlu0 %805, %v77
  %v807 = vpop.permute.xlu0 %806
  %809 = vset.pattern.permute.xlu0 3
  %810 = vperm.xlu0 %809, %v78
  %v811 = vpop.permute.xlu0 %810
  %813 = vset.pattern.permute.xlu0 3
  %814 = vperm.xlu0 %813, %v79
  %v815 = vpop.permute.xlu0 %814
  %817 = vset.pattern.permute.xlu0 3
  %818 = vperm.xlu0 %817, %v80
  %v819 = vpop.permute.xlu0 %818
  %821 = vset.pattern.permute.xlu0 3
  %822 = vperm.xlu0 %821, %v81
  %v823 = vpop.permute.xlu0 %822
  %825 = vset.pattern.permute.xlu0 3
  %826 = vperm.xlu0 %825, %v82
  %v827 = vpop.permute.xlu0 %826
  %829 = vset.pattern.permute.xlu0 3
  %830 = vperm.xlu0 %829, %v83
  %v831 = vpop.permute.xlu0 %830
  %833 = vset.pattern.permute.xlu0 3
  %834 = vperm.xlu0 %833, %v84
  %v835 = vpop.permute.xlu0 %834
  %837 = vset.pattern.permute.xlu0 3
  %838 = vperm.xlu0 %837, %v85
  %v839 = vpop.permute.xlu0 %838
  %841 = vset.pattern.permute.xlu0 3
  %842 = vperm.xlu0 %841, %v86
  %v843 = vpop.permute.xlu0 %842
  %845 = vset.pattern.permute.xlu0 3
  %846 = vperm.xlu0 %845, %v87
  %v847 = vpop.permute.xlu0 %846
  %849 = vset.pattern.permute.xlu0 3
  %850 = vperm.xlu0 %849, %v88
  %v851 = vpop.permute.xlu0 %850
  %853 = vset.pattern.permute.xlu0 3
  %854 = vperm.xlu0 %853, %v89
  %v855 = vpop.permute.xlu0 %854
  %857 = vset.pattern.permute.xlu0 3
  %858 = vperm.xlu0 %857, %v90
  %v859 = vpop.permute.xlu0 %858
  %861 = vset.pattern.permute.xlu0 3
  %862 = vperm.xlu0 %861, %v91
  %v863 = vpop.permute.xlu0 %862
  %865 = vset.pattern.permute.xlu0 3
  %866 = vperm.xlu0 %865, %v92
  %v867 = vpop.permute.xlu0 %866
  %869 = vset.pattern.permute.xlu0 3
  %870 = vperm.xlu0 %869, %v93
  %v871 = vpop.permute.xlu0 %870
  %873 = vset.pattern.permute.xlu0 3
  %874 = vperm.xlu0 %873, %v94
  %v875 = vpop.permute.xlu0 %874
  %877 = vset.pattern.permute.xlu0 3
  %878 = vperm.xlu0 %877, %v95
  %v879 = vpop.permute.xlu0 %878
  %881 = vset.pattern.permute.xlu0 3
  %882 = vperm.xlu0 %881, %v96
  %v883 = vpop.permute.xlu0 %882
  %885 = vset.pattern.permute.xlu0 3
  %886 = vperm.xlu0 %885, %v97
  %v887 = vpop.permute.xlu0 %886
  %889 = vset.pattern.permute.xlu0 3
  %890 = vperm.xlu0 %889, %v98
  %v891 = vpop.permute.xlu0 %890
  %893 = vset.pattern.permute.xlu0 3
  %894 = vperm.xlu0 %893, %v99
  %v895 = vpop.permute.xlu0 %894
  %897 = vset.pattern.permute.xlu0 3
  %898 = vperm.xlu0 %897, %v100
  %v899 = vpop.permute.xlu0 %898
  %901 = vset.pattern.permute.xlu0 3
  %902 = vperm.xlu0 %901, %v101
  %v903 = vpop.permute.xlu0 %902
  %905 = vset.pattern.permute.xlu0 3
  %906 = vperm.xlu0 %905, %v102
  %v907 = vpop.permute.xlu0 %906
  %909 = vset.pattern.permute.xlu0 3
  %910 = vperm.xlu0 %909, %v103
  %v911 = vpop.permute.xlu0 %910
  %913 = vset.pattern.permute.xlu0 3
  %914 = vperm.xlu0 %913, %v104
  %v915 = vpop.permute.xlu0 %914
  %917 = vset.pattern.permute.xlu0 3
  %918 = vperm.xlu0 %917, %v105
  %v919 = vpop.permute.xlu0 %918
  %921 = vset.pattern.permute.xlu0 3
  %922 = vperm.xlu0 %921, %v106
  %v923 = vpop.permute.xlu0 %922
  %v925 = vmul.f32 %v799, %v270
  %v926 = vmul.f32 %v803, %v270
  %v927 = vmul.f32 %v807, %v270
  %v928 = vmul.f32 %v811, %v270
  %v929 = vmul.f32 %v815, %v270
  %v930 = vmul.f32 %v819, %v270
  %v931 = vmul.f32 %v823, %v270
  %v932 = vmul.f32 %v827, %v270
  %v933 = vmul.f32 %v831, %v270
  %v934 = vmul.f32 %v835, %v270
  %v935 = vmul.f32 %v839, %v270
  %v936 = vmul.f32 %v843, %v270
  %v937 = vmul.f32 %v847, %v270
  %v938 = vmul.f32 %v851, %v270
  %v939 = vmul.f32 %v855, %v270
  %v940 = vmul.f32 %v859, %v270
  %v941 = vmul.f32 %v863, %v270
  %v942 = vmul.f32 %v867, %v270
  %v943 = vmul.f32 %v871, %v270
  %v944 = vmul.f32 %v875, %v270
  %v945 = vmul.f32 %v879, %v270
  %v946 = vmul.f32 %v883, %v270
  %v947 = vmul.f32 %v887, %v270
  %v948 = vmul.f32 %v891, %v270
  %v949 = vmul.f32 %v895, %v270
  %v950 = vmul.f32 %v899, %v270
  %v951 = vmul.f32 %v903, %v270
  %v952 = vmul.f32 %v907, %v270
  %v953 = vmul.f32 %v911, %v270
  %v954 = vmul.f32 %v915, %v270
  %v955 = vmul.f32 %v919, %v270
  %v956 = vmul.f32 %v923, %v270
  %957 = vset.pattern.permute.xlu0 4
  %958 = vperm.xlu0 %957, %v75
  %v959 = vpop.permute.xlu0 %958
  %961 = vset.pattern.permute.xlu0 4
  %962 = vperm.xlu0 %961, %v76
  %v963 = vpop.permute.xlu0 %962
  %965 = vset.pattern.permute.xlu0 4
  %966 = vperm.xlu0 %965, %v77
  %v967 = vpop.permute.xlu0 %966
  %969 = vset.pattern.permute.xlu0 4
  %970 = vperm.xlu0 %969, %v78
  %v971 = vpop.permute.xlu0 %970
  %973 = vset.pattern.permute.xlu0 4
  %974 = vperm.xlu0 %973, %v79
  %v975 = vpop.permute.xlu0 %974
  %977 = vset.pattern.permute.xlu0 4
  %978 = vperm.xlu0 %977, %v80
  %v979 = vpop.permute.xlu0 %978
  %981 = vset.pattern.permute.xlu0 4
  %982 = vperm.xlu0 %981, %v81
  %v983 = vpop.permute.xlu0 %982
  %985 = vset.pattern.permute.xlu0 4
  %986 = vperm.xlu0 %985, %v82
  %v987 = vpop.permute.xlu0 %986
  %989 = vset.pattern.permute.xlu0 4
  %990 = vperm.xlu0 %989, %v83
  %v991 = vpop.permute.xlu0 %990
  %993 = vset.pattern.permute.xlu0 4
  %994 = vperm.xlu0 %993, %v84
  %v995 = vpop.permute.xlu0 %994
  %997 = vset.pattern.permute.xlu0 4
  %998 = vperm.xlu0 %997, %v85
  %v999 = vpop.permute.xlu0 %998
  %1001 = vset.pattern.permute.xlu0 4
  %1002 = vperm.xlu0 %1001, %v86
  %v1003 = vpop.permute.xlu0 %1002
  %1005 = vset.pattern.permute.xlu0 4
  %1006 = vperm.xlu0 %1005, %v87
  %v1007 = vpop.permute.xlu0 %1006
  %1009 = vset.pattern.permute.xlu0 4
  %1010 = vperm.xlu0 %1009, %v88
  %v1011 = vpop.permute.xlu0 %1010
  %1013 = vset.pattern.permute.xlu0 4
  %1014 = vperm.xlu0 %1013, %v89
  %v1015 = vpop.permute.xlu0 %1014
  %1017 = vset.pattern.permute.xlu0 4
  %1018 = vperm.xlu0 %1017, %v90
  %v1019 = vpop.permute.xlu0 %1018
  %1021 = vset.pattern.permute.xlu0 4
  %1022 = vperm.xlu0 %1021, %v91
  %v1023 = vpop.permute.xlu0 %1022
  %1025 = vset.pattern.permute.xlu0 4
  %1026 = vperm.xlu0 %1025, %v92
  %v1027 = vpop.permute.xlu0 %1026
  %1029 = vset.pattern.permute.xlu0 4
  %1030 = vperm.xlu0 %1029, %v93
  %v1031 = vpop.permute.xlu0 %1030
  %1033 = vset.pattern.permute.xlu0 4
  %1034 = vperm.xlu0 %1033, %v94
  %v1035 = vpop.permute.xlu0 %1034
  %1037 = vset.pattern.permute.xlu0 4
  %1038 = vperm.xlu0 %1037, %v95
  %v1039 = vpop.permute.xlu0 %1038
  %1041 = vset.pattern.permute.xlu0 4
  %1042 = vperm.xlu0 %1041, %v96
  %v1043 = vpop.permute.xlu0 %1042
  %1045 = vset.pattern.permute.xlu0 4
  %1046 = vperm.xlu0 %1045, %v97
  %v1047 = vpop.permute.xlu0 %1046
  %1049 = vset.pattern.permute.xlu0 4
  %1050 = vperm.xlu0 %1049, %v98
  %v1051 = vpop.permute.xlu0 %1050
  %1053 = vset.pattern.permute.xlu0 4
  %1054 = vperm.xlu0 %1053, %v99
  %v1055 = vpop.permute.xlu0 %1054
  %1057 = vset.pattern.permute.xlu0 4
  %1058 = vperm.xlu0 %1057, %v100
  %v1059 = vpop.permute.xlu0 %1058
  %1061 = vset.pattern.permute.xlu0 4
  %1062 = vperm.xlu0 %1061, %v101
  %v1063 = vpop.permute.xlu0 %1062
  %1065 = vset.pattern.permute.xlu0 4
  %1066 = vperm.xlu0 %1065, %v102
  %v1067 = vpop.permute.xlu0 %1066
  %1069 = vset.pattern.permute.xlu0 4
  %1070 = vperm.xlu0 %1069, %v103
  %v1071 = vpop.permute.xlu0 %1070
  %1073 = vset.pattern.permute.xlu0 4
  %1074 = vperm.xlu0 %1073, %v104
  %v1075 = vpop.permute.xlu0 %1074
  %1077 = vset.pattern.permute.xlu0 4
  %1078 = vperm.xlu0 %1077, %v105
  %v1079 = vpop.permute.xlu0 %1078
  %1081 = vset.pattern.permute.xlu0 4
  %1082 = vperm.xlu0 %1081, %v106
  %v1083 = vpop.permute.xlu0 %1082
  %v1085 = vmul.f32 %v959, %v434
  %v1086 = vmul.f32 %v963, %v434
  %v1087 = vmul.f32 %v967, %v434
  %v1088 = vmul.f32 %v971, %v434
  %v1089 = vmul.f32 %v975, %v434
  %v1090 = vmul.f32 %v979, %v434
  %v1091 = vmul.f32 %v983, %v434
  %v1092 = vmul.f32 %v987, %v434
  %v1093 = vmul.f32 %v991, %v434
  %v1094 = vmul.f32 %v995, %v434
  %v1095 = vmul.f32 %v999, %v434
  %v1096 = vmul.f32 %v1003, %v434
  %v1097 = vmul.f32 %v1007, %v434
  %v1098 = vmul.f32 %v1011, %v434
  %v1099 = vmul.f32 %v1015, %v434
  %v1100 = vmul.f32 %v1019, %v434
  %v1101 = vmul.f32 %v1023, %v434
  %v1102 = vmul.f32 %v1027, %v434
  %v1103 = vmul.f32 %v1031, %v434
  %v1104 = vmul.f32 %v1035, %v434
  %v1105 = vmul.f32 %v1039, %v434
  %v1106 = vmul.f32 %v1043, %v434
  %v1107 = vmul.f32 %v1047, %v434
  %v1108 = vmul.f32 %v1051, %v434
  %v1109 = vmul.f32 %v1055, %v434
  %v1110 = vmul.f32 %v1059, %v434
  %v1111 = vmul.f32 %v1063, %v434
  %v1112 = vmul.f32 %v1067, %v434
  %v1113 = vmul.f32 %v1071, %v434
  %v1114 = vmul.f32 %v1075, %v434
  %v1115 = vmul.f32 %v1079, %v434
  %v1116 = vmul.f32 %v1083, %v434
  %v1117 = vadd.f32 %v925, %v1085
  %v1118 = vadd.f32 %v926, %v1086
  %v1119 = vadd.f32 %v927, %v1087
  %v1120 = vadd.f32 %v928, %v1088
  %v1121 = vadd.f32 %v929, %v1089
  %v1122 = vadd.f32 %v930, %v1090
  %v1123 = vadd.f32 %v931, %v1091
  %v1124 = vadd.f32 %v932, %v1092
  %v1125 = vadd.f32 %v933, %v1093
  %v1126 = vadd.f32 %v934, %v1094
  %v1127 = vadd.f32 %v935, %v1095
  %v1128 = vadd.f32 %v936, %v1096
  %v1129 = vadd.f32 %v937, %v1097
  %v1130 = vadd.f32 %v938, %v1098
  %v1131 = vadd.f32 %v939, %v1099
  %v1132 = vadd.f32 %v940, %v1100
  %v1133 = vadd.f32 %v941, %v1101
  %v1134 = vadd.f32 %v942, %v1102
  %v1135 = vadd.f32 %v943, %v1103
  %v1136 = vadd.f32 %v944, %v1104
  %v1137 = vadd.f32 %v945, %v1105
  %v1138 = vadd.f32 %v946, %v1106
  %v1139 = vadd.f32 %v947, %v1107
  %v1140 = vadd.f32 %v948, %v1108
  %v1141 = vadd.f32 %v949, %v1109
  %v1142 = vadd.f32 %v950, %v1110
  %v1143 = vadd.f32 %v951, %v1111
  %v1144 = vadd.f32 %v952, %v1112
  %v1145 = vadd.f32 %v953, %v1113
  %v1146 = vadd.f32 %v954, %v1114
  %v1147 = vadd.f32 %v955, %v1115
  %v1148 = vadd.f32 %v956, %v1116
  %1149 = vset.pattern.permute.xlu0 5
  %1150 = vperm.xlu0 %1149, %v75
  %v1151 = vpop.permute.xlu0 %1150
  %1153 = vset.pattern.permute.xlu0 5
  %1154 = vperm.xlu0 %1153, %v76
  %v1155 = vpop.permute.xlu0 %1154
  %1157 = vset.pattern.permute.xlu0 5
  %1158 = vperm.xlu0 %1157, %v77
  %v1159 = vpop.permute.xlu0 %1158
  %1161 = vset.pattern.permute.xlu0 5
  %1162 = vperm.xlu0 %1161, %v78
  %v1163 = vpop.permute.xlu0 %1162
  %1165 = vset.pattern.permute.xlu0 5
  %1166 = vperm.xlu0 %1165, %v79
  %v1167 = vpop.permute.xlu0 %1166
  %1169 = vset.pattern.permute.xlu0 5
  %1170 = vperm.xlu0 %1169, %v80
  %v1171 = vpop.permute.xlu0 %1170
  %1173 = vset.pattern.permute.xlu0 5
  %1174 = vperm.xlu0 %1173, %v81
  %v1175 = vpop.permute.xlu0 %1174
  %1177 = vset.pattern.permute.xlu0 5
  %1178 = vperm.xlu0 %1177, %v82
  %v1179 = vpop.permute.xlu0 %1178
  %1181 = vset.pattern.permute.xlu0 5
  %1182 = vperm.xlu0 %1181, %v83
  %v1183 = vpop.permute.xlu0 %1182
  %1185 = vset.pattern.permute.xlu0 5
  %1186 = vperm.xlu0 %1185, %v84
  %v1187 = vpop.permute.xlu0 %1186
  %1189 = vset.pattern.permute.xlu0 5
  %1190 = vperm.xlu0 %1189, %v85
  %v1191 = vpop.permute.xlu0 %1190
  %1193 = vset.pattern.permute.xlu0 5
  %1194 = vperm.xlu0 %1193, %v86
  %v1195 = vpop.permute.xlu0 %1194
  %1197 = vset.pattern.permute.xlu0 5
  %1198 = vperm.xlu0 %1197, %v87
  %v1199 = vpop.permute.xlu0 %1198
  %1201 = vset.pattern.permute.xlu0 5
  %1202 = vperm.xlu0 %1201, %v88
  %v1203 = vpop.permute.xlu0 %1202
  %1205 = vset.pattern.permute.xlu0 5
  %1206 = vperm.xlu0 %1205, %v89
  %v1207 = vpop.permute.xlu0 %1206
  %1209 = vset.pattern.permute.xlu0 5
  %1210 = vperm.xlu0 %1209, %v90
  %v1211 = vpop.permute.xlu0 %1210
  %1213 = vset.pattern.permute.xlu0 5
  %1214 = vperm.xlu0 %1213, %v91
  %v1215 = vpop.permute.xlu0 %1214
  %1217 = vset.pattern.permute.xlu0 5
  %1218 = vperm.xlu0 %1217, %v92
  %v1219 = vpop.permute.xlu0 %1218
  %1221 = vset.pattern.permute.xlu0 5
  %1222 = vperm.xlu0 %1221, %v93
  %v1223 = vpop.permute.xlu0 %1222
  %1225 = vset.pattern.permute.xlu0 5
  %1226 = vperm.xlu0 %1225, %v94
  %v1227 = vpop.permute.xlu0 %1226
  %1229 = vset.pattern.permute.xlu0 5
  %1230 = vperm.xlu0 %1229, %v95
  %v1231 = vpop.permute.xlu0 %1230
  %1233 = vset.pattern.permute.xlu0 5
  %1234 = vperm.xlu0 %1233, %v96
  %v1235 = vpop.permute.xlu0 %1234
  %1237 = vset.pattern.permute.xlu0 5
  %1238 = vperm.xlu0 %1237, %v97
  %v1239 = vpop.permute.xlu0 %1238
  %1241 = vset.pattern.permute.xlu0 5
  %1242 = vperm.xlu0 %1241, %v98
  %v1243 = vpop.permute.xlu0 %1242
  %1245 = vset.pattern.permute.xlu0 5
  %1246 = vperm.xlu0 %1245, %v99
  %v1247 = vpop.permute.xlu0 %1246
  %1249 = vset.pattern.permute.xlu0 5
  %1250 = vperm.xlu0 %1249, %v100
  %v1251 = vpop.permute.xlu0 %1250
  %1253 = vset.pattern.permute.xlu0 5
  %1254 = vperm.xlu0 %1253, %v101
  %v1255 = vpop.permute.xlu0 %1254
  %1257 = vset.pattern.permute.xlu0 5
  %1258 = vperm.xlu0 %1257, %v102
  %v1259 = vpop.permute.xlu0 %1258
  %1261 = vset.pattern.permute.xlu0 5
  %1262 = vperm.xlu0 %1261, %v103
  %v1263 = vpop.permute.xlu0 %1262
  %1265 = vset.pattern.permute.xlu0 5
  %1266 = vperm.xlu0 %1265, %v104
  %v1267 = vpop.permute.xlu0 %1266
  %1269 = vset.pattern.permute.xlu0 5
  %1270 = vperm.xlu0 %1269, %v105
  %v1271 = vpop.permute.xlu0 %1270
  %1273 = vset.pattern.permute.xlu0 5
  %1274 = vperm.xlu0 %1273, %v106
  %v1275 = vpop.permute.xlu0 %1274
  %v1277 = vmul.f32 %v1151, %v630
  %v1278 = vmul.f32 %v1155, %v630
  %v1279 = vmul.f32 %v1159, %v630
  %v1280 = vmul.f32 %v1163, %v630
  %v1281 = vmul.f32 %v1167, %v630
  %v1282 = vmul.f32 %v1171, %v630
  %v1283 = vmul.f32 %v1175, %v630
  %v1284 = vmul.f32 %v1179, %v630
  %v1285 = vmul.f32 %v1183, %v630
  %v1286 = vmul.f32 %v1187, %v630
  %v1287 = vmul.f32 %v1191, %v630
  %v1288 = vmul.f32 %v1195, %v630
  %v1289 = vmul.f32 %v1199, %v630
  %v1290 = vmul.f32 %v1203, %v630
  %v1291 = vmul.f32 %v1207, %v630
  %v1292 = vmul.f32 %v1211, %v630
  %v1293 = vmul.f32 %v1215, %v630
  %v1294 = vmul.f32 %v1219, %v630
  %v1295 = vmul.f32 %v1223, %v630
  %v1296 = vmul.f32 %v1227, %v630
  %v1297 = vmul.f32 %v1231, %v630
  %v1298 = vmul.f32 %v1235, %v630
  %v1299 = vmul.f32 %v1239, %v630
  %v1300 = vmul.f32 %v1243, %v630
  %v1301 = vmul.f32 %v1247, %v630
  %v1302 = vmul.f32 %v1251, %v630
  %v1303 = vmul.f32 %v1255, %v630
  %v1304 = vmul.f32 %v1259, %v630
  %v1305 = vmul.f32 %v1263, %v630
  %v1306 = vmul.f32 %v1267, %v630
  %v1307 = vmul.f32 %v1271, %v630
  %v1308 = vmul.f32 %v1275, %v630
  %v1309 = vadd.f32 %v1117, %v1277
  %v1310 = vadd.f32 %v1118, %v1278
  %v1311 = vadd.f32 %v1119, %v1279
  %v1312 = vadd.f32 %v1120, %v1280
  %v1313 = vadd.f32 %v1121, %v1281
  %v1314 = vadd.f32 %v1122, %v1282
  %v1315 = vadd.f32 %v1123, %v1283
  %v1316 = vadd.f32 %v1124, %v1284
  %v1317 = vadd.f32 %v1125, %v1285
  %v1318 = vadd.f32 %v1126, %v1286
  %v1319 = vadd.f32 %v1127, %v1287
  %v1320 = vadd.f32 %v1128, %v1288
  %v1321 = vadd.f32 %v1129, %v1289
  %v1322 = vadd.f32 %v1130, %v1290
  %v1323 = vadd.f32 %v1131, %v1291
  %v1324 = vadd.f32 %v1132, %v1292
  %v1325 = vadd.f32 %v1133, %v1293
  %v1326 = vadd.f32 %v1134, %v1294
  %v1327 = vadd.f32 %v1135, %v1295
  %v1328 = vadd.f32 %v1136, %v1296
  %v1329 = vadd.f32 %v1137, %v1297
  %v1330 = vadd.f32 %v1138, %v1298
  %v1331 = vadd.f32 %v1139, %v1299
  %v1332 = vadd.f32 %v1140, %v1300
  %v1333 = vadd.f32 %v1141, %v1301
  %v1334 = vadd.f32 %v1142, %v1302
  %v1335 = vadd.f32 %v1143, %v1303
  %v1336 = vadd.f32 %v1144, %v1304
  %v1337 = vadd.f32 %v1145, %v1305
  %v1338 = vadd.f32 %v1146, %v1306
  %v1339 = vadd.f32 %v1147, %v1307
  %v1340 = vadd.f32 %v1148, %v1308
  %v1341 = vadd.f32 %v1309, %v699
  %v1342 = vadd.f32 %v1310, %v699
  %v1343 = vadd.f32 %v1311, %v699
  %v1344 = vadd.f32 %v1312, %v699
  %v1345 = vadd.f32 %v1313, %v699
  %v1346 = vadd.f32 %v1314, %v699
  %v1347 = vadd.f32 %v1315, %v699
  %v1348 = vadd.f32 %v1316, %v699
  %v1349 = vadd.f32 %v1317, %v699
  %v1350 = vadd.f32 %v1318, %v699
  %v1351 = vadd.f32 %v1319, %v699
  %v1352 = vadd.f32 %v1320, %v699
  %v1353 = vadd.f32 %v1321, %v699
  %v1354 = vadd.f32 %v1322, %v699
  %v1355 = vadd.f32 %v1323, %v699
  %v1356 = vadd.f32 %v1324, %v699
  %v1357 = vadd.f32 %v1325, %v699
  %v1358 = vadd.f32 %v1326, %v699
  %v1359 = vadd.f32 %v1327, %v699
  %v1360 = vadd.f32 %v1328, %v699
  %v1361 = vadd.f32 %v1329, %v699
  %v1362 = vadd.f32 %v1330, %v699
  %v1363 = vadd.f32 %v1331, %v699
  %v1364 = vadd.f32 %v1332, %v699
  %v1365 = vadd.f32 %v1333, %v699
  %v1366 = vadd.f32 %v1334, %v699
  %v1367 = vadd.f32 %v1335, %v699
  %v1368 = vadd.f32 %v1336, %v699
  %v1369 = vadd.f32 %v1337, %v699
  %v1370 = vadd.f32 %v1338, %v699
  %v1371 = vadd.f32 %v1339, %v699
  %v1372 = vadd.f32 %v1340, %v699
  %v1373 = vmax.f32 %v1341, 0.0
  %v1374 = vmax.f32 %v1342, 0.0
  %v1375 = vmax.f32 %v1343, 0.0
  %v1376 = vmax.f32 %v1344, 0.0
  %v1377 = vmax.f32 %v1345, 0.0
  %v1378 = vmax.f32 %v1346, 0.0
  %v1379 = vmax.f32 %v1347, 0.0
  %v1380 = vmax.f32 %v1348, 0.0
  %v1381 = vmax.f32 %v1349, 0.0
  %v1382 = vmax.f32 %v1350, 0.0
  %v1383 = vmax.f32 %v1351, 0.0
  %v1384 = vmax.f32 %v1352, 0.0
  %v1385 = vmax.f32 %v1353, 0.0
  %v1386 = vmax.f32 %v1354, 0.0
  %v1387 = vmax.f32 %v1355, 0.0
  %v1388 = vmax.f32 %v1356, 0.0
  %v1389 = vmax.f32 %v1357, 0.0
  %v1390 = vmax.f32 %v1358, 0.0
  %v1391 = vmax.f32 %v1359, 0.0
  %v1392 = vmax.f32 %v1360, 0.0
  %v1393 = vmax.f32 %v1361, 0.0
  %v1394 = vmax.f32 %v1362, 0.0
  %v1395 = vmax.f32 %v1363, 0.0
  %v1396 = vmax.f32 %v1364, 0.0
  %v1397 = vmax.f32 %v1365, 0.0
  %v1398 = vmax.f32 %v1366, 0.0
  %v1399 = vmax.f32 %v1367, 0.0
  %v1400 = vmax.f32 %v1368, 0.0
  %v1401 = vmax.f32 %v1369, 0.0
  %v1402 = vmax.f32 %v1370, 0.0
  %v1403 = vmax.f32 %v1371, 0.0
  %v1404 = vmax.f32 %v1372, 0.0
  %v1405 = vadd.f32 %v765, %v1373
  %v1406 = vadd.f32 %v766, %v1374
  %v1407 = vadd.f32 %v767, %v1375
  %v1408 = vadd.f32 %v768, %v1376
  %v1409 = vadd.f32 %v769, %v1377
  %v1410 = vadd.f32 %v770, %v1378
  %v1411 = vadd.f32 %v771, %v1379
  %v1412 = vadd.f32 %v772, %v1380
  %v1413 = vadd.f32 %v773, %v1381
  %v1414 = vadd.f32 %v774, %v1382
  %v1415 = vadd.f32 %v775, %v1383
  %v1416 = vadd.f32 %v776, %v1384
  %v1417 = vadd.f32 %v777, %v1385
  %v1418 = vadd.f32 %v778, %v1386
  %v1419 = vadd.f32 %v779, %v1387
  %v1420 = vadd.f32 %v780, %v1388
  %v1421 = vadd.f32 %v781, %v1389
  %v1422 = vadd.f32 %v782, %v1390
  %v1423 = vadd.f32 %v783, %v1391
  %v1424 = vadd.f32 %v784, %v1392
  %v1425 = vadd.f32 %v785, %v1393
  %v1426 = vadd.f32 %v786, %v1394
  %v1427 = vadd.f32 %v787, %v1395
  %v1428 = vadd.f32 %v788, %v1396
  %v1429 = vadd.f32 %v789, %v1397
  %v1430 = vadd.f32 %v790, %v1398
  %v1431 = vadd.f32 %v791, %v1399
  %v1432 = vadd.f32 %v792, %v1400
  %v1433 = vadd.f32 %v793, %v1401
  %v1434 = vadd.f32 %v794, %v1402
  %v1435 = vadd.f32 %v795, %v1403
  %v1436 = vadd.f32 %v796, %v1404
  %v1437 = vpack.c.bf16 %v1406, %v1405
  %v1438 = vpack.c.bf16 %v1408, %v1407
  %v1439 = vpack.c.bf16 %v1410, %v1409
  %v1440 = vpack.c.bf16 %v1412, %v1411
  %v1441 = vpack.c.bf16 %v1414, %v1413
  %v1442 = vpack.c.bf16 %v1416, %v1415
  %v1443 = vpack.c.bf16 %v1418, %v1417
  %v1444 = vpack.c.bf16 %v1420, %v1419
  %v1445 = vpack.c.bf16 %v1422, %v1421
  %v1446 = vpack.c.bf16 %v1424, %v1423
  %v1447 = vpack.c.bf16 %v1426, %v1425
  %v1448 = vpack.c.bf16 %v1428, %v1427
  %v1449 = vpack.c.bf16 %v1430, %v1429
  %v1450 = vpack.c.bf16 %v1432, %v1431
  %v1451 = vpack.c.bf16 %v1434, %v1433
  %v1452 = vpack.c.bf16 %v1436, %v1435
  %v1453 = vld [vmem:[%s3] sm:$0xf]
  %v1454 = vld [vmem:[%s3 + $0x4] sm:$0xf]
  %v1455 = vld [vmem:[%s3 + $0x8] sm:$0xf]
  %v1456 = vld [vmem:[%s3 + $0xc] sm:$0xf]
  %v1457 = vld [vmem:[%s4] sm:$0x1]
  %v1459 = vlaneseq
  %v1460 = vshrl.u32 %v1459, 7
  %v1461 = vsub.s32 0, %v1460
  %v1462 = vrot.slane %v1457, %v1461
  %v1468 = vunpack.c.l.b16 %v1453
  %v1469 = vunpack.c.l.b16 %v1454
  %v1470 = vunpack.c.l.b16 %v1455
  %v1471 = vunpack.c.l.b16 %v1456
  %v1472 = vpack.c.b16 %v1469, %v1468
  %v1473 = vpack.c.b16 %v1471, %v1470
  %vm1476 = vcmask 261120
  %v1478 = vsel %vm1476, %v1437, 0
  %v1481 = vsel %vm1476, %v1438, 0
  %v1484 = vsel %vm1476, %v1439, 0
  %v1487 = vsel %vm1476, %v1440, 0
  %v1490 = vsel %vm1476, %v1441, 0
  %v1493 = vsel %vm1476, %v1442, 0
  %v1496 = vsel %vm1476, %v1443, 0
  %v1499 = vsel %vm1476, %v1444, 0
  %v1502 = vsel %vm1476, %v1445, 0
  %v1505 = vsel %vm1476, %v1446, 0
  %v1508 = vsel %vm1476, %v1447, 0
  %v1511 = vsel %vm1476, %v1448, 0
  %v1514 = vsel %vm1476, %v1449, 0
  %v1517 = vsel %vm1476, %v1450, 0
  %v1520 = vsel %vm1476, %v1451, 0
  %v1523 = vsel %vm1476, %v1452, 0
  %1525 = vmatprep.subr.bf16.mxu0 0
  %1526 = vmatpush1.bf16.msra.mxu0 %v1472
  %1527 = vmatprep.subr.bf16.mxu0 0
  %1528 = vmatpush1.bf16.msra.mxu0 %v1473
  %1529 = vmatprep.subr.bf16.mxu0 0
  %1530 = vmatpush1.bf16.msra.mxu0 0
  %1531 = vmatprep.subr.bf16.mxu0 0
  %1532 = vmatpush1.bf16.msra.mxu0 0
  %1533 = vmatprep.subr.bf16.mxu0 0
  %1534 = vmatpush1.bf16.msra.mxu0 0
  %1535 = vmatprep.subr.bf16.mxu0 0
  %1536 = vmatpush1.bf16.msra.mxu0 0
  %1537 = vmatprep.subr.bf16.mxu0 0
  %1538 = vmatpush1.bf16.msra.mxu0 0
  %1539 = vmatprep.subr.bf16.mxu0 0
  %1540 = vmatpush1.bf16.msra.mxu0 0
  %1541 = vmatprep.subr.bf16.mxu0 0
  %1542 = vmatpush1.bf16.msra.mxu0 0
  %1543 = vmatprep.subr.bf16.mxu0 0
  %1544 = vmatpush1.bf16.msra.mxu0 0
  %1545 = vmatprep.subr.bf16.mxu0 0
  %1546 = vmatpush1.bf16.msra.mxu0 0
  %1547 = vmatprep.subr.bf16.mxu0 0
  %1548 = vmatpush1.bf16.msra.mxu0 0
  %1549 = vmatprep.subr.bf16.mxu0 0
  %1550 = vmatpush1.bf16.msra.mxu0 0
  %1551 = vmatprep.subr.bf16.mxu0 0
  %1552 = vmatpush1.bf16.msra.mxu0 0
  %1553 = vmatprep.subr.bf16.mxu0 0
  %1554 = vmatpush1.bf16.msra.mxu0 0
  %1555 = vmatprep.subr.bf16.mxu0 0
  %1556 = vmatpush1.bf16.msra.mxu0 0
  %1557 = vmatprep.mubr.bf16.mxu0 0
  %1558 = vmatmul.mubr.bf16.gmra.mrb[0].mxu0 %v1478
  %v1559 = vpop.f32.mrb[0].mxu0
  %v1560 = vadd.f32 %v1462, %v1559
  %v1561 = vpop.f32.mrb[0].mxu0
  %v1562 = vpop.f32.mrb[0].mxu0
  %v1563 = vadd.f32 %v1462, %v1562
  %v1564 = vpop.f32.mrb[0].mxu0
  %1565 = vmatprep.mubr.bf16.mxu0 0
  %1566 = vmatmul.mubr.bf16.gmra.mrb[0].mxu0 %v1481
  %v1567 = vpop.f32.mrb[0].mxu0
  %v1568 = vadd.f32 %v1462, %v1567
  %v1569 = vpop.f32.mrb[0].mxu0
  %v1570 = vpop.f32.mrb[0].mxu0
  %v1571 = vadd.f32 %v1462, %v1570
  %v1572 = vpop.f32.mrb[0].mxu0
  %1573 = vmatprep.mubr.bf16.mxu0 0
  %1574 = vmatmul.mubr.bf16.gmra.mrb[0].mxu0 %v1484
  %v1575 = vpop.f32.mrb[0].mxu0
  %v1576 = vadd.f32 %v1462, %v1575
  %v1577 = vpop.f32.mrb[0].mxu0
  %v1578 = vpop.f32.mrb[0].mxu0
  %v1579 = vadd.f32 %v1462, %v1578
  %v1580 = vpop.f32.mrb[0].mxu0
  %1581 = vmatprep.mubr.bf16.mxu0 0
  %1582 = vmatmul.mubr.bf16.gmra.mrb[0].mxu0 %v1487
  %v1583 = vpop.f32.mrb[0].mxu0
  %v1584 = vadd.f32 %v1462, %v1583
  %v1585 = vpop.f32.mrb[0].mxu0
  %v1586 = vpop.f32.mrb[0].mxu0
  %v1587 = vadd.f32 %v1462, %v1586
  %v1588 = vpop.f32.mrb[0].mxu0
  %1589 = vmatprep.mubr.bf16.mxu0 0
  %1590 = vmatmul.mubr.bf16.gmra.mrb[0].mxu0 %v1490
  %v1591 = vpop.f32.mrb[0].mxu0
  %v1592 = vadd.f32 %v1462, %v1591
  %v1593 = vpop.f32.mrb[0].mxu0
  %v1594 = vpop.f32.mrb[0].mxu0
  %v1595 = vadd.f32 %v1462, %v1594
  %v1596 = vpop.f32.mrb[0].mxu0
  %1597 = vmatprep.mubr.bf16.mxu0 0
  %1598 = vmatmul.mubr.bf16.gmra.mrb[0].mxu0 %v1493
  %v1599 = vpop.f32.mrb[0].mxu0
  %v1600 = vadd.f32 %v1462, %v1599
  %v1601 = vpop.f32.mrb[0].mxu0
  %v1602 = vpop.f32.mrb[0].mxu0
  %v1603 = vadd.f32 %v1462, %v1602
  %v1604 = vpop.f32.mrb[0].mxu0
  %1605 = vmatprep.mubr.bf16.mxu0 0
  %1606 = vmatmul.mubr.bf16.gmra.mrb[0].mxu0 %v1496
  %v1607 = vpop.f32.mrb[0].mxu0
  %v1608 = vadd.f32 %v1462, %v1607
  %v1609 = vpop.f32.mrb[0].mxu0
  %v1610 = vpop.f32.mrb[0].mxu0
  %v1611 = vadd.f32 %v1462, %v1610
  %v1612 = vpop.f32.mrb[0].mxu0
  %1613 = vmatprep.mubr.bf16.mxu0 0
  %1614 = vmatmul.mubr.bf16.gmra.mrb[0].mxu0 %v1499
  %v1615 = vpop.f32.mrb[0].mxu0
  %v1616 = vadd.f32 %v1462, %v1615
  %v1617 = vpop.f32.mrb[0].mxu0
  %v1618 = vpop.f32.mrb[0].mxu0
  %v1619 = vadd.f32 %v1462, %v1618
  %v1620 = vpop.f32.mrb[0].mxu0
  %1621 = vmatprep.mubr.bf16.mxu0 0
  %1622 = vmatmul.mubr.bf16.gmra.mrb[0].mxu0 %v1502
  %v1623 = vpop.f32.mrb[0].mxu0
  %v1624 = vadd.f32 %v1462, %v1623
  %v1625 = vpop.f32.mrb[0].mxu0
  %v1626 = vpop.f32.mrb[0].mxu0
  %v1627 = vadd.f32 %v1462, %v1626
  %v1628 = vpop.f32.mrb[0].mxu0
  %1629 = vmatprep.mubr.bf16.mxu0 0
  %1630 = vmatmul.mubr.bf16.gmra.mrb[0].mxu0 %v1505
  %v1631 = vpop.f32.mrb[0].mxu0
  %v1632 = vadd.f32 %v1462, %v1631
  %v1633 = vpop.f32.mrb[0].mxu0
  %v1634 = vpop.f32.mrb[0].mxu0
  %v1635 = vadd.f32 %v1462, %v1634
  %v1636 = vpop.f32.mrb[0].mxu0
  %1637 = vmatprep.mubr.bf16.mxu0 0
  %1638 = vmatmul.mubr.bf16.gmra.mrb[0].mxu0 %v1508
  %v1639 = vpop.f32.mrb[0].mxu0
  %v1640 = vadd.f32 %v1462, %v1639
  %v1641 = vpop.f32.mrb[0].mxu0
  %v1642 = vpop.f32.mrb[0].mxu0
  %v1643 = vadd.f32 %v1462, %v1642
  %v1644 = vpop.f32.mrb[0].mxu0
  %1645 = vmatprep.mubr.bf16.mxu0 0
  %1646 = vmatmul.mubr.bf16.gmra.mrb[0].mxu0 %v1511
  %v1647 = vpop.f32.mrb[0].mxu0
  %v1648 = vadd.f32 %v1462, %v1647
  %v1649 = vpop.f32.mrb[0].mxu0
  %v1650 = vpop.f32.mrb[0].mxu0
  %v1651 = vadd.f32 %v1462, %v1650
  %v1652 = vpop.f32.mrb[0].mxu0
  %1653 = vmatprep.mubr.bf16.mxu0 0
  %1654 = vmatmul.mubr.bf16.gmra.mrb[0].mxu0 %v1514
  %v1655 = vpop.f32.mrb[0].mxu0
  %v1656 = vadd.f32 %v1462, %v1655
  %v1657 = vpop.f32.mrb[0].mxu0
  %v1658 = vpop.f32.mrb[0].mxu0
  %v1659 = vadd.f32 %v1462, %v1658
  %v1660 = vpop.f32.mrb[0].mxu0
  %1661 = vmatprep.mubr.bf16.mxu0 0
  %1662 = vmatmul.mubr.bf16.gmra.mrb[0].mxu0 %v1517
  %v1663 = vpop.f32.mrb[0].mxu0
  %v1664 = vadd.f32 %v1462, %v1663
  %v1665 = vpop.f32.mrb[0].mxu0
  %v1666 = vpop.f32.mrb[0].mxu0
  %v1667 = vadd.f32 %v1462, %v1666
  %v1668 = vpop.f32.mrb[0].mxu0
  %1669 = vmatprep.mubr.bf16.mxu0 0
  %1670 = vmatmul.mubr.bf16.gmra.mrb[0].mxu0 %v1520
  %v1671 = vpop.f32.mrb[0].mxu0
  %v1672 = vadd.f32 %v1462, %v1671
  %v1673 = vpop.f32.mrb[0].mxu0
  %v1674 = vpop.f32.mrb[0].mxu0
  %v1675 = vadd.f32 %v1462, %v1674
  %v1676 = vpop.f32.mrb[0].mxu0
  %1677 = vmatprep.mubr.bf16.mxu0 0
  %1678 = vmatmul.mubr.bf16.gmra.mrb[0].mxu0 %v1523
  %v1679 = vpop.f32.mrb[0].mxu0
  %v1680 = vadd.f32 %v1462, %v1679
  %v1681 = vpop.f32.mrb[0].mxu0
  %v1682 = vpop.f32.mrb[0].mxu0
  %v1683 = vadd.f32 %v1462, %v1682
  %v1684 = vpop.f32.mrb[0].mxu0
  %1685 = vdwg.mxu0
  %v1686 = vmax.f32 %v1560, 0.0
  %v1687 = vmax.f32 %v1563, 0.0
  %v1688 = vmax.f32 %v1568, 0.0
  %v1689 = vmax.f32 %v1571, 0.0
  %v1690 = vmax.f32 %v1576, 0.0
  %v1691 = vmax.f32 %v1579, 0.0
  %v1692 = vmax.f32 %v1584, 0.0
  %v1693 = vmax.f32 %v1587, 0.0
  %v1694 = vmax.f32 %v1592, 0.0
  %v1695 = vmax.f32 %v1595, 0.0
  %v1696 = vmax.f32 %v1600, 0.0
  %v1697 = vmax.f32 %v1603, 0.0
  %v1698 = vmax.f32 %v1608, 0.0
  %v1699 = vmax.f32 %v1611, 0.0
  %v1700 = vmax.f32 %v1616, 0.0
  %v1701 = vmax.f32 %v1619, 0.0
  %v1702 = vmax.f32 %v1624, 0.0
  %v1703 = vmax.f32 %v1627, 0.0
  %v1704 = vmax.f32 %v1632, 0.0
  %v1705 = vmax.f32 %v1635, 0.0
  %v1706 = vmax.f32 %v1640, 0.0
  %v1707 = vmax.f32 %v1643, 0.0
  %v1708 = vmax.f32 %v1648, 0.0
  %v1709 = vmax.f32 %v1651, 0.0
  %v1710 = vmax.f32 %v1656, 0.0
  %v1711 = vmax.f32 %v1659, 0.0
  %v1712 = vmax.f32 %v1664, 0.0
  %v1713 = vmax.f32 %v1667, 0.0
  %v1714 = vmax.f32 %v1672, 0.0
  %v1715 = vmax.f32 %v1675, 0.0
  %v1716 = vmax.f32 %v1680, 0.0
  %v1717 = vmax.f32 %v1683, 0.0
  %1718 = vset.pattern.permute.xlu0 6
  %1719 = vperm.xlu0 %1718, %v75
  %v1720 = vpop.permute.xlu0 %1719
  %1722 = vset.pattern.permute.xlu0 6
  %1723 = vperm.xlu0 %1722, %v76
  %v1724 = vpop.permute.xlu0 %1723
  %1726 = vset.pattern.permute.xlu0 6
  %1727 = vperm.xlu0 %1726, %v77
  %v1728 = vpop.permute.xlu0 %1727
  %1730 = vset.pattern.permute.xlu0 6
  %1731 = vperm.xlu0 %1730, %v78
  %v1732 = vpop.permute.xlu0 %1731
  %1734 = vset.pattern.permute.xlu0 6
  %1735 = vperm.xlu0 %1734, %v79
  %v1736 = vpop.permute.xlu0 %1735
  %1738 = vset.pattern.permute.xlu0 6
  %1739 = vperm.xlu0 %1738, %v80
  %v1740 = vpop.permute.xlu0 %1739
  %1742 = vset.pattern.permute.xlu0 6
  %1743 = vperm.xlu0 %1742, %v81
  %v1744 = vpop.permute.xlu0 %1743
  %1746 = vset.pattern.permute.xlu0 6
  %1747 = vperm.xlu0 %1746, %v82
  %v1748 = vpop.permute.xlu0 %1747
  %1750 = vset.pattern.permute.xlu0 6
  %1751 = vperm.xlu0 %1750, %v83
  %v1752 = vpop.permute.xlu0 %1751
  %1754 = vset.pattern.permute.xlu0 6
  %1755 = vperm.xlu0 %1754, %v84
  %v1756 = vpop.permute.xlu0 %1755
  %1758 = vset.pattern.permute.xlu0 6
  %1759 = vperm.xlu0 %1758, %v85
  %v1760 = vpop.permute.xlu0 %1759
  %1762 = vset.pattern.permute.xlu0 6
  %1763 = vperm.xlu0 %1762, %v86
  %v1764 = vpop.permute.xlu0 %1763
  %1766 = vset.pattern.permute.xlu0 6
  %1767 = vperm.xlu0 %1766, %v87
  %v1768 = vpop.permute.xlu0 %1767
  %1770 = vset.pattern.permute.xlu0 6
  %1771 = vperm.xlu0 %1770, %v88
  %v1772 = vpop.permute.xlu0 %1771
  %1774 = vset.pattern.permute.xlu0 6
  %1775 = vperm.xlu0 %1774, %v89
  %v1776 = vpop.permute.xlu0 %1775
  %1778 = vset.pattern.permute.xlu0 6
  %1779 = vperm.xlu0 %1778, %v90
  %v1780 = vpop.permute.xlu0 %1779
  %1782 = vset.pattern.permute.xlu0 6
  %1783 = vperm.xlu0 %1782, %v91
  %v1784 = vpop.permute.xlu0 %1783
  %1786 = vset.pattern.permute.xlu0 6
  %1787 = vperm.xlu0 %1786, %v92
  %v1788 = vpop.permute.xlu0 %1787
  %1790 = vset.pattern.permute.xlu0 6
  %1791 = vperm.xlu0 %1790, %v93
  %v1792 = vpop.permute.xlu0 %1791
  %1794 = vset.pattern.permute.xlu0 6
  %1795 = vperm.xlu0 %1794, %v94
  %v1796 = vpop.permute.xlu0 %1795
  %1798 = vset.pattern.permute.xlu0 6
  %1799 = vperm.xlu0 %1798, %v95
  %v1800 = vpop.permute.xlu0 %1799
  %1802 = vset.pattern.permute.xlu0 6
  %1803 = vperm.xlu0 %1802, %v96
  %v1804 = vpop.permute.xlu0 %1803
  %1806 = vset.pattern.permute.xlu0 6
  %1807 = vperm.xlu0 %1806, %v97
  %v1808 = vpop.permute.xlu0 %1807
  %1810 = vset.pattern.permute.xlu0 6
  %1811 = vperm.xlu0 %1810, %v98
  %v1812 = vpop.permute.xlu0 %1811
  %1814 = vset.pattern.permute.xlu0 6
  %1815 = vperm.xlu0 %1814, %v99
  %v1816 = vpop.permute.xlu0 %1815
  %1818 = vset.pattern.permute.xlu0 6
  %1819 = vperm.xlu0 %1818, %v100
  %v1820 = vpop.permute.xlu0 %1819
  %1822 = vset.pattern.permute.xlu0 6
  %1823 = vperm.xlu0 %1822, %v101
  %v1824 = vpop.permute.xlu0 %1823
  %1826 = vset.pattern.permute.xlu0 6
  %1827 = vperm.xlu0 %1826, %v102
  %v1828 = vpop.permute.xlu0 %1827
  %1830 = vset.pattern.permute.xlu0 6
  %1831 = vperm.xlu0 %1830, %v103
  %v1832 = vpop.permute.xlu0 %1831
  %1834 = vset.pattern.permute.xlu0 6
  %1835 = vperm.xlu0 %1834, %v104
  %v1836 = vpop.permute.xlu0 %1835
  %1838 = vset.pattern.permute.xlu0 6
  %1839 = vperm.xlu0 %1838, %v105
  %v1840 = vpop.permute.xlu0 %1839
  %1842 = vset.pattern.permute.xlu0 6
  %1843 = vperm.xlu0 %1842, %v106
  %v1844 = vpop.permute.xlu0 %1843
  %v1846 = vlaneseq
  %v1847 = vshrl.u32 %v1846, 7
  %v1848 = vsub.s32 0, %v1847
  %v1849 = vrot.slane %v41, %v1848
  %v1850 = vmul.f32 %v1720, %v1849
  %v1851 = vmul.f32 %v1724, %v1849
  %v1852 = vmul.f32 %v1728, %v1849
  %v1853 = vmul.f32 %v1732, %v1849
  %v1854 = vmul.f32 %v1736, %v1849
  %v1855 = vmul.f32 %v1740, %v1849
  %v1856 = vmul.f32 %v1744, %v1849
  %v1857 = vmul.f32 %v1748, %v1849
  %v1858 = vmul.f32 %v1752, %v1849
  %v1859 = vmul.f32 %v1756, %v1849
  %v1860 = vmul.f32 %v1760, %v1849
  %v1861 = vmul.f32 %v1764, %v1849
  %v1862 = vmul.f32 %v1768, %v1849
  %v1863 = vmul.f32 %v1772, %v1849
  %v1864 = vmul.f32 %v1776, %v1849
  %v1865 = vmul.f32 %v1780, %v1849
  %v1866 = vmul.f32 %v1784, %v1849
  %v1867 = vmul.f32 %v1788, %v1849
  %v1868 = vmul.f32 %v1792, %v1849
  %v1869 = vmul.f32 %v1796, %v1849
  %v1870 = vmul.f32 %v1800, %v1849
  %v1871 = vmul.f32 %v1804, %v1849
  %v1872 = vmul.f32 %v1808, %v1849
  %v1873 = vmul.f32 %v1812, %v1849
  %v1874 = vmul.f32 %v1816, %v1849
  %v1875 = vmul.f32 %v1820, %v1849
  %v1876 = vmul.f32 %v1824, %v1849
  %v1877 = vmul.f32 %v1828, %v1849
  %v1878 = vmul.f32 %v1832, %v1849
  %v1879 = vmul.f32 %v1836, %v1849
  %v1880 = vmul.f32 %v1840, %v1849
  %v1881 = vmul.f32 %v1844, %v1849
  %1882 = vset.pattern.permute.xlu0 7
  %1883 = vperm.xlu0 %1882, %v75
  %v1884 = vpop.permute.xlu0 %1883
  %1886 = vset.pattern.permute.xlu0 7
  %1887 = vperm.xlu0 %1886, %v76
  %v1888 = vpop.permute.xlu0 %1887
  %1890 = vset.pattern.permute.xlu0 7
  %1891 = vperm.xlu0 %1890, %v77
  %v1892 = vpop.permute.xlu0 %1891
  %1894 = vset.pattern.permute.xlu0 7
  %1895 = vperm.xlu0 %1894, %v78
  %v1896 = vpop.permute.xlu0 %1895
  %1898 = vset.pattern.permute.xlu0 7
  %1899 = vperm.xlu0 %1898, %v79
  %v1900 = vpop.permute.xlu0 %1899
  %1902 = vset.pattern.permute.xlu0 7
  %1903 = vperm.xlu0 %1902, %v80
  %v1904 = vpop.permute.xlu0 %1903
  %1906 = vset.pattern.permute.xlu0 7
  %1907 = vperm.xlu0 %1906, %v81
  %v1908 = vpop.permute.xlu0 %1907
  %1910 = vset.pattern.permute.xlu0 7
  %1911 = vperm.xlu0 %1910, %v82
  %v1912 = vpop.permute.xlu0 %1911
  %1914 = vset.pattern.permute.xlu0 7
  %1915 = vperm.xlu0 %1914, %v83
  %v1916 = vpop.permute.xlu0 %1915
  %1918 = vset.pattern.permute.xlu0 7
  %1919 = vperm.xlu0 %1918, %v84
  %v1920 = vpop.permute.xlu0 %1919
  %1922 = vset.pattern.permute.xlu0 7
  %1923 = vperm.xlu0 %1922, %v85
  %v1924 = vpop.permute.xlu0 %1923
  %1926 = vset.pattern.permute.xlu0 7
  %1927 = vperm.xlu0 %1926, %v86
  %v1928 = vpop.permute.xlu0 %1927
  %1930 = vset.pattern.permute.xlu0 7
  %1931 = vperm.xlu0 %1930, %v87
  %v1932 = vpop.permute.xlu0 %1931
  %1934 = vset.pattern.permute.xlu0 7
  %1935 = vperm.xlu0 %1934, %v88
  %v1936 = vpop.permute.xlu0 %1935
  %1938 = vset.pattern.permute.xlu0 7
  %1939 = vperm.xlu0 %1938, %v89
  %v1940 = vpop.permute.xlu0 %1939
  %1942 = vset.pattern.permute.xlu0 7
  %1943 = vperm.xlu0 %1942, %v90
  %v1944 = vpop.permute.xlu0 %1943
  %1946 = vset.pattern.permute.xlu0 7
  %1947 = vperm.xlu0 %1946, %v91
  %v1948 = vpop.permute.xlu0 %1947
  %1950 = vset.pattern.permute.xlu0 7
  %1951 = vperm.xlu0 %1950, %v92
  %v1952 = vpop.permute.xlu0 %1951
  %1954 = vset.pattern.permute.xlu0 7
  %1955 = vperm.xlu0 %1954, %v93
  %v1956 = vpop.permute.xlu0 %1955
  %1958 = vset.pattern.permute.xlu0 7
  %1959 = vperm.xlu0 %1958, %v94
  %v1960 = vpop.permute.xlu0 %1959
  %1962 = vset.pattern.permute.xlu0 7
  %1963 = vperm.xlu0 %1962, %v95
  %v1964 = vpop.permute.xlu0 %1963
  %1966 = vset.pattern.permute.xlu0 7
  %1967 = vperm.xlu0 %1966, %v96
  %v1968 = vpop.permute.xlu0 %1967
  %1970 = vset.pattern.permute.xlu0 7
  %1971 = vperm.xlu0 %1970, %v97
  %v1972 = vpop.permute.xlu0 %1971
  %1974 = vset.pattern.permute.xlu0 7
  %1975 = vperm.xlu0 %1974, %v98
  %v1976 = vpop.permute.xlu0 %1975
  %1978 = vset.pattern.permute.xlu0 7
  %1979 = vperm.xlu0 %1978, %v99
  %v1980 = vpop.permute.xlu0 %1979
  %1982 = vset.pattern.permute.xlu0 7
  %1983 = vperm.xlu0 %1982, %v100
  %v1984 = vpop.permute.xlu0 %1983
  %1986 = vset.pattern.permute.xlu0 7
  %1987 = vperm.xlu0 %1986, %v101
  %v1988 = vpop.permute.xlu0 %1987
  %1990 = vset.pattern.permute.xlu0 7
  %1991 = vperm.xlu0 %1990, %v102
  %v1992 = vpop.permute.xlu0 %1991
  %1994 = vset.pattern.permute.xlu0 7
  %1995 = vperm.xlu0 %1994, %v103
  %v1996 = vpop.permute.xlu0 %1995
  %1998 = vset.pattern.permute.xlu0 7
  %1999 = vperm.xlu0 %1998, %v104
  %v2000 = vpop.permute.xlu0 %1999
  %2002 = vset.pattern.permute.xlu0 7
  %2003 = vperm.xlu0 %2002, %v105
  %v2004 = vpop.permute.xlu0 %2003
  %2006 = vset.pattern.permute.xlu0 7
  %2007 = vperm.xlu0 %2006, %v106
  %v2008 = vpop.permute.xlu0 %2007
  %v2010 = vlaneseq
  %v2011 = vshrl.u32 %v2010, 7
  %v2012 = vsub.s32 1, %v2011
  %v2013 = vrot.slane %v41, %v2012
  %v2014 = vmul.f32 %v1884, %v2013
  %v2015 = vmul.f32 %v1888, %v2013
  %v2016 = vmul.f32 %v1892, %v2013
  %v2017 = vmul.f32 %v1896, %v2013
  %v2018 = vmul.f32 %v1900, %v2013
  %v2019 = vmul.f32 %v1904, %v2013
  %v2020 = vmul.f32 %v1908, %v2013
  %v2021 = vmul.f32 %v1912, %v2013
  %v2022 = vmul.f32 %v1916, %v2013
  %v2023 = vmul.f32 %v1920, %v2013
  %v2024 = vmul.f32 %v1924, %v2013
  %v2025 = vmul.f32 %v1928, %v2013
  %v2026 = vmul.f32 %v1932, %v2013
  %v2027 = vmul.f32 %v1936, %v2013
  %v2028 = vmul.f32 %v1940, %v2013
  %v2029 = vmul.f32 %v1944, %v2013
  %v2030 = vmul.f32 %v1948, %v2013
  %v2031 = vmul.f32 %v1952, %v2013
  %v2032 = vmul.f32 %v1956, %v2013
  %v2033 = vmul.f32 %v1960, %v2013
  %v2034 = vmul.f32 %v1964, %v2013
  %v2035 = vmul.f32 %v1968, %v2013
  %v2036 = vmul.f32 %v1972, %v2013
  %v2037 = vmul.f32 %v1976, %v2013
  %v2038 = vmul.f32 %v1980, %v2013
  %v2039 = vmul.f32 %v1984, %v2013
  %v2040 = vmul.f32 %v1988, %v2013
  %v2041 = vmul.f32 %v1992, %v2013
  %v2042 = vmul.f32 %v1996, %v2013
  %v2043 = vmul.f32 %v2000, %v2013
  %v2044 = vmul.f32 %v2004, %v2013
  %v2045 = vmul.f32 %v2008, %v2013
  %v2046 = vadd.f32 %v1850, %v2014
  %v2047 = vadd.f32 %v1851, %v2015
  %v2048 = vadd.f32 %v1852, %v2016
  %v2049 = vadd.f32 %v1853, %v2017
  %v2050 = vadd.f32 %v1854, %v2018
  %v2051 = vadd.f32 %v1855, %v2019
  %v2052 = vadd.f32 %v1856, %v2020
  %v2053 = vadd.f32 %v1857, %v2021
  %v2054 = vadd.f32 %v1858, %v2022
  %v2055 = vadd.f32 %v1859, %v2023
  %v2056 = vadd.f32 %v1860, %v2024
  %v2057 = vadd.f32 %v1861, %v2025
  %v2058 = vadd.f32 %v1862, %v2026
  %v2059 = vadd.f32 %v1863, %v2027
  %v2060 = vadd.f32 %v1864, %v2028
  %v2061 = vadd.f32 %v1865, %v2029
  %v2062 = vadd.f32 %v1866, %v2030
  %v2063 = vadd.f32 %v1867, %v2031
  %v2064 = vadd.f32 %v1868, %v2032
  %v2065 = vadd.f32 %v1869, %v2033
  %v2066 = vadd.f32 %v1870, %v2034
  %v2067 = vadd.f32 %v1871, %v2035
  %v2068 = vadd.f32 %v1872, %v2036
  %v2069 = vadd.f32 %v1873, %v2037
  %v2070 = vadd.f32 %v1874, %v2038
  %v2071 = vadd.f32 %v1875, %v2039
  %v2072 = vadd.f32 %v1876, %v2040
  %v2073 = vadd.f32 %v1877, %v2041
  %v2074 = vadd.f32 %v1878, %v2042
  %v2075 = vadd.f32 %v1879, %v2043
  %v2076 = vadd.f32 %v1880, %v2044
  %v2077 = vadd.f32 %v1881, %v2045
  %2078 = vset.pattern.permute.xlu0 8
  %2079 = vperm.xlu0 %2078, %v75
  %v2080 = vpop.permute.xlu0 %2079
  %2082 = vset.pattern.permute.xlu0 8
  %2083 = vperm.xlu0 %2082, %v76
  %v2084 = vpop.permute.xlu0 %2083
  %2086 = vset.pattern.permute.xlu0 8
  %2087 = vperm.xlu0 %2086, %v77
  %v2088 = vpop.permute.xlu0 %2087
  %2090 = vset.pattern.permute.xlu0 8
  %2091 = vperm.xlu0 %2090, %v78
  %v2092 = vpop.permute.xlu0 %2091
  %2094 = vset.pattern.permute.xlu0 8
  %2095 = vperm.xlu0 %2094, %v79
  %v2096 = vpop.permute.xlu0 %2095
  %2098 = vset.pattern.permute.xlu0 8
  %2099 = vperm.xlu0 %2098, %v80
  %v2100 = vpop.permute.xlu0 %2099
  %2102 = vset.pattern.permute.xlu0 8
  %2103 = vperm.xlu0 %2102, %v81
  %v2104 = vpop.permute.xlu0 %2103
  %2106 = vset.pattern.permute.xlu0 8
  %2107 = vperm.xlu0 %2106, %v82
  %v2108 = vpop.permute.xlu0 %2107
  %2110 = vset.pattern.permute.xlu0 8
  %2111 = vperm.xlu0 %2110, %v83
  %v2112 = vpop.permute.xlu0 %2111
  %2114 = vset.pattern.permute.xlu0 8
  %2115 = vperm.xlu0 %2114, %v84
  %v2116 = vpop.permute.xlu0 %2115
  %2118 = vset.pattern.permute.xlu0 8
  %2119 = vperm.xlu0 %2118, %v85
  %v2120 = vpop.permute.xlu0 %2119
  %2122 = vset.pattern.permute.xlu0 8
  %2123 = vperm.xlu0 %2122, %v86
  %v2124 = vpop.permute.xlu0 %2123
  %2126 = vset.pattern.permute.xlu0 8
  %2127 = vperm.xlu0 %2126, %v87
  %v2128 = vpop.permute.xlu0 %2127
  %2130 = vset.pattern.permute.xlu0 8
  %2131 = vperm.xlu0 %2130, %v88
  %v2132 = vpop.permute.xlu0 %2131
  %2134 = vset.pattern.permute.xlu0 8
  %2135 = vperm.xlu0 %2134, %v89
  %v2136 = vpop.permute.xlu0 %2135
  %2138 = vset.pattern.permute.xlu0 8
  %2139 = vperm.xlu0 %2138, %v90
  %v2140 = vpop.permute.xlu0 %2139
  %2142 = vset.pattern.permute.xlu0 8
  %2143 = vperm.xlu0 %2142, %v91
  %v2144 = vpop.permute.xlu0 %2143
  %2146 = vset.pattern.permute.xlu0 8
  %2147 = vperm.xlu0 %2146, %v92
  %v2148 = vpop.permute.xlu0 %2147
  %2150 = vset.pattern.permute.xlu0 8
  %2151 = vperm.xlu0 %2150, %v93
  %v2152 = vpop.permute.xlu0 %2151
  %2154 = vset.pattern.permute.xlu0 8
  %2155 = vperm.xlu0 %2154, %v94
  %v2156 = vpop.permute.xlu0 %2155
  %2158 = vset.pattern.permute.xlu0 8
  %2159 = vperm.xlu0 %2158, %v95
  %v2160 = vpop.permute.xlu0 %2159
  %2162 = vset.pattern.permute.xlu0 8
  %2163 = vperm.xlu0 %2162, %v96
  %v2164 = vpop.permute.xlu0 %2163
  %2166 = vset.pattern.permute.xlu0 8
  %2167 = vperm.xlu0 %2166, %v97
  %v2168 = vpop.permute.xlu0 %2167
  %2170 = vset.pattern.permute.xlu0 8
  %2171 = vperm.xlu0 %2170, %v98
  %v2172 = vpop.permute.xlu0 %2171
  %2174 = vset.pattern.permute.xlu0 8
  %2175 = vperm.xlu0 %2174, %v99
  %v2176 = vpop.permute.xlu0 %2175
  %2178 = vset.pattern.permute.xlu0 8
  %2179 = vperm.xlu0 %2178, %v100
  %v2180 = vpop.permute.xlu0 %2179
  %2182 = vset.pattern.permute.xlu0 8
  %2183 = vperm.xlu0 %2182, %v101
  %v2184 = vpop.permute.xlu0 %2183
  %2186 = vset.pattern.permute.xlu0 8
  %2187 = vperm.xlu0 %2186, %v102
  %v2188 = vpop.permute.xlu0 %2187
  %2190 = vset.pattern.permute.xlu0 8
  %2191 = vperm.xlu0 %2190, %v103
  %v2192 = vpop.permute.xlu0 %2191
  %2194 = vset.pattern.permute.xlu0 8
  %2195 = vperm.xlu0 %2194, %v104
  %v2196 = vpop.permute.xlu0 %2195
  %2198 = vset.pattern.permute.xlu0 8
  %2199 = vperm.xlu0 %2198, %v105
  %v2200 = vpop.permute.xlu0 %2199
  %2202 = vset.pattern.permute.xlu0 8
  %2203 = vperm.xlu0 %2202, %v106
  %v2204 = vpop.permute.xlu0 %2203
  %v2206 = vlaneseq
  %v2207 = vshrl.u32 %v2206, 7
  %v2208 = vsub.s32 2, %v2207
  %v2209 = vrot.slane %v41, %v2208
  %v2210 = vmul.f32 %v2080, %v2209
  %v2211 = vmul.f32 %v2084, %v2209
  %v2212 = vmul.f32 %v2088, %v2209
  %v2213 = vmul.f32 %v2092, %v2209
  %v2214 = vmul.f32 %v2096, %v2209
  %v2215 = vmul.f32 %v2100, %v2209
  %v2216 = vmul.f32 %v2104, %v2209
  %v2217 = vmul.f32 %v2108, %v2209
  %v2218 = vmul.f32 %v2112, %v2209
  %v2219 = vmul.f32 %v2116, %v2209
  %v2220 = vmul.f32 %v2120, %v2209
  %v2221 = vmul.f32 %v2124, %v2209
  %v2222 = vmul.f32 %v2128, %v2209
  %v2223 = vmul.f32 %v2132, %v2209
  %v2224 = vmul.f32 %v2136, %v2209
  %v2225 = vmul.f32 %v2140, %v2209
  %v2226 = vmul.f32 %v2144, %v2209
  %v2227 = vmul.f32 %v2148, %v2209
  %v2228 = vmul.f32 %v2152, %v2209
  %v2229 = vmul.f32 %v2156, %v2209
  %v2230 = vmul.f32 %v2160, %v2209
  %v2231 = vmul.f32 %v2164, %v2209
  %v2232 = vmul.f32 %v2168, %v2209
  %v2233 = vmul.f32 %v2172, %v2209
  %v2234 = vmul.f32 %v2176, %v2209
  %v2235 = vmul.f32 %v2180, %v2209
  %v2236 = vmul.f32 %v2184, %v2209
  %v2237 = vmul.f32 %v2188, %v2209
  %v2238 = vmul.f32 %v2192, %v2209
  %v2239 = vmul.f32 %v2196, %v2209
  %v2240 = vmul.f32 %v2200, %v2209
  %v2241 = vmul.f32 %v2204, %v2209
  %v2242 = vadd.f32 %v2046, %v2210
  %v2243 = vadd.f32 %v2047, %v2211
  %v2244 = vadd.f32 %v2048, %v2212
  %v2245 = vadd.f32 %v2049, %v2213
  %v2246 = vadd.f32 %v2050, %v2214
  %v2247 = vadd.f32 %v2051, %v2215
  %v2248 = vadd.f32 %v2052, %v2216
  %v2249 = vadd.f32 %v2053, %v2217
  %v2250 = vadd.f32 %v2054, %v2218
  %v2251 = vadd.f32 %v2055, %v2219
  %v2252 = vadd.f32 %v2056, %v2220
  %v2253 = vadd.f32 %v2057, %v2221
  %v2254 = vadd.f32 %v2058, %v2222
  %v2255 = vadd.f32 %v2059, %v2223
  %v2256 = vadd.f32 %v2060, %v2224
  %v2257 = vadd.f32 %v2061, %v2225
  %v2258 = vadd.f32 %v2062, %v2226
  %v2259 = vadd.f32 %v2063, %v2227
  %v2260 = vadd.f32 %v2064, %v2228
  %v2261 = vadd.f32 %v2065, %v2229
  %v2262 = vadd.f32 %v2066, %v2230
  %v2263 = vadd.f32 %v2067, %v2231
  %v2264 = vadd.f32 %v2068, %v2232
  %v2265 = vadd.f32 %v2069, %v2233
  %v2266 = vadd.f32 %v2070, %v2234
  %v2267 = vadd.f32 %v2071, %v2235
  %v2268 = vadd.f32 %v2072, %v2236
  %v2269 = vadd.f32 %v2073, %v2237
  %v2270 = vadd.f32 %v2074, %v2238
  %v2271 = vadd.f32 %v2075, %v2239
  %v2272 = vadd.f32 %v2076, %v2240
  %v2273 = vadd.f32 %v2077, %v2241
  %2274 = vset.pattern.permute.xlu0 9
  %2275 = vperm.xlu0 %2274, %v75
  %v2276 = vpop.permute.xlu0 %2275
  %2278 = vset.pattern.permute.xlu0 9
  %2279 = vperm.xlu0 %2278, %v76
  %v2280 = vpop.permute.xlu0 %2279
  %2282 = vset.pattern.permute.xlu0 9
  %2283 = vperm.xlu0 %2282, %v77
  %v2284 = vpop.permute.xlu0 %2283
  %2286 = vset.pattern.permute.xlu0 9
  %2287 = vperm.xlu0 %2286, %v78
  %v2288 = vpop.permute.xlu0 %2287
  %2290 = vset.pattern.permute.xlu0 9
  %2291 = vperm.xlu0 %2290, %v79
  %v2292 = vpop.permute.xlu0 %2291
  %2294 = vset.pattern.permute.xlu0 9
  %2295 = vperm.xlu0 %2294, %v80
  %v2296 = vpop.permute.xlu0 %2295
  %2298 = vset.pattern.permute.xlu0 9
  %2299 = vperm.xlu0 %2298, %v81
  %v2300 = vpop.permute.xlu0 %2299
  %2302 = vset.pattern.permute.xlu0 9
  %2303 = vperm.xlu0 %2302, %v82
  %v2304 = vpop.permute.xlu0 %2303
  %2306 = vset.pattern.permute.xlu0 9
  %2307 = vperm.xlu0 %2306, %v83
  %v2308 = vpop.permute.xlu0 %2307
  %2310 = vset.pattern.permute.xlu0 9
  %2311 = vperm.xlu0 %2310, %v84
  %v2312 = vpop.permute.xlu0 %2311
  %2314 = vset.pattern.permute.xlu0 9
  %2315 = vperm.xlu0 %2314, %v85
  %v2316 = vpop.permute.xlu0 %2315
  %2318 = vset.pattern.permute.xlu0 9
  %2319 = vperm.xlu0 %2318, %v86
  %v2320 = vpop.permute.xlu0 %2319
  %2322 = vset.pattern.permute.xlu0 9
  %2323 = vperm.xlu0 %2322, %v87
  %v2324 = vpop.permute.xlu0 %2323
  %2326 = vset.pattern.permute.xlu0 9
  %2327 = vperm.xlu0 %2326, %v88
  %v2328 = vpop.permute.xlu0 %2327
  %2330 = vset.pattern.permute.xlu0 9
  %2331 = vperm.xlu0 %2330, %v89
  %v2332 = vpop.permute.xlu0 %2331
  %2334 = vset.pattern.permute.xlu0 9
  %2335 = vperm.xlu0 %2334, %v90
  %v2336 = vpop.permute.xlu0 %2335
  %2338 = vset.pattern.permute.xlu0 9
  %2339 = vperm.xlu0 %2338, %v91
  %v2340 = vpop.permute.xlu0 %2339
  %2342 = vset.pattern.permute.xlu0 9
  %2343 = vperm.xlu0 %2342, %v92
  %v2344 = vpop.permute.xlu0 %2343
  %2346 = vset.pattern.permute.xlu0 9
  %2347 = vperm.xlu0 %2346, %v93
  %v2348 = vpop.permute.xlu0 %2347
  %2350 = vset.pattern.permute.xlu0 9
  %2351 = vperm.xlu0 %2350, %v94
  %v2352 = vpop.permute.xlu0 %2351
  %2354 = vset.pattern.permute.xlu0 9
  %2355 = vperm.xlu0 %2354, %v95
  %v2356 = vpop.permute.xlu0 %2355
  %2358 = vset.pattern.permute.xlu0 9
  %2359 = vperm.xlu0 %2358, %v96
  %v2360 = vpop.permute.xlu0 %2359
  %2362 = vset.pattern.permute.xlu0 9
  %2363 = vperm.xlu0 %2362, %v97
  %v2364 = vpop.permute.xlu0 %2363
  %2366 = vset.pattern.permute.xlu0 9
  %2367 = vperm.xlu0 %2366, %v98
  %v2368 = vpop.permute.xlu0 %2367
  %2370 = vset.pattern.permute.xlu0 9
  %2371 = vperm.xlu0 %2370, %v99
  %v2372 = vpop.permute.xlu0 %2371
  %2374 = vset.pattern.permute.xlu0 9
  %2375 = vperm.xlu0 %2374, %v100
  %v2376 = vpop.permute.xlu0 %2375
  %2378 = vset.pattern.permute.xlu0 9
  %2379 = vperm.xlu0 %2378, %v101
  %v2380 = vpop.permute.xlu0 %2379
  %2382 = vset.pattern.permute.xlu0 9
  %2383 = vperm.xlu0 %2382, %v102
  %v2384 = vpop.permute.xlu0 %2383
  %2386 = vset.pattern.permute.xlu0 9
  %2387 = vperm.xlu0 %2386, %v103
  %v2388 = vpop.permute.xlu0 %2387
  %2390 = vset.pattern.permute.xlu0 9
  %2391 = vperm.xlu0 %2390, %v104
  %v2392 = vpop.permute.xlu0 %2391
  %2394 = vset.pattern.permute.xlu0 9
  %2395 = vperm.xlu0 %2394, %v105
  %v2396 = vpop.permute.xlu0 %2395
  %2398 = vset.pattern.permute.xlu0 9
  %2399 = vperm.xlu0 %2398, %v106
  %v2400 = vpop.permute.xlu0 %2399
  %v2402 = vlaneseq
  %v2403 = vshrl.u32 %v2402, 7
  %v2404 = vsub.s32 3, %v2403
  %v2405 = vrot.slane %v41, %v2404
  %v2406 = vmul.f32 %v2276, %v2405
  %v2407 = vmul.f32 %v2280, %v2405
  %v2408 = vmul.f32 %v2284, %v2405
  %v2409 = vmul.f32 %v2288, %v2405
  %v2410 = vmul.f32 %v2292, %v2405
  %v2411 = vmul.f32 %v2296, %v2405
  %v2412 = vmul.f32 %v2300, %v2405
  %v2413 = vmul.f32 %v2304, %v2405
  %v2414 = vmul.f32 %v2308, %v2405
  %v2415 = vmul.f32 %v2312, %v2405
  %v2416 = vmul.f32 %v2316, %v2405
  %v2417 = vmul.f32 %v2320, %v2405
  %v2418 = vmul.f32 %v2324, %v2405
  %v2419 = vmul.f32 %v2328, %v2405
  %v2420 = vmul.f32 %v2332, %v2405
  %v2421 = vmul.f32 %v2336, %v2405
  %v2422 = vmul.f32 %v2340, %v2405
  %v2423 = vmul.f32 %v2344, %v2405
  %v2424 = vmul.f32 %v2348, %v2405
  %v2425 = vmul.f32 %v2352, %v2405
  %v2426 = vmul.f32 %v2356, %v2405
  %v2427 = vmul.f32 %v2360, %v2405
  %v2428 = vmul.f32 %v2364, %v2405
  %v2429 = vmul.f32 %v2368, %v2405
  %v2430 = vmul.f32 %v2372, %v2405
  %v2431 = vmul.f32 %v2376, %v2405
  %v2432 = vmul.f32 %v2380, %v2405
  %v2433 = vmul.f32 %v2384, %v2405
  %v2434 = vmul.f32 %v2388, %v2405
  %v2435 = vmul.f32 %v2392, %v2405
  %v2436 = vmul.f32 %v2396, %v2405
  %v2437 = vmul.f32 %v2400, %v2405
  %v2438 = vadd.f32 %v2242, %v2406
  %v2439 = vadd.f32 %v2243, %v2407
  %v2440 = vadd.f32 %v2244, %v2408
  %v2441 = vadd.f32 %v2245, %v2409
  %v2442 = vadd.f32 %v2246, %v2410
  %v2443 = vadd.f32 %v2247, %v2411
  %v2444 = vadd.f32 %v2248, %v2412
  %v2445 = vadd.f32 %v2249, %v2413
  %v2446 = vadd.f32 %v2250, %v2414
  %v2447 = vadd.f32 %v2251, %v2415
  %v2448 = vadd.f32 %v2252, %v2416
  %v2449 = vadd.f32 %v2253, %v2417
  %v2450 = vadd.f32 %v2254, %v2418
  %v2451 = vadd.f32 %v2255, %v2419
  %v2452 = vadd.f32 %v2256, %v2420
  %v2453 = vadd.f32 %v2257, %v2421
  %v2454 = vadd.f32 %v2258, %v2422
  %v2455 = vadd.f32 %v2259, %v2423
  %v2456 = vadd.f32 %v2260, %v2424
  %v2457 = vadd.f32 %v2261, %v2425
  %v2458 = vadd.f32 %v2262, %v2426
  %v2459 = vadd.f32 %v2263, %v2427
  %v2460 = vadd.f32 %v2264, %v2428
  %v2461 = vadd.f32 %v2265, %v2429
  %v2462 = vadd.f32 %v2266, %v2430
  %v2463 = vadd.f32 %v2267, %v2431
  %v2464 = vadd.f32 %v2268, %v2432
  %v2465 = vadd.f32 %v2269, %v2433
  %v2466 = vadd.f32 %v2270, %v2434
  %v2467 = vadd.f32 %v2271, %v2435
  %v2468 = vadd.f32 %v2272, %v2436
  %v2469 = vadd.f32 %v2273, %v2437
  %v2471 = vlaneseq
  %v2472 = vshrl.u32 %v2471, 7
  %v2473 = vsub.s32 0, %v2472
  %v2474 = vrot.slane %v42, %v2473
  %v2476 = vadd.f32 %v2438, %v2474
  %v2477 = vadd.f32 %v2439, %v2474
  %v2478 = vadd.f32 %v2440, %v2474
  %v2479 = vadd.f32 %v2441, %v2474
  %v2480 = vadd.f32 %v2442, %v2474
  %v2481 = vadd.f32 %v2443, %v2474
  %v2482 = vadd.f32 %v2444, %v2474
  %v2483 = vadd.f32 %v2445, %v2474
  %v2484 = vadd.f32 %v2446, %v2474
  %v2485 = vadd.f32 %v2447, %v2474
  %v2486 = vadd.f32 %v2448, %v2474
  %v2487 = vadd.f32 %v2449, %v2474
  %v2488 = vadd.f32 %v2450, %v2474
  %v2489 = vadd.f32 %v2451, %v2474
  %v2490 = vadd.f32 %v2452, %v2474
  %v2491 = vadd.f32 %v2453, %v2474
  %v2492 = vadd.f32 %v2454, %v2474
  %v2493 = vadd.f32 %v2455, %v2474
  %v2494 = vadd.f32 %v2456, %v2474
  %v2495 = vadd.f32 %v2457, %v2474
  %v2496 = vadd.f32 %v2458, %v2474
  %v2497 = vadd.f32 %v2459, %v2474
  %v2498 = vadd.f32 %v2460, %v2474
  %v2499 = vadd.f32 %v2461, %v2474
  %v2500 = vadd.f32 %v2462, %v2474
  %v2501 = vadd.f32 %v2463, %v2474
  %v2502 = vadd.f32 %v2464, %v2474
  %v2503 = vadd.f32 %v2465, %v2474
  %v2504 = vadd.f32 %v2466, %v2474
  %v2505 = vadd.f32 %v2467, %v2474
  %v2506 = vadd.f32 %v2468, %v2474
  %v2507 = vadd.f32 %v2469, %v2474
  %v2508 = vmax.f32 %v2476, 0.0
  %v2509 = vmax.f32 %v2477, 0.0
  %v2510 = vmax.f32 %v2478, 0.0
  %v2511 = vmax.f32 %v2479, 0.0
  %v2512 = vmax.f32 %v2480, 0.0
  %v2513 = vmax.f32 %v2481, 0.0
  %v2514 = vmax.f32 %v2482, 0.0
  %v2515 = vmax.f32 %v2483, 0.0
  %v2516 = vmax.f32 %v2484, 0.0
  %v2517 = vmax.f32 %v2485, 0.0
  %v2518 = vmax.f32 %v2486, 0.0
  %v2519 = vmax.f32 %v2487, 0.0
  %v2520 = vmax.f32 %v2488, 0.0
  %v2521 = vmax.f32 %v2489, 0.0
  %v2522 = vmax.f32 %v2490, 0.0
  %v2523 = vmax.f32 %v2491, 0.0
  %v2524 = vmax.f32 %v2492, 0.0
  %v2525 = vmax.f32 %v2493, 0.0
  %v2526 = vmax.f32 %v2494, 0.0
  %v2527 = vmax.f32 %v2495, 0.0
  %v2528 = vmax.f32 %v2496, 0.0
  %v2529 = vmax.f32 %v2497, 0.0
  %v2530 = vmax.f32 %v2498, 0.0
  %v2531 = vmax.f32 %v2499, 0.0
  %v2532 = vmax.f32 %v2500, 0.0
  %v2533 = vmax.f32 %v2501, 0.0
  %v2534 = vmax.f32 %v2502, 0.0
  %v2535 = vmax.f32 %v2503, 0.0
  %v2536 = vmax.f32 %v2504, 0.0
  %v2537 = vmax.f32 %v2505, 0.0
  %v2538 = vmax.f32 %v2506, 0.0
  %v2539 = vmax.f32 %v2507, 0.0
  %v2540 = vpack.c.bf16 %v1687, %v1686
  %v2541 = vpack.c.bf16 %v1689, %v1688
  %v2542 = vpack.c.bf16 %v1691, %v1690
  %v2543 = vpack.c.bf16 %v1693, %v1692
  %v2544 = vpack.c.bf16 %v1695, %v1694
  %v2545 = vpack.c.bf16 %v1697, %v1696
  %v2546 = vpack.c.bf16 %v1699, %v1698
  %v2547 = vpack.c.bf16 %v1701, %v1700
  %v2548 = vpack.c.bf16 %v1703, %v1702
  %v2549 = vpack.c.bf16 %v1705, %v1704
  %v2550 = vpack.c.bf16 %v1707, %v1706
  %v2551 = vpack.c.bf16 %v1709, %v1708
  %v2552 = vpack.c.bf16 %v1711, %v1710
  %v2553 = vpack.c.bf16 %v1713, %v1712
  %v2554 = vpack.c.bf16 %v1715, %v1714
  %v2555 = vpack.c.bf16 %v1717, %v1716
  %v2556 = vld [vmem:[%s7] sm:$0xf]
  %v2557 = vld [vmem:[%s7 + $0x4] sm:$0xf]
  %v2558 = vld [vmem:[%s7 + $0x8] sm:$0xf]
  %v2559 = vld [vmem:[%s7 + $0xc] sm:$0xf]
  %v2560 = vpack.c.bf16 %v2509, %v2508
  %v2561 = vpack.c.bf16 %v2511, %v2510
  %v2562 = vpack.c.bf16 %v2513, %v2512
  %v2563 = vpack.c.bf16 %v2515, %v2514
  %v2564 = vpack.c.bf16 %v2517, %v2516
  %v2565 = vpack.c.bf16 %v2519, %v2518
  %v2566 = vpack.c.bf16 %v2521, %v2520
  %v2567 = vpack.c.bf16 %v2523, %v2522
  %v2568 = vpack.c.bf16 %v2525, %v2524
  %v2569 = vpack.c.bf16 %v2527, %v2526
  %v2570 = vpack.c.bf16 %v2529, %v2528
  %v2571 = vpack.c.bf16 %v2531, %v2530
  %v2572 = vpack.c.bf16 %v2533, %v2532
  %v2573 = vpack.c.bf16 %v2535, %v2534
  %v2574 = vpack.c.bf16 %v2537, %v2536
  %v2575 = vpack.c.bf16 %v2539, %v2538
  %v2576 = vld [vmem:[%s7 + $0x10] sm:$0xf]
  %v2577 = vld [vmem:[%s7 + $0x14] sm:$0xf]
  %v2578 = vld [vmem:[%s7 + $0x18] sm:$0xf]
  %v2579 = vld [vmem:[%s7 + $0x1c] sm:$0xf]
  %v2584 = vunpack.c.l.b16 %v2576
  %v2585 = vunpack.c.l.b16 %v2577
  %v2586 = vunpack.c.l.b16 %v2578
  %v2587 = vunpack.c.l.b16 %v2579
  %v2588 = vpack.c.b16 %v2585, %v2584
  %v2589 = vpack.c.b16 %v2587, %v2586
  %v2593 = vsel %vm1476, %v2560, 0
  %v2596 = vsel %vm1476, %v2561, 0
  %v2599 = vsel %vm1476, %v2562, 0
  %v2602 = vsel %vm1476, %v2563, 0
  %v2605 = vsel %vm1476, %v2564, 0
  %v2608 = vsel %vm1476, %v2565, 0
  %v2611 = vsel %vm1476, %v2566, 0
  %v2614 = vsel %vm1476, %v2567, 0
  %v2617 = vsel %vm1476, %v2568, 0
  %v2620 = vsel %vm1476, %v2569, 0
  %v2623 = vsel %vm1476, %v2570, 0
  %v2626 = vsel %vm1476, %v2571, 0
  %v2629 = vsel %vm1476, %v2572, 0
  %v2632 = vsel %vm1476, %v2573, 0
  %v2635 = vsel %vm1476, %v2574, 0
  %v2638 = vsel %vm1476, %v2575, 0
  %2640 = vmatprep.subr.bf16.mxu0 0
  %2641 = vmatpush1.bf16.msra.mxu0 %v2588
  %2642 = vmatprep.subr.bf16.mxu0 0
  %2643 = vmatpush1.bf16.msra.mxu0 %v2589
  %2644 = vmatprep.subr.bf16.mxu0 0
  %2645 = vmatpush1.bf16.msra.mxu0 0
  %2646 = vmatprep.subr.bf16.mxu0 0
  %2647 = vmatpush1.bf16.msra.mxu0 0
  %2648 = vmatprep.subr.bf16.mxu0 0
  %2649 = vmatpush1.bf16.msra.mxu0 0
  %2650 = vmatprep.subr.bf16.mxu0 0
  %2651 = vmatpush1.bf16.msra.mxu0 0
  %2652 = vmatprep.subr.bf16.mxu0 0
  %2653 = vmatpush1.bf16.msra.mxu0 0
  %2654 = vmatprep.subr.bf16.mxu0 0
  %2655 = vmatpush1.bf16.msra.mxu0 0
  %2656 = vmatprep.subr.bf16.mxu0 0
  %2657 = vmatpush1.bf16.msra.mxu0 0
  %2658 = vmatprep.subr.bf16.mxu0 0
  %2659 = vmatpush1.bf16.msra.mxu0 0
  %2660 = vmatprep.subr.bf16.mxu0 0
  %2661 = vmatpush1.bf16.msra.mxu0 0
  %2662 = vmatprep.subr.bf16.mxu0 0
  %2663 = vmatpush1.bf16.msra.mxu0 0
  %2664 = vmatprep.subr.bf16.mxu0 0
  %2665 = vmatpush1.bf16.msra.mxu0 0
  %2666 = vmatprep.subr.bf16.mxu0 0
  %2667 = vmatpush1.bf16.msra.mxu0 0
  %2668 = vmatprep.subr.bf16.mxu0 0
  %2669 = vmatpush1.bf16.msra.mxu0 0
  %2670 = vmatprep.subr.bf16.mxu0 0
  %2671 = vmatpush1.bf16.msra.mxu0 0
  %2672 = vmatprep.mubr.bf16.mxu0 0
  %2673 = vmatmul.mubr.bf16.gmra.mrb[0].mxu0 %v2593
  %v2674 = vpop.f32.mrb[0].mxu0
  %v2675 = vadd.f32 0.0, %v2674
  %v2676 = vpop.f32.mrb[0].mxu0
  %v2677 = vpop.f32.mrb[0].mxu0
  %v2678 = vadd.f32 0.0, %v2677
  %v2679 = vpop.f32.mrb[0].mxu0
  %2680 = vmatprep.mubr.bf16.mxu0 0
  %2681 = vmatmul.mubr.bf16.gmra.mrb[0].mxu0 %v2596
  %v2682 = vpop.f32.mrb[0].mxu0
  %v2683 = vadd.f32 0.0, %v2682
  %v2684 = vpop.f32.mrb[0].mxu0
  %v2685 = vpop.f32.mrb[0].mxu0
  %v2686 = vadd.f32 0.0, %v2685
  %v2687 = vpop.f32.mrb[0].mxu0
  %2688 = vmatprep.mubr.bf16.mxu0 0
  %2689 = vmatmul.mubr.bf16.gmra.mrb[0].mxu0 %v2599
  %v2690 = vpop.f32.mrb[0].mxu0
  %v2691 = vadd.f32 0.0, %v2690
  %v2692 = vpop.f32.mrb[0].mxu0
  %v2693 = vpop.f32.mrb[0].mxu0
  %v2694 = vadd.f32 0.0, %v2693
  %v2695 = vpop.f32.mrb[0].mxu0
  %2696 = vmatprep.mubr.bf16.mxu0 0
  %2697 = vmatmul.mubr.bf16.gmra.mrb[0].mxu0 %v2602
  %v2698 = vpop.f32.mrb[0].mxu0
  %v2699 = vadd.f32 0.0, %v2698
  %v2700 = vpop.f32.mrb[0].mxu0
  %v2701 = vpop.f32.mrb[0].mxu0
  %v2702 = vadd.f32 0.0, %v2701
  %v2703 = vpop.f32.mrb[0].mxu0
  %2704 = vmatprep.mubr.bf16.mxu0 0
  %2705 = vmatmul.mubr.bf16.gmra.mrb[0].mxu0 %v2605
  %v2706 = vpop.f32.mrb[0].mxu0
  %v2707 = vadd.f32 0.0, %v2706
  %v2708 = vpop.f32.mrb[0].mxu0
  %v2709 = vpop.f32.mrb[0].mxu0
  %v2710 = vadd.f32 0.0, %v2709
  %v2711 = vpop.f32.mrb[0].mxu0
  %2712 = vmatprep.mubr.bf16.mxu0 0
  %2713 = vmatmul.mubr.bf16.gmra.mrb[0].mxu0 %v2608
  %v2714 = vpop.f32.mrb[0].mxu0
  %v2715 = vadd.f32 0.0, %v2714
  %v2716 = vpop.f32.mrb[0].mxu0
  %v2717 = vpop.f32.mrb[0].mxu0
  %v2718 = vadd.f32 0.0, %v2717
  %v2719 = vpop.f32.mrb[0].mxu0
  %2720 = vmatprep.mubr.bf16.mxu0 0
  %2721 = vmatmul.mubr.bf16.gmra.mrb[0].mxu0 %v2611
  %v2722 = vpop.f32.mrb[0].mxu0
  %v2723 = vadd.f32 0.0, %v2722
  %v2724 = vpop.f32.mrb[0].mxu0
  %v2725 = vpop.f32.mrb[0].mxu0
  %v2726 = vadd.f32 0.0, %v2725
  %v2727 = vpop.f32.mrb[0].mxu0
  %2728 = vmatprep.mubr.bf16.mxu0 0
  %2729 = vmatmul.mubr.bf16.gmra.mrb[0].mxu0 %v2614
  %v2730 = vpop.f32.mrb[0].mxu0
  %v2731 = vadd.f32 0.0, %v2730
  %v2732 = vpop.f32.mrb[0].mxu0
  %v2733 = vpop.f32.mrb[0].mxu0
  %v2734 = vadd.f32 0.0, %v2733
  %v2735 = vpop.f32.mrb[0].mxu0
  %2736 = vmatprep.mubr.bf16.mxu0 0
  %2737 = vmatmul.mubr.bf16.gmra.mrb[0].mxu0 %v2617
  %v2738 = vpop.f32.mrb[0].mxu0
  %v2739 = vadd.f32 0.0, %v2738
  %v2740 = vpop.f32.mrb[0].mxu0
  %v2741 = vpop.f32.mrb[0].mxu0
  %v2742 = vadd.f32 0.0, %v2741
  %v2743 = vpop.f32.mrb[0].mxu0
  %2744 = vmatprep.mubr.bf16.mxu0 0
  %2745 = vmatmul.mubr.bf16.gmra.mrb[0].mxu0 %v2620
  %v2746 = vpop.f32.mrb[0].mxu0
  %v2747 = vadd.f32 0.0, %v2746
  %v2748 = vpop.f32.mrb[0].mxu0
  %v2749 = vpop.f32.mrb[0].mxu0
  %v2750 = vadd.f32 0.0, %v2749
  %v2751 = vpop.f32.mrb[0].mxu0
  %2752 = vmatprep.mubr.bf16.mxu0 0
  %2753 = vmatmul.mubr.bf16.gmra.mrb[0].mxu0 %v2623
  %v2754 = vpop.f32.mrb[0].mxu0
  %v2755 = vadd.f32 0.0, %v2754
  %v2756 = vpop.f32.mrb[0].mxu0
  %v2757 = vpop.f32.mrb[0].mxu0
  %v2758 = vadd.f32 0.0, %v2757
  %v2759 = vpop.f32.mrb[0].mxu0
  %2760 = vmatprep.mubr.bf16.mxu0 0
  %2761 = vmatmul.mubr.bf16.gmra.mrb[0].mxu0 %v2626
  %v2762 = vpop.f32.mrb[0].mxu0
  %v2763 = vadd.f32 0.0, %v2762
  %v2764 = vpop.f32.mrb[0].mxu0
  %v2765 = vpop.f32.mrb[0].mxu0
  %v2766 = vadd.f32 0.0, %v2765
  %v2767 = vpop.f32.mrb[0].mxu0
  %2768 = vmatprep.mubr.bf16.mxu0 0
  %2769 = vmatmul.mubr.bf16.gmra.mrb[0].mxu0 %v2629
  %v2770 = vpop.f32.mrb[0].mxu0
  %v2771 = vadd.f32 0.0, %v2770
  %v2772 = vpop.f32.mrb[0].mxu0
  %v2773 = vpop.f32.mrb[0].mxu0
  %v2774 = vadd.f32 0.0, %v2773
  %v2775 = vpop.f32.mrb[0].mxu0
  %2776 = vmatprep.mubr.bf16.mxu0 0
  %2777 = vmatmul.mubr.bf16.gmra.mrb[0].mxu0 %v2632
  %v2778 = vpop.f32.mrb[0].mxu0
  %v2779 = vadd.f32 0.0, %v2778
  %v2780 = vpop.f32.mrb[0].mxu0
  %v2781 = vpop.f32.mrb[0].mxu0
  %v2782 = vadd.f32 0.0, %v2781
  %v2783 = vpop.f32.mrb[0].mxu0
  %2784 = vmatprep.mubr.bf16.mxu0 0
  %2785 = vmatmul.mubr.bf16.gmra.mrb[0].mxu0 %v2635
  %v2786 = vpop.f32.mrb[0].mxu0
  %v2787 = vadd.f32 0.0, %v2786
  %v2788 = vpop.f32.mrb[0].mxu0
  %v2789 = vpop.f32.mrb[0].mxu0
  %v2790 = vadd.f32 0.0, %v2789
  %v2791 = vpop.f32.mrb[0].mxu0
  %2792 = vmatprep.mubr.bf16.mxu0 0
  %2793 = vmatmul.mubr.bf16.gmra.mrb[0].mxu0 %v2638
  %v2794 = vpop.f32.mrb[0].mxu0
  %v2795 = vadd.f32 0.0, %v2794
  %v2796 = vpop.f32.mrb[0].mxu0
  %v2797 = vpop.f32.mrb[0].mxu0
  %v2798 = vadd.f32 0.0, %v2797
  %v2799 = vpop.f32.mrb[0].mxu0
  %2800 = vdwg.mxu0
  %v2805 = vunpack.c.l.b16 %v2556
  %v2806 = vunpack.c.l.b16 %v2557
  %v2807 = vunpack.c.l.b16 %v2558
  %v2808 = vunpack.c.l.b16 %v2559
  %v2809 = vpack.c.b16 %v2806, %v2805
  %v2810 = vpack.c.b16 %v2808, %v2807
  %v2814 = vsel %vm1476, %v2540, 0
  %v2817 = vsel %vm1476, %v2541, 0
  %v2820 = vsel %vm1476, %v2542, 0
  %v2823 = vsel %vm1476, %v2543, 0
  %v2826 = vsel %vm1476, %v2544, 0
  %v2829 = vsel %vm1476, %v2545, 0
  %v2832 = vsel %vm1476, %v2546, 0
  %v2835 = vsel %vm1476, %v2547, 0
  %v2838 = vsel %vm1476, %v2548, 0
  %v2841 = vsel %vm1476, %v2549, 0
  %v2844 = vsel %vm1476, %v2550, 0
  %v2847 = vsel %vm1476, %v2551, 0
  %v2850 = vsel %vm1476, %v2552, 0
  %v2853 = vsel %vm1476, %v2553, 0
  %v2856 = vsel %vm1476, %v2554, 0
  %v2859 = vsel %vm1476, %v2555, 0
  %2861 = vmatprep.subr.bf16.mxu0 0
  %2862 = vmatpush1.bf16.msra.mxu0 %v2809
  %2863 = vmatprep.subr.bf16.mxu0 0
  %2864 = vmatpush1.bf16.msra.mxu0 %v2810
  %2865 = vmatprep.subr.bf16.mxu0 0
  %2866 = vmatpush1.bf16.msra.mxu0 0
  %2867 = vmatprep.subr.bf16.mxu0 0
  %2868 = vmatpush1.bf16.msra.mxu0 0
  %2869 = vmatprep.subr.bf16.mxu0 0
  %2870 = vmatpush1.bf16.msra.mxu0 0
  %2871 = vmatprep.subr.bf16.mxu0 0
  %2872 = vmatpush1.bf16.msra.mxu0 0
  %2873 = vmatprep.subr.bf16.mxu0 0
  %2874 = vmatpush1.bf16.msra.mxu0 0
  %2875 = vmatprep.subr.bf16.mxu0 0
  %2876 = vmatpush1.bf16.msra.mxu0 0
  %2877 = vmatprep.subr.bf16.mxu0 0
  %2878 = vmatpush1.bf16.msra.mxu0 0
  %2879 = vmatprep.subr.bf16.mxu0 0
  %2880 = vmatpush1.bf16.msra.mxu0 0
  %2881 = vmatprep.subr.bf16.mxu0 0
  %2882 = vmatpush1.bf16.msra.mxu0 0
  %2883 = vmatprep.subr.bf16.mxu0 0
  %2884 = vmatpush1.bf16.msra.mxu0 0
  %2885 = vmatprep.subr.bf16.mxu0 0
  %2886 = vmatpush1.bf16.msra.mxu0 0
  %2887 = vmatprep.subr.bf16.mxu0 0
  %2888 = vmatpush1.bf16.msra.mxu0 0
  %2889 = vmatprep.subr.bf16.mxu0 0
  %2890 = vmatpush1.bf16.msra.mxu0 0
  %2891 = vmatprep.subr.bf16.mxu0 0
  %2892 = vmatpush1.bf16.msra.mxu0 0
  %2893 = vmatprep.mubr.bf16.mxu0 0
  %2894 = vmatmul.mubr.bf16.gmra.mrb[0].mxu0 %v2814
  %v2895 = vpop.f32.mrb[0].mxu0
  %v2896 = vadd.f32 %v2675, %v2895
  %v2897 = vpop.f32.mrb[0].mxu0
  %v2898 = vpop.f32.mrb[0].mxu0
  %v2899 = vadd.f32 %v2678, %v2898
  %v2900 = vpop.f32.mrb[0].mxu0
  %2901 = vmatprep.mubr.bf16.mxu0 0
  %2902 = vmatmul.mubr.bf16.gmra.mrb[0].mxu0 %v2817
  %v2903 = vpop.f32.mrb[0].mxu0
  %v2904 = vadd.f32 %v2683, %v2903
  %v2905 = vpop.f32.mrb[0].mxu0
  %v2906 = vpop.f32.mrb[0].mxu0
  %v2907 = vadd.f32 %v2686, %v2906
  %v2908 = vpop.f32.mrb[0].mxu0
  %2909 = vmatprep.mubr.bf16.mxu0 0
  %2910 = vmatmul.mubr.bf16.gmra.mrb[0].mxu0 %v2820
  %v2911 = vpop.f32.mrb[0].mxu0
  %v2912 = vadd.f32 %v2691, %v2911
  %v2913 = vpop.f32.mrb[0].mxu0
  %v2914 = vpop.f32.mrb[0].mxu0
  %v2915 = vadd.f32 %v2694, %v2914
  %v2916 = vpop.f32.mrb[0].mxu0
  %2917 = vmatprep.mubr.bf16.mxu0 0
  %2918 = vmatmul.mubr.bf16.gmra.mrb[0].mxu0 %v2823
  %v2919 = vpop.f32.mrb[0].mxu0
  %v2920 = vadd.f32 %v2699, %v2919
  %v2921 = vpop.f32.mrb[0].mxu0
  %v2922 = vpop.f32.mrb[0].mxu0
  %v2923 = vadd.f32 %v2702, %v2922
  %v2924 = vpop.f32.mrb[0].mxu0
  %2925 = vmatprep.mubr.bf16.mxu0 0
  %2926 = vmatmul.mubr.bf16.gmra.mrb[0].mxu0 %v2826
  %v2927 = vpop.f32.mrb[0].mxu0
  %v2928 = vadd.f32 %v2707, %v2927
  %v2929 = vpop.f32.mrb[0].mxu0
  %v2930 = vpop.f32.mrb[0].mxu0
  %v2931 = vadd.f32 %v2710, %v2930
  %v2932 = vpop.f32.mrb[0].mxu0
  %2933 = vmatprep.mubr.bf16.mxu0 0
  %2934 = vmatmul.mubr.bf16.gmra.mrb[0].mxu0 %v2829
  %v2935 = vpop.f32.mrb[0].mxu0
  %v2936 = vadd.f32 %v2715, %v2935
  %v2937 = vpop.f32.mrb[0].mxu0
  %v2938 = vpop.f32.mrb[0].mxu0
  %v2939 = vadd.f32 %v2718, %v2938
  %v2940 = vpop.f32.mrb[0].mxu0
  %2941 = vmatprep.mubr.bf16.mxu0 0
  %2942 = vmatmul.mubr.bf16.gmra.mrb[0].mxu0 %v2832
  %v2943 = vpop.f32.mrb[0].mxu0
  %v2944 = vadd.f32 %v2723, %v2943
  %v2945 = vpop.f32.mrb[0].mxu0
  %v2946 = vpop.f32.mrb[0].mxu0
  %v2947 = vadd.f32 %v2726, %v2946
  %v2948 = vpop.f32.mrb[0].mxu0
  %2949 = vmatprep.mubr.bf16.mxu0 0
  %2950 = vmatmul.mubr.bf16.gmra.mrb[0].mxu0 %v2835
  %v2951 = vpop.f32.mrb[0].mxu0
  %v2952 = vadd.f32 %v2731, %v2951
  %v2953 = vpop.f32.mrb[0].mxu0
  %v2954 = vpop.f32.mrb[0].mxu0
  %v2955 = vadd.f32 %v2734, %v2954
  %v2956 = vpop.f32.mrb[0].mxu0
  %2957 = vmatprep.mubr.bf16.mxu0 0
  %2958 = vmatmul.mubr.bf16.gmra.mrb[0].mxu0 %v2838
  %v2959 = vpop.f32.mrb[0].mxu0
  %v2960 = vadd.f32 %v2739, %v2959
  %v2961 = vpop.f32.mrb[0].mxu0
  %v2962 = vpop.f32.mrb[0].mxu0
  %v2963 = vadd.f32 %v2742, %v2962
  %v2964 = vpop.f32.mrb[0].mxu0
  %2965 = vmatprep.mubr.bf16.mxu0 0
  %2966 = vmatmul.mubr.bf16.gmra.mrb[0].mxu0 %v2841
  %v2967 = vpop.f32.mrb[0].mxu0
  %v2968 = vadd.f32 %v2747, %v2967
  %v2969 = vpop.f32.mrb[0].mxu0
  %v2970 = vpop.f32.mrb[0].mxu0
  %v2971 = vadd.f32 %v2750, %v2970
  %v2972 = vpop.f32.mrb[0].mxu0
  %2973 = vmatprep.mubr.bf16.mxu0 0
  %2974 = vmatmul.mubr.bf16.gmra.mrb[0].mxu0 %v2844
  %v2975 = vpop.f32.mrb[0].mxu0
  %v2976 = vadd.f32 %v2755, %v2975
  %v2977 = vpop.f32.mrb[0].mxu0
  %v2978 = vpop.f32.mrb[0].mxu0
  %v2979 = vadd.f32 %v2758, %v2978
  %v2980 = vpop.f32.mrb[0].mxu0
  %2981 = vmatprep.mubr.bf16.mxu0 0
  %2982 = vmatmul.mubr.bf16.gmra.mrb[0].mxu0 %v2847
  %v2983 = vpop.f32.mrb[0].mxu0
  %v2984 = vadd.f32 %v2763, %v2983
  %v2985 = vpop.f32.mrb[0].mxu0
  %v2986 = vpop.f32.mrb[0].mxu0
  %v2987 = vadd.f32 %v2766, %v2986
  %v2988 = vpop.f32.mrb[0].mxu0
  %2989 = vmatprep.mubr.bf16.mxu0 0
  %2990 = vmatmul.mubr.bf16.gmra.mrb[0].mxu0 %v2850
  %v2991 = vpop.f32.mrb[0].mxu0
  %v2992 = vadd.f32 %v2771, %v2991
  %v2993 = vpop.f32.mrb[0].mxu0
  %v2994 = vpop.f32.mrb[0].mxu0
  %v2995 = vadd.f32 %v2774, %v2994
  %v2996 = vpop.f32.mrb[0].mxu0
  %2997 = vmatprep.mubr.bf16.mxu0 0
  %2998 = vmatmul.mubr.bf16.gmra.mrb[0].mxu0 %v2853
  %v2999 = vpop.f32.mrb[0].mxu0
  %v3000 = vadd.f32 %v2779, %v2999
  %v3001 = vpop.f32.mrb[0].mxu0
  %v3002 = vpop.f32.mrb[0].mxu0
  %v3003 = vadd.f32 %v2782, %v3002
  %v3004 = vpop.f32.mrb[0].mxu0
  %3005 = vmatprep.mubr.bf16.mxu0 0
  %3006 = vmatmul.mubr.bf16.gmra.mrb[0].mxu0 %v2856
  %v3007 = vpop.f32.mrb[0].mxu0
  %v3008 = vadd.f32 %v2787, %v3007
  %v3009 = vpop.f32.mrb[0].mxu0
  %v3010 = vpop.f32.mrb[0].mxu0
  %v3011 = vadd.f32 %v2790, %v3010
  %v3012 = vpop.f32.mrb[0].mxu0
  %3013 = vmatprep.mubr.bf16.mxu0 0
  %3014 = vmatmul.mubr.bf16.gmra.mrb[0].mxu0 %v2859
  %v3015 = vpop.f32.mrb[0].mxu0
  %v3016 = vadd.f32 %v2795, %v3015
  %v3017 = vpop.f32.mrb[0].mxu0
  %v3018 = vpop.f32.mrb[0].mxu0
  %v3019 = vadd.f32 %v2798, %v3018
  %v3020 = vpop.f32.mrb[0].mxu0
  %3021 = vdwg.mxu0
  %v3022 = vld [vmem:[%s8] sm:$0x1]
  %v3024 = vlaneseq
  %v3025 = vshrl.u32 %v3024, 7
  %v3026 = vsub.s32 0, %v3025
  %v3027 = vrot.slane %v3022, %v3026
  %v3029 = vadd.f32 %v2896, %v3027
  %v3030 = vadd.f32 %v2899, %v3027
  %v3031 = vadd.f32 %v2904, %v3027
  %v3032 = vadd.f32 %v2907, %v3027
  %v3033 = vadd.f32 %v2912, %v3027
  %v3034 = vadd.f32 %v2915, %v3027
  %v3035 = vadd.f32 %v2920, %v3027
  %v3036 = vadd.f32 %v2923, %v3027
  %v3037 = vadd.f32 %v2928, %v3027
  %v3038 = vadd.f32 %v2931, %v3027
  %v3039 = vadd.f32 %v2936, %v3027
  %v3040 = vadd.f32 %v2939, %v3027
  %v3041 = vadd.f32 %v2944, %v3027
  %v3042 = vadd.f32 %v2947, %v3027
  %v3043 = vadd.f32 %v2952, %v3027
  %v3044 = vadd.f32 %v2955, %v3027
  %v3045 = vadd.f32 %v2960, %v3027
  %v3046 = vadd.f32 %v2963, %v3027
  %v3047 = vadd.f32 %v2968, %v3027
  %v3048 = vadd.f32 %v2971, %v3027
  %v3049 = vadd.f32 %v2976, %v3027
  %v3050 = vadd.f32 %v2979, %v3027
  %v3051 = vadd.f32 %v2984, %v3027
  %v3052 = vadd.f32 %v2987, %v3027
  %v3053 = vadd.f32 %v2992, %v3027
  %v3054 = vadd.f32 %v2995, %v3027
  %v3055 = vadd.f32 %v3000, %v3027
  %v3056 = vadd.f32 %v3003, %v3027
  %v3057 = vadd.f32 %v3008, %v3027
  %v3058 = vadd.f32 %v3011, %v3027
  %v3059 = vadd.f32 %v3016, %v3027
  %v3060 = vadd.f32 %v3019, %v3027
  %v3061 = vmax.f32 %v3029, 0.0
  %v3062 = vmax.f32 %v3030, 0.0
  %v3063 = vmax.f32 %v3031, 0.0
  %v3064 = vmax.f32 %v3032, 0.0
  %v3065 = vmax.f32 %v3033, 0.0
  %v3066 = vmax.f32 %v3034, 0.0
  %v3067 = vmax.f32 %v3035, 0.0
  %v3068 = vmax.f32 %v3036, 0.0
  %v3069 = vmax.f32 %v3037, 0.0
  %v3070 = vmax.f32 %v3038, 0.0
  %v3071 = vmax.f32 %v3039, 0.0
  %v3072 = vmax.f32 %v3040, 0.0
  %v3073 = vmax.f32 %v3041, 0.0
  %v3074 = vmax.f32 %v3042, 0.0
  %v3075 = vmax.f32 %v3043, 0.0
  %v3076 = vmax.f32 %v3044, 0.0
  %v3077 = vmax.f32 %v3045, 0.0
  %v3078 = vmax.f32 %v3046, 0.0
  %v3079 = vmax.f32 %v3047, 0.0
  %v3080 = vmax.f32 %v3048, 0.0
  %v3081 = vmax.f32 %v3049, 0.0
  %v3082 = vmax.f32 %v3050, 0.0
  %v3083 = vmax.f32 %v3051, 0.0
  %v3084 = vmax.f32 %v3052, 0.0
  %v3085 = vmax.f32 %v3053, 0.0
  %v3086 = vmax.f32 %v3054, 0.0
  %v3087 = vmax.f32 %v3055, 0.0
  %v3088 = vmax.f32 %v3056, 0.0
  %v3089 = vmax.f32 %v3057, 0.0
  %v3090 = vmax.f32 %v3058, 0.0
  %v3091 = vmax.f32 %v3059, 0.0
  %v3092 = vmax.f32 %v3060, 0.0
  %v3093 = vpack.c.bf16 %v3062, %v3061
  %v3094 = vpack.c.bf16 %v3064, %v3063
  %v3095 = vpack.c.bf16 %v3066, %v3065
  %v3096 = vpack.c.bf16 %v3068, %v3067
  %v3097 = vpack.c.bf16 %v3070, %v3069
  %v3098 = vpack.c.bf16 %v3072, %v3071
  %v3099 = vpack.c.bf16 %v3074, %v3073
  %v3100 = vpack.c.bf16 %v3076, %v3075
  %v3101 = vpack.c.bf16 %v3078, %v3077
  %v3102 = vpack.c.bf16 %v3080, %v3079
  %v3103 = vpack.c.bf16 %v3082, %v3081
  %v3104 = vpack.c.bf16 %v3084, %v3083
  %v3105 = vpack.c.bf16 %v3086, %v3085
  %v3106 = vpack.c.bf16 %v3088, %v3087
  %v3107 = vpack.c.bf16 %v3090, %v3089
  %v3108 = vpack.c.bf16 %v3092, %v3091
  %v3109 = vld [vmem:[%s9] sm:$0xf]
  %v3110 = vld [vmem:[%s9 + $0x4] sm:$0xf]
  %v3111 = vld [vmem:[%s9 + $0x8] sm:$0xf]
  %v3112 = vld [vmem:[%s9 + $0xc] sm:$0xf]
  %v3113 = vld [vmem:[%s9 + $0x10] sm:$0xf]
  %v3114 = vld [vmem:[%s9 + $0x14] sm:$0xf]
  %v3115 = vld [vmem:[%s9 + $0x18] sm:$0xf]
  %v3116 = vld [vmem:[%s9 + $0x1c] sm:$0xf]
  %v3117 = vld [vmem:[%s10] sm:$0x1]
  %v3119 = vlaneseq
  %v3120 = vshrl.u32 %v3119, 7
  %v3121 = vsub.s32 0, %v3120
  %v3122 = vrot.slane %v3117, %v3121
  %v3132 = vunpack.c.l.b16 %v3109
  %v3133 = vunpack.c.l.b16 %v3110
  %v3134 = vunpack.c.l.b16 %v3111
  %v3135 = vunpack.c.l.b16 %v3112
  %v3136 = vunpack.c.l.b16 %v3113
  %v3137 = vunpack.c.l.b16 %v3114
  %v3138 = vunpack.c.l.b16 %v3115
  %v3139 = vunpack.c.l.b16 %v3116
  %v3140 = vpack.c.b16 %v3133, %v3132
  %v3141 = vpack.c.b16 %v3135, %v3134
  %v3142 = vpack.c.b16 %v3137, %v3136
  %v3143 = vpack.c.b16 %v3139, %v3138
  %vm3148 = vcmask 523264
  %v3150 = vsel %vm3148, %v3093, 0
  %v3153 = vsel %vm3148, %v3094, 0
  %v3156 = vsel %vm3148, %v3095, 0
  %v3159 = vsel %vm3148, %v3096, 0
  %v3162 = vsel %vm3148, %v3097, 0
  %v3165 = vsel %vm3148, %v3098, 0
  %v3168 = vsel %vm3148, %v3099, 0
  %v3171 = vsel %vm3148, %v3100, 0
  %v3174 = vsel %vm3148, %v3101, 0
  %v3177 = vsel %vm3148, %v3102, 0
  %v3180 = vsel %vm3148, %v3103, 0
  %v3183 = vsel %vm3148, %v3104, 0
  %v3186 = vsel %vm3148, %v3105, 0
  %v3189 = vsel %vm3148, %v3106, 0
  %v3192 = vsel %vm3148, %v3107, 0
  %v3195 = vsel %vm3148, %v3108, 0
  %3197 = vmatprep.subr.bf16.mxu0 0
  %3198 = vmatpush1.bf16.msra.mxu0 %v3140
  %3199 = vmatprep.subr.bf16.mxu0 0
  %3200 = vmatpush1.bf16.msra.mxu0 %v3141
  %3201 = vmatprep.subr.bf16.mxu0 0
  %3202 = vmatpush1.bf16.msra.mxu0 %v3142
  %3203 = vmatprep.subr.bf16.mxu0 0
  %3204 = vmatpush1.bf16.msra.mxu0 %v3143
  %3205 = vmatprep.subr.bf16.mxu0 0
  %3206 = vmatpush1.bf16.msra.mxu0 0
  %3207 = vmatprep.subr.bf16.mxu0 0
  %3208 = vmatpush1.bf16.msra.mxu0 0
  %3209 = vmatprep.subr.bf16.mxu0 0
  %3210 = vmatpush1.bf16.msra.mxu0 0
  %3211 = vmatprep.subr.bf16.mxu0 0
  %3212 = vmatpush1.bf16.msra.mxu0 0
  %3213 = vmatprep.subr.bf16.mxu0 0
  %3214 = vmatpush1.bf16.msra.mxu0 0
  %3215 = vmatprep.subr.bf16.mxu0 0
  %3216 = vmatpush1.bf16.msra.mxu0 0
  %3217 = vmatprep.subr.bf16.mxu0 0
  %3218 = vmatpush1.bf16.msra.mxu0 0
  %3219 = vmatprep.subr.bf16.mxu0 0
  %3220 = vmatpush1.bf16.msra.mxu0 0
  %3221 = vmatprep.subr.bf16.mxu0 0
  %3222 = vmatpush1.bf16.msra.mxu0 0
  %3223 = vmatprep.subr.bf16.mxu0 0
  %3224 = vmatpush1.bf16.msra.mxu0 0
  %3225 = vmatprep.subr.bf16.mxu0 0
  %3226 = vmatpush1.bf16.msra.mxu0 0
  %3227 = vmatprep.subr.bf16.mxu0 0
  %3228 = vmatpush1.bf16.msra.mxu0 0
  %3229 = vmatprep.mubr.bf16.mxu0 0
  %3230 = vmatmul.mubr.bf16.gmra.mrb[0].mxu0 %v3150
  %v3231 = vpop.f32.mrb[0].mxu0
  %v3232 = vadd.f32 %v3122, %v3231
  %v3233 = vpop.f32.mrb[0].mxu0
  %v3234 = vpop.f32.mrb[0].mxu0
  %v3235 = vadd.f32 %v3122, %v3234
  %v3236 = vpop.f32.mrb[0].mxu0
  %3237 = vmatprep.mubr.bf16.mxu0 0
  %3238 = vmatmul.mubr.bf16.gmra.mrb[0].mxu0 %v3153
  %v3239 = vpop.f32.mrb[0].mxu0
  %v3240 = vadd.f32 %v3122, %v3239
  %v3241 = vpop.f32.mrb[0].mxu0
  %v3242 = vpop.f32.mrb[0].mxu0
  %v3243 = vadd.f32 %v3122, %v3242
  %v3244 = vpop.f32.mrb[0].mxu0
  %3245 = vmatprep.mubr.bf16.mxu0 0
  %3246 = vmatmul.mubr.bf16.gmra.mrb[0].mxu0 %v3156
  %v3247 = vpop.f32.mrb[0].mxu0
  %v3248 = vadd.f32 %v3122, %v3247
  %v3249 = vpop.f32.mrb[0].mxu0
  %v3250 = vpop.f32.mrb[0].mxu0
  %v3251 = vadd.f32 %v3122, %v3250
  %v3252 = vpop.f32.mrb[0].mxu0
  %3253 = vmatprep.mubr.bf16.mxu0 0
  %3254 = vmatmul.mubr.bf16.gmra.mrb[0].mxu0 %v3159
  %v3255 = vpop.f32.mrb[0].mxu0
  %v3256 = vadd.f32 %v3122, %v3255
  %v3257 = vpop.f32.mrb[0].mxu0
  %v3258 = vpop.f32.mrb[0].mxu0
  %v3259 = vadd.f32 %v3122, %v3258
  %v3260 = vpop.f32.mrb[0].mxu0
  %3261 = vmatprep.mubr.bf16.mxu0 0
  %3262 = vmatmul.mubr.bf16.gmra.mrb[0].mxu0 %v3162
  %v3263 = vpop.f32.mrb[0].mxu0
  %v3264 = vadd.f32 %v3122, %v3263
  %v3265 = vpop.f32.mrb[0].mxu0
  %v3266 = vpop.f32.mrb[0].mxu0
  %v3267 = vadd.f32 %v3122, %v3266
  %v3268 = vpop.f32.mrb[0].mxu0
  %3269 = vmatprep.mubr.bf16.mxu0 0
  %3270 = vmatmul.mubr.bf16.gmra.mrb[0].mxu0 %v3165
  %v3271 = vpop.f32.mrb[0].mxu0
  %v3272 = vadd.f32 %v3122, %v3271
  %v3273 = vpop.f32.mrb[0].mxu0
  %v3274 = vpop.f32.mrb[0].mxu0
  %v3275 = vadd.f32 %v3122, %v3274
  %v3276 = vpop.f32.mrb[0].mxu0
  %3277 = vmatprep.mubr.bf16.mxu0 0
  %3278 = vmatmul.mubr.bf16.gmra.mrb[0].mxu0 %v3168
  %v3279 = vpop.f32.mrb[0].mxu0
  %v3280 = vadd.f32 %v3122, %v3279
  %v3281 = vpop.f32.mrb[0].mxu0
  %v3282 = vpop.f32.mrb[0].mxu0
  %v3283 = vadd.f32 %v3122, %v3282
  %v3284 = vpop.f32.mrb[0].mxu0
  %3285 = vmatprep.mubr.bf16.mxu0 0
  %3286 = vmatmul.mubr.bf16.gmra.mrb[0].mxu0 %v3171
  %v3287 = vpop.f32.mrb[0].mxu0
  %v3288 = vadd.f32 %v3122, %v3287
  %v3289 = vpop.f32.mrb[0].mxu0
  %v3290 = vpop.f32.mrb[0].mxu0
  %v3291 = vadd.f32 %v3122, %v3290
  %v3292 = vpop.f32.mrb[0].mxu0
  %3293 = vmatprep.mubr.bf16.mxu0 0
  %3294 = vmatmul.mubr.bf16.gmra.mrb[0].mxu0 %v3174
  %v3295 = vpop.f32.mrb[0].mxu0
  %v3296 = vadd.f32 %v3122, %v3295
  %v3297 = vpop.f32.mrb[0].mxu0
  %v3298 = vpop.f32.mrb[0].mxu0
  %v3299 = vadd.f32 %v3122, %v3298
  %v3300 = vpop.f32.mrb[0].mxu0
  %3301 = vmatprep.mubr.bf16.mxu0 0
  %3302 = vmatmul.mubr.bf16.gmra.mrb[0].mxu0 %v3177
  %v3303 = vpop.f32.mrb[0].mxu0
  %v3304 = vadd.f32 %v3122, %v3303
  %v3305 = vpop.f32.mrb[0].mxu0
  %v3306 = vpop.f32.mrb[0].mxu0
  %v3307 = vadd.f32 %v3122, %v3306
  %v3308 = vpop.f32.mrb[0].mxu0
  %3309 = vmatprep.mubr.bf16.mxu0 0
  %3310 = vmatmul.mubr.bf16.gmra.mrb[0].mxu0 %v3180
  %v3311 = vpop.f32.mrb[0].mxu0
  %v3312 = vadd.f32 %v3122, %v3311
  %v3313 = vpop.f32.mrb[0].mxu0
  %v3314 = vpop.f32.mrb[0].mxu0
  %v3315 = vadd.f32 %v3122, %v3314
  %v3316 = vpop.f32.mrb[0].mxu0
  %3317 = vmatprep.mubr.bf16.mxu0 0
  %3318 = vmatmul.mubr.bf16.gmra.mrb[0].mxu0 %v3183
  %v3319 = vpop.f32.mrb[0].mxu0
  %v3320 = vadd.f32 %v3122, %v3319
  %v3321 = vpop.f32.mrb[0].mxu0
  %v3322 = vpop.f32.mrb[0].mxu0
  %v3323 = vadd.f32 %v3122, %v3322
  %v3324 = vpop.f32.mrb[0].mxu0
  %3325 = vmatprep.mubr.bf16.mxu0 0
  %3326 = vmatmul.mubr.bf16.gmra.mrb[0].mxu0 %v3186
  %v3327 = vpop.f32.mrb[0].mxu0
  %v3328 = vadd.f32 %v3122, %v3327
  %v3329 = vpop.f32.mrb[0].mxu0
  %v3330 = vpop.f32.mrb[0].mxu0
  %v3331 = vadd.f32 %v3122, %v3330
  %v3332 = vpop.f32.mrb[0].mxu0
  %3333 = vmatprep.mubr.bf16.mxu0 0
  %3334 = vmatmul.mubr.bf16.gmra.mrb[0].mxu0 %v3189
  %v3335 = vpop.f32.mrb[0].mxu0
  %v3336 = vadd.f32 %v3122, %v3335
  %v3337 = vpop.f32.mrb[0].mxu0
  %v3338 = vpop.f32.mrb[0].mxu0
  %v3339 = vadd.f32 %v3122, %v3338
  %v3340 = vpop.f32.mrb[0].mxu0
  %3341 = vmatprep.mubr.bf16.mxu0 0
  %3342 = vmatmul.mubr.bf16.gmra.mrb[0].mxu0 %v3192
  %v3343 = vpop.f32.mrb[0].mxu0
  %v3344 = vadd.f32 %v3122, %v3343
  %v3345 = vpop.f32.mrb[0].mxu0
  %v3346 = vpop.f32.mrb[0].mxu0
  %v3347 = vadd.f32 %v3122, %v3346
  %v3348 = vpop.f32.mrb[0].mxu0
  %3349 = vmatprep.mubr.bf16.mxu0 0
  %3350 = vmatmul.mubr.bf16.gmra.mrb[0].mxu0 %v3195
  %v3351 = vpop.f32.mrb[0].mxu0
  %v3352 = vadd.f32 %v3122, %v3351
  %v3353 = vpop.f32.mrb[0].mxu0
  %v3354 = vpop.f32.mrb[0].mxu0
  %v3355 = vadd.f32 %v3122, %v3354
  %v3356 = vpop.f32.mrb[0].mxu0
  %3357 = vdwg.mxu0
  %v3358 = vpack.c.bf16 %v3235, %v3232
  %v3359 = vpack.c.bf16 %v3243, %v3240
  %v3360 = vpack.c.bf16 %v3251, %v3248
  %v3361 = vpack.c.bf16 %v3259, %v3256
  %v3362 = vpack.c.bf16 %v3267, %v3264
  %v3363 = vpack.c.bf16 %v3275, %v3272
  %v3364 = vpack.c.bf16 %v3283, %v3280
  %v3365 = vpack.c.bf16 %v3291, %v3288
  %v3366 = vpack.c.bf16 %v3299, %v3296
  %v3367 = vpack.c.bf16 %v3307, %v3304
  %v3368 = vpack.c.bf16 %v3315, %v3312
  %v3369 = vpack.c.bf16 %v3323, %v3320
  %v3370 = vpack.c.bf16 %v3331, %v3328
  %v3371 = vpack.c.bf16 %v3339, %v3336
  %v3372 = vpack.c.bf16 %v3347, %v3344
  %v3373 = vpack.c.bf16 %v3355, %v3352
  %v3390 = vunpack.c.l.b16 %v3358
  %v3391 = vunpack.c.h.b16 %v3358
  %v3392 = vunpack.c.l.b16 %v3359
  %v3393 = vunpack.c.h.b16 %v3359
  %v3394 = vunpack.c.l.b16 %v3360
  %v3395 = vunpack.c.h.b16 %v3360
  %v3396 = vunpack.c.l.b16 %v3361
  %v3397 = vunpack.c.h.b16 %v3361
  %v3398 = vunpack.c.l.b16 %v3362
  %v3399 = vunpack.c.h.b16 %v3362
  %v3400 = vunpack.c.l.b16 %v3363
  %v3401 = vunpack.c.h.b16 %v3363
  %v3402 = vunpack.c.l.b16 %v3364
  %v3403 = vunpack.c.h.b16 %v3364
  %v3404 = vunpack.c.l.b16 %v3365
  %v3405 = vunpack.c.h.b16 %v3365
  %v3406 = vunpack.c.l.b16 %v3366
  %v3407 = vunpack.c.h.b16 %v3366
  %v3408 = vunpack.c.l.b16 %v3367
  %v3409 = vunpack.c.h.b16 %v3367
  %v3410 = vunpack.c.l.b16 %v3368
  %v3411 = vunpack.c.h.b16 %v3368
  %v3412 = vunpack.c.l.b16 %v3369
  %v3413 = vunpack.c.h.b16 %v3369
  %v3414 = vunpack.c.l.b16 %v3370
  %v3415 = vunpack.c.h.b16 %v3370
  %v3416 = vunpack.c.l.b16 %v3371
  %v3417 = vunpack.c.h.b16 %v3371
  %v3418 = vunpack.c.l.b16 %v3372
  %v3419 = vunpack.c.h.b16 %v3372
  %v3420 = vunpack.c.l.b16 %v3373
  %v3421 = vunpack.c.h.b16 %v3373
  %v3422 = vpack.c.b16 %v3390, %v3390
  %v3423 = vpack.c.b16 %v3391, %v3391
  %v3424 = vpack.c.b16 %v3392, %v3392
  %v3425 = vpack.c.b16 %v3393, %v3393
  %v3426 = vpack.c.b16 %v3394, %v3394
  %v3427 = vpack.c.b16 %v3395, %v3395
  %v3428 = vpack.c.b16 %v3396, %v3396
  %v3429 = vpack.c.b16 %v3397, %v3397
  %v3430 = vpack.c.b16 %v3398, %v3398
  %v3431 = vpack.c.b16 %v3399, %v3399
  %v3432 = vpack.c.b16 %v3400, %v3400
  %v3433 = vpack.c.b16 %v3401, %v3401
  %v3434 = vpack.c.b16 %v3402, %v3402
  %v3435 = vpack.c.b16 %v3403, %v3403
  %v3436 = vpack.c.b16 %v3404, %v3404
  %v3437 = vpack.c.b16 %v3405, %v3405
  %v3438 = vpack.c.b16 %v3406, %v3406
  %v3439 = vpack.c.b16 %v3407, %v3407
  %v3440 = vpack.c.b16 %v3408, %v3408
  %v3441 = vpack.c.b16 %v3409, %v3409
  %v3442 = vpack.c.b16 %v3410, %v3410
  %v3443 = vpack.c.b16 %v3411, %v3411
  %v3444 = vpack.c.b16 %v3412, %v3412
  %v3445 = vpack.c.b16 %v3413, %v3413
  %v3446 = vpack.c.b16 %v3414, %v3414
  %v3447 = vpack.c.b16 %v3415, %v3415
  %v3448 = vpack.c.b16 %v3416, %v3416
  %v3449 = vpack.c.b16 %v3417, %v3417
  %v3450 = vpack.c.b16 %v3418, %v3418
  %v3451 = vpack.c.b16 %v3419, %v3419
  %v3452 = vpack.c.b16 %v3420, %v3420
  %v3453 = vpack.c.b16 %v3421, %v3421
  %3486 = vst [vmem:[%s11] sm:$0xf] %v3422
  %3487 = vst [vmem:[%s11 + $0x4] sm:$0xf] %v3423
  %3488 = vst [vmem:[%s11 + $0x8] sm:$0xf] %v3424
  %3489 = vst [vmem:[%s11 + $0xc] sm:$0xf] %v3425
  %3490 = vst [vmem:[%s11 + $0x10] sm:$0xf] %v3426
  %3491 = vst [vmem:[%s11 + $0x14] sm:$0xf] %v3427
  %3492 = vst [vmem:[%s11 + $0x18] sm:$0xf] %v3428
  %3493 = vst [vmem:[%s11 + $0x1c] sm:$0xf] %v3429
  %3494 = vst [vmem:[%s11 + $0x20] sm:$0xf] %v3430
  %3495 = vst [vmem:[%s11 + $0x24] sm:$0xf] %v3431
  %3496 = vst [vmem:[%s11 + $0x28] sm:$0xf] %v3432
  %3497 = vst [vmem:[%s11 + $0x2c] sm:$0xf] %v3433
  %3498 = vst [vmem:[%s11 + $0x30] sm:$0xf] %v3434
  %3499 = vst [vmem:[%s11 + $0x34] sm:$0xf] %v3435
  %3500 = vst [vmem:[%s11 + $0x38] sm:$0xf] %v3436
  %3501 = vst [vmem:[%s11 + $0x3c] sm:$0xf] %v3437
  %3502 = vst [vmem:[%s11 + $0x40] sm:$0xf] %v3438
  %3503 = vst [vmem:[%s11 + $0x44] sm:$0xf] %v3439
  %3504 = vst [vmem:[%s11 + $0x48] sm:$0xf] %v3440
  %3505 = vst [vmem:[%s11 + $0x4c] sm:$0xf] %v3441
  %3506 = vst [vmem:[%s11 + $0x50] sm:$0xf] %v3442
  %3507 = vst [vmem:[%s11 + $0x54] sm:$0xf] %v3443
  %3508 = vst [vmem:[%s11 + $0x58] sm:$0xf] %v3444
  %3509 = vst [vmem:[%s11 + $0x5c] sm:$0xf] %v3445
  %3510 = vst [vmem:[%s11 + $0x60] sm:$0xf] %v3446
  %3511 = vst [vmem:[%s11 + $0x64] sm:$0xf] %v3447
  %3512 = vst [vmem:[%s11 + $0x68] sm:$0xf] %v3448
  %3513 = vst [vmem:[%s11 + $0x6c] sm:$0xf] %v3449
  %3514 = vst [vmem:[%s11 + $0x70] sm:$0xf] %v3450
  %3515 = vst [vmem:[%s11 + $0x74] sm:$0xf] %v3451
  %3516 = vst [vmem:[%s11 + $0x78] sm:$0xf] %v3452
  %3517 = vst [vmem:[%s11 + $0x7c] sm:$0xf] %v3453
  // Predicated region
  $region46: #{bevfusion_forward.1} parent=0 // pred_check
    _
  $region47: #{bevfusion_forward.1} parent=0 // pred_check_branch
    %3519 = sbr.rel (0) target = $region49
  $region48: #{bevfusion_forward.1} parent=0 // pred_region
    _
  $region49: #{bevfusion_forward.1} parent=0 // pred_fallthru
    _
  // Predicated region
  $region50: #{bevfusion_forward.1} parent=0 // pred_check
    _
  $region51: #{bevfusion_forward.1} parent=0 // pred_check_branch
    %3521 = sbr.rel (0) target = $region53
  $region52: #{bevfusion_forward.1} parent=0 // pred_region
    _
  $region53: #{bevfusion_forward.1} parent=0 // pred_fallthru
    _

</llo_original>
